<compile_context>
chip_gen: v6e
topology: v6e:2x2x1
jax: 0.10.0
libtpu: 0.0.40
codegen_flags: <defaults>
</compile_context>

<pallas_src>
import functools
import math

import jax
import jax.numpy as jnp
from jax import lax
from jax.experimental import pallas as pl
from jax.experimental.pallas import tpu as pltpu


# --------------------------------------------------------------------------- #
# Kernel A: positional fourier basis  f = cos(8*pi*(coords @ W^T + b))
# --------------------------------------------------------------------------- #
def _pos_enc_kernel(coords_ref, w_ref, b_ref, f_ref):
    # coords_ref: (hw, 2)  channel 0 = x, channel 1 = y  (matches torch ordering)
    # w_ref:      (2, D)   1x1-conv weight, transposed
    # b_ref:      (1, D)   1x1-conv bias
    # f_ref:      (hw, D)  output basis features (lane axis = D)
    c = coords_ref[...]
    w = w_ref[...]
    # K = 2 contraction done with VPU broadcasts instead of a tiny MXU matmul.
    proj = c[:, 0:1] * w[0:1, :] + c[:, 1:2] * w[1:2, :] + b_ref[...]
    f_ref[...] = jnp.cos((8.0 * math.pi) * proj)


# --------------------------------------------------------------------------- #
# Kernel B: gp_feats row-block = softmax(sim row-block) @ f
# --------------------------------------------------------------------------- #
def _gp_kernel(sim_ref, f_ref, out_ref):
    # sim_ref: (tq, hw)  one query-row block of the batch-flattened sim matrix
    # f_ref:   (hw, D)   positional basis (resident across the whole grid)
    # out_ref: (tq, D)
    s = sim_ref[...].astype(jnp.float32)               # no-op cast if already f32
    m = jnp.max(s, axis=-1, keepdims=True)             # (tq, 1)   row max
    p = jnp.exp(s - m)                                  # (tq, hw)  unnormalized probs
    l = jnp.sum(p, axis=-1, keepdims=True)              # (tq, 1)   exact f32 row sum
    # MXU matmul with K = hw (good systolic fill); normalize the small result.
    gp = jnp.dot(p, f_ref[...], preferred_element_type=jnp.float32)   # (tq, D)
    out_ref[...] = (gp * pl.reciprocal(l, approx=False)).astype(out_ref.dtype)


# --------------------------------------------------------------------------- #
# Tiling policy helpers
# --------------------------------------------------------------------------- #
def _round_up(x, m):
    return ((x + m - 1) // m) * m


def _vmem_budget_bytes():
    """Generation-aware VMEM budget for Kernel B (capacity minus headroom)."""
    cap = 64 * 1024 * 1024  # conservative default (v7x has the smallest VMEM)
    try:
        info = pltpu.get_tpu_info()
        c = getattr(info, "vmem_capacity_bytes", None)
        if c:
            cap = int(c)
    except Exception:
        pass
    # v5e/v6e (128 MiB) -> ~100 MiB budget; v7x (64 MiB) -> ~52 MiB budget.
    return int(min(cap - (12 << 20), 100 << 20))


def _pick_q_tile(rows, hw, d, sim_bytes, vmem_budget):
    """Largest query tile whose double-buffered footprint fits the VMEM budget."""
    rows_cap = max(8, _round_up(rows, 8))
    last = None
    for tq in (1024, 512, 256, 128, 64, 32, 16, 8):
        if tq > rows_cap:
            continue
        temp = tq * hw * 4                       # exp(s - m) temporary (f32)
        if sim_bytes < 4:
            temp += tq * hw * 4                  # f32 upcast copy of the sim block
        footprint = (
            2 * tq * hw * sim_bytes              # double-buffered sim input blocks
            + temp
            + 2 * hw * d * 4                     # f (constant, still double-buffered)
            + 2 * tq * d * 4                     # double-buffered output blocks
            + (2 << 20)                          # Mosaic internal scratch slack
        )
        if footprint <= vmem_budget:
            return tq, footprint
        last = (tq, footprint)
    return last if last is not None else (8, vmem_budget)


# --------------------------------------------------------------------------- #
# Wrapper
# --------------------------------------------------------------------------- #
@functools.partial(jax.jit, static_argnames=("h", "w"))
def gp_forward(sim_matrix, pos_w, pos_b, *, h, w):
    """GP.forward (fourier basis).

    sim_matrix: (b, h*w, h*w) float32 (bf16 also accepted)
    pos_w:      (gp_dim, 2)   Conv2d(2, gp_dim, 1) weight (kernel dims squeezed)
    pos_b:      (gp_dim,)     Conv2d bias
    returns:    (b, gp_dim, h, w)
    """
    b, hw, hw2 = sim_matrix.shape
    assert hw == h * w and hw2 == hw, "sim_matrix must be (b, h*w, h*w)"
    d = pos_w.shape[0]

    # Coarse coordinate grid (matches torch.linspace + meshgrid('ij') + (x, y) stack).
    ys = jnp.linspace(-1.0 + 1.0 / h, 1.0 - 1.0 / h, h, dtype=jnp.float32)
    xs = jnp.linspace(-1.0 + 1.0 / w, 1.0 - 1.0 / w, w, dtype=jnp.float32)
    yy, xx = jnp.meshgrid(ys, xs, indexing="ij")                       # (h, w)
    coords = jnp.stack([xx.reshape(-1), yy.reshape(-1)], axis=-1)      # (hw, 2)

    # ---- Kernel A: positional basis (tiny, single invocation) ----
    f = pl.pallas_call(
        _pos_enc_kernel,
        out_shape=jax.ShapeDtypeStruct((hw, d), jnp.float32),
        in_specs=[pl.BlockSpec(memory_space=pltpu.MemorySpace.VMEM)] * 3,
        out_specs=pl.BlockSpec(memory_space=pltpu.MemorySpace.VMEM),
    )(
        coords,
        pos_w.T.astype(jnp.float32).reshape(2, d),
        pos_b.astype(jnp.float32).reshape(1, d),
    )

    # ---- Kernel B: gridded softmax(sim) @ f over the batch-flattened query axis ----
    rows = b * hw
    sim_flat = sim_matrix.reshape(rows, hw)          # free: collapses leading dims
    sim_bytes = jnp.dtype(sim_matrix.dtype).itemsize

    vmem_budget = _vmem_budget_bytes()
    tq, footprint = _pick_q_tile(rows, hw, d, sim_bytes, vmem_budget)
    n_q = pl.cdiv(rows, tq)
    vmem_limit = int(min(vmem_budget, max(footprint + (4 << 20), 32 << 20)))

    gp_flat = pl.pallas_call(
        _gp_kernel,
        out_shape=jax.ShapeDtypeStruct((rows, d), jnp.float32),
        grid_spec=pltpu.PrefetchScalarGridSpec(
            num_scalar_prefetch=0,
            grid=(n_q,),
            in_specs=[
                pl.BlockSpec((tq, hw), lambda qi: (qi, 0)),
                pl.BlockSpec((hw, d), lambda qi: (0, 0)),   # resident, fetched once
            ],
            out_specs=pl.BlockSpec((tq, d), lambda qi: (qi, 0)),
        ),
        compiler_params=pltpu.CompilerParams(
            dimension_semantics=("parallel",),
            vmem_limit_bytes=vmem_limit,
        ),
    )(sim_flat, f)

    # (b*hw, D) -> (b, D, h, w).  Output is ~hw/D times smaller than sim_matrix,
    # so this extra pass is negligible next to streaming sim_matrix.
    gp = gp_flat.reshape(b, hw, d)
    return jnp.transpose(gp, (0, 2, 1)).reshape(b, d, h, w)


# --------------------------------------------------------------------------- #
# Pure-JAX (XLA) reference of the PyTorch forward, for validation
# --------------------------------------------------------------------------- #
def gp_reference(sim_matrix, pos_w, pos_b, h, w):
    b, hw, _ = sim_matrix.shape
    d = pos_w.shape[0]
    ys = jnp.linspace(-1.0 + 1.0 / h, 1.0 - 1.0 / h, h, dtype=jnp.float32)
    xs = jnp.linspace(-1.0 + 1.0 / w, 1.0 - 1.0 / w, w, dtype=jnp.float32)
    yy, xx = jnp.meshgrid(ys, xs, indexing="ij")
    coords = jnp.stack([xx.reshape(-1), yy.reshape(-1)], axis=0)        # (2, hw)
    proj = (pos_w[:, 0:1] * coords[0:1, :]
            + pos_w[:, 1:2] * coords[1:2, :]
            + pos_b[:, None])                                           # (d, hw)
    f = jnp.cos(8.0 * math.pi * proj).T                                 # (hw, d)
    conf = jax.nn.softmax(sim_matrix.astype(jnp.float32), axis=2)
    gp = jnp.einsum("bqk,kd->bqd", conf, f, precision=lax.Precision.HIGHEST)
    return jnp.transpose(gp, (0, 2, 1)).reshape(b, d, h, w)


if __name__ == "__main__":
    key = jax.random.PRNGKey(0)
    k_sim, k_w, k_b = jax.random.split(key, 3)

    B, H, W, GP_DIM = 2, 16, 16, 64
    HW = H * W

    sim = jax.random.normal(k_sim, (B, HW, HW), jnp.float32)
    pos_w = 0.5 * jax.random.normal(k_w, (GP_DIM, 2), jnp.float32)
    pos_b = 0.5 * jax.random.normal(k_b, (GP_DIM,), jnp.float32)

    out = gp_forward(sim, pos_w, pos_b, h=H, w=W)
    out = jax.block_until_ready(out)

    ref = gp_reference(sim, pos_w, pos_b, H, W)
    assert out.shape == (B, GP_DIM, H, W)
    max_diff = float(jnp.max(jnp.abs(out - ref)))
    assert jnp.allclose(out, ref, atol=2e-4, rtol=2e-4), f"max abs diff = {max_diff}"

    print("KERNEL_OK")
</pallas_src>

<mosaic_0001>
module attributes {stable_mosaic.version = 11 : i64} {
  func.func @_gp_kernel(%arg0: i32, %arg1: memref<512x256xf32, #tpu.memory_space<vmem>>, %arg2: memref<256x64xf32, #tpu.memory_space<vmem>>, %arg3: memref<512x64xf32, #tpu.memory_space<vmem>>) attributes {dimension_semantics = [#tpu.dimension_semantics<parallel>], iteration_bounds = array<i64: 1>, scalar_prefetch = 0 : i64, scratch_operands = 0 : i64, tpu.core_type = #tpu.core_type<tc>, window_params = [{transform_indices = @transform_0, window_bounds = array<i64: 512, 256>}, {pipeline_mode = #tpu.pipeline_mode<synchronous>, transform_indices = @transform_1, window_bounds = array<i64: 256, 64>}, {transform_indices = @transform_2, window_bounds = array<i64: 512, 64>}]} {
    %c0 = arith.constant 0 : index
    %c0_0 = arith.constant 0 : index
    %0 = vector.load %arg1[%c0, %c0_0] : memref<512x256xf32, #tpu.memory_space<vmem>>, vector<512x256xf32>
    %cst = arith.constant dense<0xFF800000> : vector<512xf32>
    %1 = vector.multi_reduction <maximumf>, %0, %cst [1] : vector<512x256xf32> to vector<512xf32>
    %2 = vector.shape_cast %1 : vector<512xf32> to vector<512x1xf32>
    %3 = vector.broadcast %2 : vector<512x1xf32> to vector<512x256xf32>
    %4 = arith.subf %0, %3 : vector<512x256xf32>
    %5 = math.exp %4 : vector<512x256xf32>
    %cst_1 = arith.constant dense<0.000000e+00> : vector<512xf32>
    %6 = vector.multi_reduction <add>, %5, %cst_1 [1] : vector<512x256xf32> to vector<512xf32>
    %7 = vector.shape_cast %6 : vector<512xf32> to vector<512x1xf32>
    %c0_2 = arith.constant 0 : index
    %c0_3 = arith.constant 0 : index
    %8 = vector.load %arg2[%c0_2, %c0_3] : memref<256x64xf32, #tpu.memory_space<vmem>>, vector<256x64xf32>
    %cst_4 = arith.constant dense<0.000000e+00> : vector<512x64xf32>
    %9 = tpu.matmul %5, %8, %cst_4 {dimension_numbers = #tpu.dot_dimension_numbers<[1], [0], [0], [1], [0, 0, 1, 1], [], []>} : vector<512x256xf32>, vector<256x64xf32>, vector<512x64xf32> -> vector<512x64xf32>
    %10 = tpu.reciprocal %7 : vector<512x1xf32> -> vector<512x1xf32>
    %11 = vector.broadcast %10 : vector<512x1xf32> to vector<512x64xf32>
    %12 = arith.mulf %9, %11 : vector<512x64xf32>
    %c0_5 = arith.constant 0 : index
    %c0_6 = arith.constant 0 : index
    %13 = vector.load %arg3[%c0_5, %c0_6] : memref<512x64xf32, #tpu.memory_space<vmem>>, vector<512x64xf32>
    tpu.vector_store %arg3[%c0_5, %c0_6], %12 {strides = array<i32>} : memref<512x64xf32, #tpu.memory_space<vmem>>, vector<512x64xf32>,
    return
  }
  func.func @transform_0(%arg0: i32) -> (i32, i32) {
    %c0_i32 = arith.constant 0 : i32
    %c0_i32_0 = arith.constant 0 : i32
    return %arg0, %c0_i32 : i32, i32
  }
  func.func @transform_1(%arg0: i32) -> (i32, i32) {
    %c0_i32 = arith.constant 0 : i32
    %c0_i32_0 = arith.constant 0 : i32
    %c0_i32_1 = arith.constant 0 : i32
    return %c0_i32, %c0_i32_0 : i32, i32
  }
  func.func @transform_2(%arg0: i32) -> (i32, i32) {
    %c0_i32 = arith.constant 0 : i32
    %c0_i32_0 = arith.constant 0 : i32
    return %arg0, %c0_i32 : i32, i32
  }
}

module attributes {stable_mosaic.version = 11 : i64} {
  func.func @_pos_enc_kernel(%arg0: memref<256x2xf32, #tpu.memory_space<vmem>>, %arg1: memref<2x64xf32, #tpu.memory_space<vmem>>, %arg2: memref<1x64xf32, #tpu.memory_space<vmem>>, %arg3: memref<256x64xf32, #tpu.memory_space<vmem>>) attributes {dimension_semantics = [], scalar_prefetch = 0 : i64, scratch_operands = 0 : i64, tpu.core_type = #tpu.core_type<tc>} {
    %c0 = arith.constant 0 : index
    %c0_0 = arith.constant 0 : index
    %0 = vector.load %arg0[%c0, %c0_0] : memref<256x2xf32, #tpu.memory_space<vmem>>, vector<256x2xf32>
    %c0_1 = arith.constant 0 : index
    %c0_2 = arith.constant 0 : index
    %1 = vector.load %arg1[%c0_1, %c0_2] : memref<2x64xf32, #tpu.memory_space<vmem>>, vector<2x64xf32>
    %2 = vector.extract_strided_slice %0 {offsets = [0, 0], sizes = [256, 1], strides = [1, 1]} : vector<256x2xf32> to vector<256x1xf32>
    %3 = vector.extract_strided_slice %1 {offsets = [0, 0], sizes = [1, 64], strides = [1, 1]} : vector<2x64xf32> to vector<1x64xf32>
    %4 = vector.broadcast %2 : vector<256x1xf32> to vector<256x64xf32>
    %5 = vector.broadcast %3 : vector<1x64xf32> to vector<256x64xf32>
    %6 = arith.mulf %4, %5 : vector<256x64xf32>
    %7 = vector.extract_strided_slice %0 {offsets = [0, 1], sizes = [256, 1], strides = [1, 1]} : vector<256x2xf32> to vector<256x1xf32>
    %8 = vector.extract_strided_slice %1 {offsets = [1, 0], sizes = [1, 64], strides = [1, 1]} : vector<2x64xf32> to vector<1x64xf32>
    %9 = vector.broadcast %7 : vector<256x1xf32> to vector<256x64xf32>
    %10 = vector.broadcast %8 : vector<1x64xf32> to vector<256x64xf32>
    %11 = arith.mulf %9, %10 : vector<256x64xf32>
    %12 = arith.addf %6, %11 : vector<256x64xf32>
    %c0_3 = arith.constant 0 : index
    %c0_4 = arith.constant 0 : index
    %13 = vector.load %arg2[%c0_3, %c0_4] : memref<1x64xf32, #tpu.memory_space<vmem>>, vector<1x64xf32>
    %14 = vector.broadcast %13 : vector<1x64xf32> to vector<256x64xf32>
    %15 = arith.addf %12, %14 : vector<256x64xf32>
    %cst = arith.constant 25.1327419 : f32
    %16 = vector.broadcast %cst : f32 to vector<256x64xf32>
    %17 = arith.mulf %16, %15 : vector<256x64xf32>
    %18 = math.cos %17 : vector<256x64xf32>
    %c0_5 = arith.constant 0 : index
    %c0_6 = arith.constant 0 : index
    %19 = vector.load %arg3[%c0_5, %c0_6] : memref<256x64xf32, #tpu.memory_space<vmem>>, vector<256x64xf32>
    tpu.vector_store %arg3[%c0_5, %c0_6], %18 {strides = array<i32>} : memref<256x64xf32, #tpu.memory_space<vmem>>, vector<256x64xf32>,
    return
  }
}

</mosaic_0001>

<llo_original>
// kernel: gp_forward.2
$region0: #{gp_forward.2}
  #allocation0 [shape = 'u32[]', space=smem, size = 0x4, offset = 0x4, fixed_abs, tag = 'smem constant byte address 0x4 - core index']
  #allocation1 [shape = 'u32[144,128]{1,0:T(1,128)}', space=vmem, size = 0x12000, scoped, tag = 'internal scratch']
  %s0 = inlined_call_operand.vmem [shape: f32[256,2], index: 0, kind: input, shape index: {}]
  %s1 = inlined_call_operand.vmem [shape: f32[2,64], index: 1, kind: input, shape index: {}]
  %s2 = inlined_call_operand.vmem [shape: f32[1,64], index: 2, kind: input, shape index: {}]
  %s3 = inlined_call_operand.vmem [shape: f32[256,64], index: 3, kind: output, shape index: {}]
  %s4 = sld [smem:[#allocation0]]
  $region22: #{gp_forward.2} parent=0
    _
  %s6 = ssub.s32 1, %s4
  %s7 = scalar_select 0, %s6, %s4
  // Predicated region
  $region2: #{gp_forward.2} parent=0 // pred_check
    _
  $region3: #{gp_forward.2} parent=0 // pred_check_branch
    %9 = sbr.rel (0) target = $region5
  $region4: #{gp_forward.2} parent=0 // pred_region
    _
  $region5: #{gp_forward.2} parent=0 // pred_fallthru
    _
  // Predicated region
  $region6: #{gp_forward.2} parent=0 // pred_check
    _
  $region7: #{gp_forward.2} parent=0 // pred_check_branch
    %11 = sbr.rel (0) target = $region9
  $region8: #{gp_forward.2} parent=0 // pred_region
    _
  $region9: #{gp_forward.2} parent=0 // pred_fallthru
    _
  // Predicated region
  $region10: #{gp_forward.2} parent=0 // pred_check
    _
  $region11: #{gp_forward.2} parent=0 // pred_check_branch
    %13 = sbr.rel (0) target = $region13
  $region12: #{gp_forward.2} parent=0 // pred_region
    _
  $region13: #{gp_forward.2} parent=0 // pred_fallthru
    _
  %v14 = vld [vmem:[%s0] sm:$0xff]
  %v15 = vld [vmem:[%s0 + $0x8] sm:$0xff]
  %v16 = vld [vmem:[%s0 + $0x10] sm:$0xff]
  %v17 = vld [vmem:[%s0 + $0x18] sm:$0xff]
  %v18 = vld [vmem:[%s0 + $0x20] sm:$0xff]
  %v19 = vld [vmem:[%s0 + $0x28] sm:$0xff]
  %v20 = vld [vmem:[%s0 + $0x30] sm:$0xff]
  %v21 = vld [vmem:[%s0 + $0x38] sm:$0xff]
  %v22 = vld [vmem:[%s0 + $0x40] sm:$0xff]
  %v23 = vld [vmem:[%s0 + $0x48] sm:$0xff]
  %v24 = vld [vmem:[%s0 + $0x50] sm:$0xff]
  %v25 = vld [vmem:[%s0 + $0x58] sm:$0xff]
  %v26 = vld [vmem:[%s0 + $0x60] sm:$0xff]
  %v27 = vld [vmem:[%s0 + $0x68] sm:$0xff]
  %v28 = vld [vmem:[%s0 + $0x70] sm:$0xff]
  %v29 = vld [vmem:[%s0 + $0x78] sm:$0xff]
  %v30 = vld [vmem:[%s0 + $0x80] sm:$0xff]
  %v31 = vld [vmem:[%s0 + $0x88] sm:$0xff]
  %v32 = vld [vmem:[%s0 + $0x90] sm:$0xff]
  %v33 = vld [vmem:[%s0 + $0x98] sm:$0xff]
  %v34 = vld [vmem:[%s0 + $0xa0] sm:$0xff]
  %v35 = vld [vmem:[%s0 + $0xa8] sm:$0xff]
  %v36 = vld [vmem:[%s0 + $0xb0] sm:$0xff]
  %v37 = vld [vmem:[%s0 + $0xb8] sm:$0xff]
  %v38 = vld [vmem:[%s0 + $0xc0] sm:$0xff]
  %v39 = vld [vmem:[%s0 + $0xc8] sm:$0xff]
  %v40 = vld [vmem:[%s0 + $0xd0] sm:$0xff]
  %v41 = vld [vmem:[%s0 + $0xd8] sm:$0xff]
  %v42 = vld [vmem:[%s0 + $0xe0] sm:$0xff]
  %v43 = vld [vmem:[%s0 + $0xe8] sm:$0xff]
  %v44 = vld [vmem:[%s0 + $0xf0] sm:$0xff]
  %v45 = vld [vmem:[%s0 + $0xf8] sm:$0xff]
  %v46 = vld [vmem:[%s1] sm:$0x3]
  %48 = vset.pattern.permute.xlu0 0
  %49 = vperm.xlu0 %48, %v14
  %v50 = vpop.permute.xlu0 %49
  %53 = vset.pattern.permute.xlu0 0
  %54 = vperm.xlu0 %53, %v15
  %v55 = vpop.permute.xlu0 %54
  %58 = vset.pattern.permute.xlu0 0
  %59 = vperm.xlu0 %58, %v16
  %v60 = vpop.permute.xlu0 %59
  %63 = vset.pattern.permute.xlu0 0
  %64 = vperm.xlu0 %63, %v17
  %v65 = vpop.permute.xlu0 %64
  %68 = vset.pattern.permute.xlu0 0
  %69 = vperm.xlu0 %68, %v18
  %v70 = vpop.permute.xlu0 %69
  %73 = vset.pattern.permute.xlu0 0
  %74 = vperm.xlu0 %73, %v19
  %v75 = vpop.permute.xlu0 %74
  %78 = vset.pattern.permute.xlu0 0
  %79 = vperm.xlu0 %78, %v20
  %v80 = vpop.permute.xlu0 %79
  %83 = vset.pattern.permute.xlu0 0
  %84 = vperm.xlu0 %83, %v21
  %v85 = vpop.permute.xlu0 %84
  %88 = vset.pattern.permute.xlu0 0
  %89 = vperm.xlu0 %88, %v22
  %v90 = vpop.permute.xlu0 %89
  %93 = vset.pattern.permute.xlu0 0
  %94 = vperm.xlu0 %93, %v23
  %v95 = vpop.permute.xlu0 %94
  %98 = vset.pattern.permute.xlu0 0
  %99 = vperm.xlu0 %98, %v24
  %v100 = vpop.permute.xlu0 %99
  %103 = vset.pattern.permute.xlu0 0
  %104 = vperm.xlu0 %103, %v25
  %v105 = vpop.permute.xlu0 %104
  %108 = vset.pattern.permute.xlu0 0
  %109 = vperm.xlu0 %108, %v26
  %v110 = vpop.permute.xlu0 %109
  %113 = vset.pattern.permute.xlu0 0
  %114 = vperm.xlu0 %113, %v27
  %v115 = vpop.permute.xlu0 %114
  %118 = vset.pattern.permute.xlu0 0
  %119 = vperm.xlu0 %118, %v28
  %v120 = vpop.permute.xlu0 %119
  %123 = vset.pattern.permute.xlu0 0
  %124 = vperm.xlu0 %123, %v29
  %v125 = vpop.permute.xlu0 %124
  %128 = vset.pattern.permute.xlu0 0
  %129 = vperm.xlu0 %128, %v30
  %v130 = vpop.permute.xlu0 %129
  %133 = vset.pattern.permute.xlu0 0
  %134 = vperm.xlu0 %133, %v31
  %v135 = vpop.permute.xlu0 %134
  %138 = vset.pattern.permute.xlu0 0
  %139 = vperm.xlu0 %138, %v32
  %v140 = vpop.permute.xlu0 %139
  %143 = vset.pattern.permute.xlu0 0
  %144 = vperm.xlu0 %143, %v33
  %v145 = vpop.permute.xlu0 %144
  %148 = vset.pattern.permute.xlu0 0
  %149 = vperm.xlu0 %148, %v34
  %v150 = vpop.permute.xlu0 %149
  %153 = vset.pattern.permute.xlu0 0
  %154 = vperm.xlu0 %153, %v35
  %v155 = vpop.permute.xlu0 %154
  %158 = vset.pattern.permute.xlu0 0
  %159 = vperm.xlu0 %158, %v36
  %v160 = vpop.permute.xlu0 %159
  %163 = vset.pattern.permute.xlu0 0
  %164 = vperm.xlu0 %163, %v37
  %v165 = vpop.permute.xlu0 %164
  %168 = vset.pattern.permute.xlu0 0
  %169 = vperm.xlu0 %168, %v38
  %v170 = vpop.permute.xlu0 %169
  %173 = vset.pattern.permute.xlu0 0
  %174 = vperm.xlu0 %173, %v39
  %v175 = vpop.permute.xlu0 %174
  %178 = vset.pattern.permute.xlu0 0
  %179 = vperm.xlu0 %178, %v40
  %v180 = vpop.permute.xlu0 %179
  %183 = vset.pattern.permute.xlu0 0
  %184 = vperm.xlu0 %183, %v41
  %v185 = vpop.permute.xlu0 %184
  %188 = vset.pattern.permute.xlu0 0
  %189 = vperm.xlu0 %188, %v42
  %v190 = vpop.permute.xlu0 %189
  %193 = vset.pattern.permute.xlu0 0
  %194 = vperm.xlu0 %193, %v43
  %v195 = vpop.permute.xlu0 %194
  %198 = vset.pattern.permute.xlu0 0
  %199 = vperm.xlu0 %198, %v44
  %v200 = vpop.permute.xlu0 %199
  %203 = vset.pattern.permute.xlu0 0
  %204 = vperm.xlu0 %203, %v45
  %v205 = vpop.permute.xlu0 %204
  %v207 = vlaneseq
  %v208 = vshrl.u32 %v207, 7
  %v209 = vsub.s32 0, %v208
  %v210 = vrot.slane %v46, %v209
  %v211 = vmul.f32 %v50, %v210
  %v212 = vmul.f32 %v55, %v210
  %v213 = vmul.f32 %v60, %v210
  %v214 = vmul.f32 %v65, %v210
  %v215 = vmul.f32 %v70, %v210
  %v216 = vmul.f32 %v75, %v210
  %v217 = vmul.f32 %v80, %v210
  %v218 = vmul.f32 %v85, %v210
  %v219 = vmul.f32 %v90, %v210
  %v220 = vmul.f32 %v95, %v210
  %v221 = vmul.f32 %v100, %v210
  %v222 = vmul.f32 %v105, %v210
  %v223 = vmul.f32 %v110, %v210
  %v224 = vmul.f32 %v115, %v210
  %v225 = vmul.f32 %v120, %v210
  %v226 = vmul.f32 %v125, %v210
  %v227 = vmul.f32 %v130, %v210
  %v228 = vmul.f32 %v135, %v210
  %v229 = vmul.f32 %v140, %v210
  %v230 = vmul.f32 %v145, %v210
  %v231 = vmul.f32 %v150, %v210
  %v232 = vmul.f32 %v155, %v210
  %v233 = vmul.f32 %v160, %v210
  %v234 = vmul.f32 %v165, %v210
  %v235 = vmul.f32 %v170, %v210
  %v236 = vmul.f32 %v175, %v210
  %v237 = vmul.f32 %v180, %v210
  %v238 = vmul.f32 %v185, %v210
  %v239 = vmul.f32 %v190, %v210
  %v240 = vmul.f32 %v195, %v210
  %v241 = vmul.f32 %v200, %v210
  %v242 = vmul.f32 %v205, %v210
  %243 = vset.pattern.permute.xlu0 1
  %244 = vperm.xlu0 %243, %v14
  %v245 = vpop.permute.xlu0 %244
  %247 = vset.pattern.permute.xlu0 1
  %248 = vperm.xlu0 %247, %v15
  %v249 = vpop.permute.xlu0 %248
  %251 = vset.pattern.permute.xlu0 1
  %252 = vperm.xlu0 %251, %v16
  %v253 = vpop.permute.xlu0 %252
  %255 = vset.pattern.permute.xlu0 1
  %256 = vperm.xlu0 %255, %v17
  %v257 = vpop.permute.xlu0 %256
  %259 = vset.pattern.permute.xlu0 1
  %260 = vperm.xlu0 %259, %v18
  %v261 = vpop.permute.xlu0 %260
  %263 = vset.pattern.permute.xlu0 1
  %264 = vperm.xlu0 %263, %v19
  %v265 = vpop.permute.xlu0 %264
  %267 = vset.pattern.permute.xlu0 1
  %268 = vperm.xlu0 %267, %v20
  %v269 = vpop.permute.xlu0 %268
  %271 = vset.pattern.permute.xlu0 1
  %272 = vperm.xlu0 %271, %v21
  %v273 = vpop.permute.xlu0 %272
  %275 = vset.pattern.permute.xlu0 1
  %276 = vperm.xlu0 %275, %v22
  %v277 = vpop.permute.xlu0 %276
  %279 = vset.pattern.permute.xlu0 1
  %280 = vperm.xlu0 %279, %v23
  %v281 = vpop.permute.xlu0 %280
  %283 = vset.pattern.permute.xlu0 1
  %284 = vperm.xlu0 %283, %v24
  %v285 = vpop.permute.xlu0 %284
  %287 = vset.pattern.permute.xlu0 1
  %288 = vperm.xlu0 %287, %v25
  %v289 = vpop.permute.xlu0 %288
  %291 = vset.pattern.permute.xlu0 1
  %292 = vperm.xlu0 %291, %v26
  %v293 = vpop.permute.xlu0 %292
  %295 = vset.pattern.permute.xlu0 1
  %296 = vperm.xlu0 %295, %v27
  %v297 = vpop.permute.xlu0 %296
  %299 = vset.pattern.permute.xlu0 1
  %300 = vperm.xlu0 %299, %v28
  %v301 = vpop.permute.xlu0 %300
  %303 = vset.pattern.permute.xlu0 1
  %304 = vperm.xlu0 %303, %v29
  %v305 = vpop.permute.xlu0 %304
  %307 = vset.pattern.permute.xlu0 1
  %308 = vperm.xlu0 %307, %v30
  %v309 = vpop.permute.xlu0 %308
  %311 = vset.pattern.permute.xlu0 1
  %312 = vperm.xlu0 %311, %v31
  %v313 = vpop.permute.xlu0 %312
  %315 = vset.pattern.permute.xlu0 1
  %316 = vperm.xlu0 %315, %v32
  %v317 = vpop.permute.xlu0 %316
  %319 = vset.pattern.permute.xlu0 1
  %320 = vperm.xlu0 %319, %v33
  %v321 = vpop.permute.xlu0 %320
  %323 = vset.pattern.permute.xlu0 1
  %324 = vperm.xlu0 %323, %v34
  %v325 = vpop.permute.xlu0 %324
  %327 = vset.pattern.permute.xlu0 1
  %328 = vperm.xlu0 %327, %v35
  %v329 = vpop.permute.xlu0 %328
  %331 = vset.pattern.permute.xlu0 1
  %332 = vperm.xlu0 %331, %v36
  %v333 = vpop.permute.xlu0 %332
  %335 = vset.pattern.permute.xlu0 1
  %336 = vperm.xlu0 %335, %v37
  %v337 = vpop.permute.xlu0 %336
  %339 = vset.pattern.permute.xlu0 1
  %340 = vperm.xlu0 %339, %v38
  %v341 = vpop.permute.xlu0 %340
  %343 = vset.pattern.permute.xlu0 1
  %344 = vperm.xlu0 %343, %v39
  %v345 = vpop.permute.xlu0 %344
  %347 = vset.pattern.permute.xlu0 1
  %348 = vperm.xlu0 %347, %v40
  %v349 = vpop.permute.xlu0 %348
  %351 = vset.pattern.permute.xlu0 1
  %352 = vperm.xlu0 %351, %v41
  %v353 = vpop.permute.xlu0 %352
  %355 = vset.pattern.permute.xlu0 1
  %356 = vperm.xlu0 %355, %v42
  %v357 = vpop.permute.xlu0 %356
  %359 = vset.pattern.permute.xlu0 1
  %360 = vperm.xlu0 %359, %v43
  %v361 = vpop.permute.xlu0 %360
  %363 = vset.pattern.permute.xlu0 1
  %364 = vperm.xlu0 %363, %v44
  %v365 = vpop.permute.xlu0 %364
  %367 = vset.pattern.permute.xlu0 1
  %368 = vperm.xlu0 %367, %v45
  %v369 = vpop.permute.xlu0 %368
  %v371 = vlaneseq
  %v372 = vshrl.u32 %v371, 7
  %v373 = vsub.s32 1, %v372
  %v374 = vrot.slane %v46, %v373
  %v375 = vmul.f32 %v245, %v374
  %v376 = vmul.f32 %v249, %v374
  %v377 = vmul.f32 %v253, %v374
  %v378 = vmul.f32 %v257, %v374
  %v379 = vmul.f32 %v261, %v374
  %v380 = vmul.f32 %v265, %v374
  %v381 = vmul.f32 %v269, %v374
  %v382 = vmul.f32 %v273, %v374
  %v383 = vmul.f32 %v277, %v374
  %v384 = vmul.f32 %v281, %v374
  %v385 = vmul.f32 %v285, %v374
  %v386 = vmul.f32 %v289, %v374
  %v387 = vmul.f32 %v293, %v374
  %v388 = vmul.f32 %v297, %v374
  %v389 = vmul.f32 %v301, %v374
  %v390 = vmul.f32 %v305, %v374
  %v391 = vmul.f32 %v309, %v374
  %v392 = vmul.f32 %v313, %v374
  %v393 = vmul.f32 %v317, %v374
  %v394 = vmul.f32 %v321, %v374
  %v395 = vmul.f32 %v325, %v374
  %v396 = vmul.f32 %v329, %v374
  %v397 = vmul.f32 %v333, %v374
  %v398 = vmul.f32 %v337, %v374
  %v399 = vmul.f32 %v341, %v374
  %v400 = vmul.f32 %v345, %v374
  %v401 = vmul.f32 %v349, %v374
  %v402 = vmul.f32 %v353, %v374
  %v403 = vmul.f32 %v357, %v374
  %v404 = vmul.f32 %v361, %v374
  %v405 = vmul.f32 %v365, %v374
  %v406 = vmul.f32 %v369, %v374
  %v407 = vadd.f32 %v211, %v375
  %v408 = vadd.f32 %v212, %v376
  %v409 = vadd.f32 %v213, %v377
  %v410 = vadd.f32 %v214, %v378
  %v411 = vadd.f32 %v215, %v379
  %v412 = vadd.f32 %v216, %v380
  %v413 = vadd.f32 %v217, %v381
  %v414 = vadd.f32 %v218, %v382
  %v415 = vadd.f32 %v219, %v383
  %v416 = vadd.f32 %v220, %v384
  %v417 = vadd.f32 %v221, %v385
  %v418 = vadd.f32 %v222, %v386
  %v419 = vadd.f32 %v223, %v387
  %v420 = vadd.f32 %v224, %v388
  %v421 = vadd.f32 %v225, %v389
  %v422 = vadd.f32 %v226, %v390
  %v423 = vadd.f32 %v227, %v391
  %v424 = vadd.f32 %v228, %v392
  %v425 = vadd.f32 %v229, %v393
  %v426 = vadd.f32 %v230, %v394
  %v427 = vadd.f32 %v231, %v395
  %v428 = vadd.f32 %v232, %v396
  %v429 = vadd.f32 %v233, %v397
  %v430 = vadd.f32 %v234, %v398
  %v431 = vadd.f32 %v235, %v399
  %v432 = vadd.f32 %v236, %v400
  %v433 = vadd.f32 %v237, %v401
  %v434 = vadd.f32 %v238, %v402
  %v435 = vadd.f32 %v239, %v403
  %v436 = vadd.f32 %v240, %v404
  %v437 = vadd.f32 %v241, %v405
  %v438 = vadd.f32 %v242, %v406
  %v439 = vld [vmem:[%s2] sm:$0x1]
  %v441 = vlaneseq
  %v442 = vshrl.u32 %v441, 7
  %v443 = vsub.s32 0, %v442
  %v444 = vrot.slane %v439, %v443
  %v446 = vadd.f32 %v407, %v444
  %v447 = vadd.f32 %v408, %v444
  %v448 = vadd.f32 %v409, %v444
  %v449 = vadd.f32 %v410, %v444
  %v450 = vadd.f32 %v411, %v444
  %v451 = vadd.f32 %v412, %v444
  %v452 = vadd.f32 %v413, %v444
  %v453 = vadd.f32 %v414, %v444
  %v454 = vadd.f32 %v415, %v444
  %v455 = vadd.f32 %v416, %v444
  %v456 = vadd.f32 %v417, %v444
  %v457 = vadd.f32 %v418, %v444
  %v458 = vadd.f32 %v419, %v444
  %v459 = vadd.f32 %v420, %v444
  %v460 = vadd.f32 %v421, %v444
  %v461 = vadd.f32 %v422, %v444
  %v462 = vadd.f32 %v423, %v444
  %v463 = vadd.f32 %v424, %v444
  %v464 = vadd.f32 %v425, %v444
  %v465 = vadd.f32 %v426, %v444
  %v466 = vadd.f32 %v427, %v444
  %v467 = vadd.f32 %v428, %v444
  %v468 = vadd.f32 %v429, %v444
  %v469 = vadd.f32 %v430, %v444
  %v470 = vadd.f32 %v431, %v444
  %v471 = vadd.f32 %v432, %v444
  %v472 = vadd.f32 %v433, %v444
  %v473 = vadd.f32 %v434, %v444
  %v474 = vadd.f32 %v435, %v444
  %v475 = vadd.f32 %v436, %v444
  %v476 = vadd.f32 %v437, %v444
  %v477 = vadd.f32 %v438, %v444
  %v478 = vmul.f32 %v446, 25.132742
  %v479 = vmul.f32 %v447, 25.132742
  %v480 = vmul.f32 %v448, 25.132742
  %v481 = vmul.f32 %v449, 25.132742
  %v482 = vmul.f32 %v450, 25.132742
  %v483 = vmul.f32 %v451, 25.132742
  %v484 = vmul.f32 %v452, 25.132742
  %v485 = vmul.f32 %v453, 25.132742
  %v486 = vmul.f32 %v454, 25.132742
  %v487 = vmul.f32 %v455, 25.132742
  %v488 = vmul.f32 %v456, 25.132742
  %v489 = vmul.f32 %v457, 25.132742
  %v490 = vmul.f32 %v458, 25.132742
  %v491 = vmul.f32 %v459, 25.132742
  %v492 = vmul.f32 %v460, 25.132742
  %v493 = vmul.f32 %v461, 25.132742
  %v494 = vmul.f32 %v462, 25.132742
  %v495 = vmul.f32 %v463, 25.132742
  %v496 = vmul.f32 %v464, 25.132742
  %v497 = vmul.f32 %v465, 25.132742
  %v498 = vmul.f32 %v466, 25.132742
  %v499 = vmul.f32 %v467, 25.132742
  %v500 = vmul.f32 %v468, 25.132742
  %v501 = vmul.f32 %v469, 25.132742
  %v502 = vmul.f32 %v470, 25.132742
  %v503 = vmul.f32 %v471, 25.132742
  %v504 = vmul.f32 %v472, 25.132742
  %v505 = vmul.f32 %v473, 25.132742
  %v506 = vmul.f32 %v474, 25.132742
  %v507 = vmul.f32 %v475, 25.132742
  %v508 = vmul.f32 %v476, 25.132742
  %v509 = vmul.f32 %v477, 25.132742
  %v510 = vand.u32 2147483647, %v478
  %vm511 = vcmp.le.f32.partialorder %v510, 0.7853982
  %vm512 = vcmp.lt.s32.totalorder %v478, 0
  %v513 = vand.u32 %v478, 2139095040
  %v514 = vshrl.u32 %v513, 23
  %v515 = vsub.s32 %v514, 127
  %v516 = vand.u32 2147483647, %v478
  %v517 = vand.u32 %v516, 8388607
  %v518 = vor.u32 %v517, 8388608
  %v519 = vsub.s32 0, %v518
  %v520 = vadd.s32 %v515, 1
  %vm521 = vcmp.gt.s32.totalorder %v520, 0
  %v522 = vsel %vm521, %v520, 0
  %v523 = vshrl.u32 %v522, 5
  %v524 = vand.u32 %v522, 31
  %v525 = vsub.s32 32, %v524
  %v526 = vshrl.u32 683565275, %v525
  %v527 = vshll.u32 683565275, %v524
  %v528 = vshrl.u32 2475754826, %v525
  %v529 = vor.u32 %v527, %v528
  %v530 = vshll.u32 2475754826, %v524
  %v531 = vshrl.u32 2131351028, %v525
  %v532 = vor.u32 %v530, %v531
  %v533 = vshll.u32 2131351028, %v524
  %v534 = vshrl.u32 2102212464, %v525
  %v535 = vor.u32 %v533, %v534
  %v536 = vshll.u32 2102212464, %v524
  %v537 = vshrl.u32 920167782, %v525
  %v538 = vor.u32 %v536, %v537
  %v539 = vshll.u32 920167782, %v524
  %v540 = vshrl.u32 1326507024, %v525
  %v541 = vor.u32 %v539, %v540
  %vm542 = vcmp.lt.s32.totalorder %v523, 1
  %vm543 = vcmp.lt.s32.totalorder %v523, 2
  %vm544 = vcmp.lt.s32.totalorder %v523, 3
  %vm545 = vcmp.lt.s32.totalorder %v523, 4
  %v546 = vsel %vm542, %v526, %v529
  %v547 = vsel %vm545, %v535, 2102212464
  %v548 = vsel %vm544, %v532, %v547
  %v549 = vsel %vm543, %v546, %v548
  %v550 = vsel %vm542, %v529, %v532
  %v551 = vsel %vm545, %v538, 920167782
  %v552 = vsel %vm544, %v535, %v551
  %v553 = vsel %vm543, %v550, %v552
  %v554 = vsel %vm542, %v532, %v535
  %v555 = vsel %vm545, %v541, 1326507024
  %v556 = vsel %vm544, %v538, %v555
  %v557 = vsel %vm543, %v554, %v556
  %v558 = vshll.u32 %v518, 8
  %v559 = vmul.u32.u64.compose %v558, %v557
  %v560 = vextract.low.u32 %v559
  %v561 = vextract.high.u32 %v559
  %v562 = vmul.u32.u64.compose %v558, %v553
  %v563 = vextract.low.u32 %v562
  %v564 = vextract.high.u32 %v562
  %v565 = vmul.u32 %v558, %v549
  %v566 = vadd.s32 %v561, %v563
  %vm567 = vc.u32 %v561, %v563
  %v568 = vadd.s32 %v564, 1
  %v569 = vsel %vm567, %v568, %v564
  %v570 = vadd.s32 %v565, %v569
  %v571 = vadd.s32 %v570, 536870912
  %v572 = vshrl.u32 %v571, 30
  %v573 = vshll.u32 %v572, 30
  %v574 = vsub.s32 %v570, %v573
  %vm575 = vcmp.lt.s32.totalorder %v574, 0
  %v576 = vsub.s32 0, %v574
  %v577 = vsel %vm575, %v576, %v574
  %v578 = vclz %v577
  %v579 = vsub.s32 %v578, 2
  %vm580 = vcmp.gt.s32.totalorder 0, %v579
  %v581 = vsel %vm580, 0, %v579
  %v582 = vsub.s32 32, %v581
  %v583 = vshll.u32 %v574, %v581
  %v584 = vshrl.u32 %v566, %v582
  %v585 = vor.u32 %v583, %v584
  %v586 = vsub.s32 4294967266, %v581
  %v587 = vadd.s32 %v586, 127
  %v588 = vshll.u32 %v587, 23
  %v589 = vor.u32 4788187, %v588
  %v590 = vand.u32 2147483647, %v589
  %v592 = vcvt.s32.f32 %v585
  %v593 = vmul.f32 %v592, %v590
  %v594 = vxor.u32 %v593, 2147483648
  %v595 = vsel %vm512, %v594, %v593
  %v596 = vsub.s32 4, %v572
  %v597 = vsel %vm512, %v596, %v572
  %v598 = vsel %vm511, %v478, %v595
  %v599 = vsel %vm511, 0, %v597
  %v600 = vcosq.f32.pop %v598
  %v601 = vsinq.f32.pop %v598
  %vm602 = vweird.f32 %v478
  %v603 = vand.u32 %v599, 3
  %vm604 = vcmp.lt.s32.totalorder %v603, 2
  %vm605 = vcmp.eq.s32.totalorder %v603, 0
  %v606 = vxor.u32 %v601, 2147483648
  %v607 = vsel %vm605, %v600, %v606
  %vm608 = vcmp.eq.s32.totalorder %v603, 2
  %v609 = vxor.u32 %v600, 2147483648
  %v610 = vsel %vm608, %v609, %v601
  %v611 = vsel %vm604, %v607, %v610
  %v612 = vsel %vm602, nan, %v611
  %v613 = vand.u32 2147483647, %v479
  %vm614 = vcmp.le.f32.partialorder %v613, 0.7853982
  %vm615 = vcmp.lt.s32.totalorder %v479, 0
  %v616 = vand.u32 %v479, 2139095040
  %v617 = vshrl.u32 %v616, 23
  %v618 = vsub.s32 %v617, 127
  %v619 = vand.u32 2147483647, %v479
  %v620 = vand.u32 %v619, 8388607
  %v621 = vor.u32 %v620, 8388608
  %v622 = vsub.s32 0, %v621
  %v623 = vadd.s32 %v618, 1
  %vm624 = vcmp.gt.s32.totalorder %v623, 0
  %v625 = vsel %vm624, %v623, 0
  %v626 = vshrl.u32 %v625, 5
  %v627 = vand.u32 %v625, 31
  %v628 = vsub.s32 32, %v627
  %v629 = vshrl.u32 683565275, %v628
  %v630 = vshll.u32 683565275, %v627
  %v631 = vshrl.u32 2475754826, %v628
  %v632 = vor.u32 %v630, %v631
  %v633 = vshll.u32 2475754826, %v627
  %v634 = vshrl.u32 2131351028, %v628
  %v635 = vor.u32 %v633, %v634
  %v636 = vshll.u32 2131351028, %v627
  %v637 = vshrl.u32 2102212464, %v628
  %v638 = vor.u32 %v636, %v637
  %v639 = vshll.u32 2102212464, %v627
  %v640 = vshrl.u32 920167782, %v628
  %v641 = vor.u32 %v639, %v640
  %v642 = vshll.u32 920167782, %v627
  %v643 = vshrl.u32 1326507024, %v628
  %v644 = vor.u32 %v642, %v643
  %vm645 = vcmp.lt.s32.totalorder %v626, 1
  %vm646 = vcmp.lt.s32.totalorder %v626, 2
  %vm647 = vcmp.lt.s32.totalorder %v626, 3
  %vm648 = vcmp.lt.s32.totalorder %v626, 4
  %v649 = vsel %vm645, %v629, %v632
  %v650 = vsel %vm648, %v638, 2102212464
  %v651 = vsel %vm647, %v635, %v650
  %v652 = vsel %vm646, %v649, %v651
  %v653 = vsel %vm645, %v632, %v635
  %v654 = vsel %vm648, %v641, 920167782
  %v655 = vsel %vm647, %v638, %v654
  %v656 = vsel %vm646, %v653, %v655
  %v657 = vsel %vm645, %v635, %v638
  %v658 = vsel %vm648, %v644, 1326507024
  %v659 = vsel %vm647, %v641, %v658
  %v660 = vsel %vm646, %v657, %v659
  %v661 = vshll.u32 %v621, 8
  %v662 = vmul.u32.u64.compose %v661, %v660
  %v663 = vextract.low.u32 %v662
  %v664 = vextract.high.u32 %v662
  %v665 = vmul.u32.u64.compose %v661, %v656
  %v666 = vextract.low.u32 %v665
  %v667 = vextract.high.u32 %v665
  %v668 = vmul.u32 %v661, %v652
  %v669 = vadd.s32 %v664, %v666
  %vm670 = vc.u32 %v664, %v666
  %v671 = vadd.s32 %v667, 1
  %v672 = vsel %vm670, %v671, %v667
  %v673 = vadd.s32 %v668, %v672
  %v674 = vadd.s32 %v673, 536870912
  %v675 = vshrl.u32 %v674, 30
  %v676 = vshll.u32 %v675, 30
  %v677 = vsub.s32 %v673, %v676
  %vm678 = vcmp.lt.s32.totalorder %v677, 0
  %v679 = vsub.s32 0, %v677
  %v680 = vsel %vm678, %v679, %v677
  %v681 = vclz %v680
  %v682 = vsub.s32 %v681, 2
  %vm683 = vcmp.gt.s32.totalorder 0, %v682
  %v684 = vsel %vm683, 0, %v682
  %v685 = vsub.s32 32, %v684
  %v686 = vshll.u32 %v677, %v684
  %v687 = vshrl.u32 %v669, %v685
  %v688 = vor.u32 %v686, %v687
  %v689 = vsub.s32 4294967266, %v684
  %v690 = vadd.s32 %v689, 127
  %v691 = vshll.u32 %v690, 23
  %v692 = vor.u32 4788187, %v691
  %v693 = vand.u32 2147483647, %v692
  %v695 = vcvt.s32.f32 %v688
  %v696 = vmul.f32 %v695, %v693
  %v697 = vxor.u32 %v696, 2147483648
  %v698 = vsel %vm615, %v697, %v696
  %v699 = vsub.s32 4, %v675
  %v700 = vsel %vm615, %v699, %v675
  %v701 = vsel %vm614, %v479, %v698
  %v702 = vsel %vm614, 0, %v700
  %v703 = vcosq.f32.pop %v701
  %v704 = vsinq.f32.pop %v701
  %vm705 = vweird.f32 %v479
  %v706 = vand.u32 %v702, 3
  %vm707 = vcmp.lt.s32.totalorder %v706, 2
  %vm708 = vcmp.eq.s32.totalorder %v706, 0
  %v709 = vxor.u32 %v704, 2147483648
  %v710 = vsel %vm708, %v703, %v709
  %vm711 = vcmp.eq.s32.totalorder %v706, 2
  %v712 = vxor.u32 %v703, 2147483648
  %v713 = vsel %vm711, %v712, %v704
  %v714 = vsel %vm707, %v710, %v713
  %v715 = vsel %vm705, nan, %v714
  %v716 = vand.u32 2147483647, %v480
  %vm717 = vcmp.le.f32.partialorder %v716, 0.7853982
  %vm718 = vcmp.lt.s32.totalorder %v480, 0
  %v719 = vand.u32 %v480, 2139095040
  %v720 = vshrl.u32 %v719, 23
  %v721 = vsub.s32 %v720, 127
  %v722 = vand.u32 2147483647, %v480
  %v723 = vand.u32 %v722, 8388607
  %v724 = vor.u32 %v723, 8388608
  %v725 = vsub.s32 0, %v724
  %v726 = vadd.s32 %v721, 1
  %vm727 = vcmp.gt.s32.totalorder %v726, 0
  %v728 = vsel %vm727, %v726, 0
  %v729 = vshrl.u32 %v728, 5
  %v730 = vand.u32 %v728, 31
  %v731 = vsub.s32 32, %v730
  %v732 = vshrl.u32 683565275, %v731
  %v733 = vshll.u32 683565275, %v730
  %v734 = vshrl.u32 2475754826, %v731
  %v735 = vor.u32 %v733, %v734
  %v736 = vshll.u32 2475754826, %v730
  %v737 = vshrl.u32 2131351028, %v731
  %v738 = vor.u32 %v736, %v737
  %v739 = vshll.u32 2131351028, %v730
  %v740 = vshrl.u32 2102212464, %v731
  %v741 = vor.u32 %v739, %v740
  %v742 = vshll.u32 2102212464, %v730
  %v743 = vshrl.u32 920167782, %v731
  %v744 = vor.u32 %v742, %v743
  %v745 = vshll.u32 920167782, %v730
  %v746 = vshrl.u32 1326507024, %v731
  %v747 = vor.u32 %v745, %v746
  %vm748 = vcmp.lt.s32.totalorder %v729, 1
  %vm749 = vcmp.lt.s32.totalorder %v729, 2
  %vm750 = vcmp.lt.s32.totalorder %v729, 3
  %vm751 = vcmp.lt.s32.totalorder %v729, 4
  %v752 = vsel %vm748, %v732, %v735
  %v753 = vsel %vm751, %v741, 2102212464
  %v754 = vsel %vm750, %v738, %v753
  %v755 = vsel %vm749, %v752, %v754
  %v756 = vsel %vm748, %v735, %v738
  %v757 = vsel %vm751, %v744, 920167782
  %v758 = vsel %vm750, %v741, %v757
  %v759 = vsel %vm749, %v756, %v758
  %v760 = vsel %vm748, %v738, %v741
  %v761 = vsel %vm751, %v747, 1326507024
  %v762 = vsel %vm750, %v744, %v761
  %v763 = vsel %vm749, %v760, %v762
  %v764 = vshll.u32 %v724, 8
  %v765 = vmul.u32.u64.compose %v764, %v763
  %v766 = vextract.low.u32 %v765
  %v767 = vextract.high.u32 %v765
  %v768 = vmul.u32.u64.compose %v764, %v759
  %v769 = vextract.low.u32 %v768
  %v770 = vextract.high.u32 %v768
  %v771 = vmul.u32 %v764, %v755
  %v772 = vadd.s32 %v767, %v769
  %vm773 = vc.u32 %v767, %v769
  %v774 = vadd.s32 %v770, 1
  %v775 = vsel %vm773, %v774, %v770
  %v776 = vadd.s32 %v771, %v775
  %v777 = vadd.s32 %v776, 536870912
  %v778 = vshrl.u32 %v777, 30
  %v779 = vshll.u32 %v778, 30
  %v780 = vsub.s32 %v776, %v779
  %vm781 = vcmp.lt.s32.totalorder %v780, 0
  %v782 = vsub.s32 0, %v780
  %v783 = vsel %vm781, %v782, %v780
  %v784 = vclz %v783
  %v785 = vsub.s32 %v784, 2
  %vm786 = vcmp.gt.s32.totalorder 0, %v785
  %v787 = vsel %vm786, 0, %v785
  %v788 = vsub.s32 32, %v787
  %v789 = vshll.u32 %v780, %v787
  %v790 = vshrl.u32 %v772, %v788
  %v791 = vor.u32 %v789, %v790
  %v792 = vsub.s32 4294967266, %v787
  %v793 = vadd.s32 %v792, 127
  %v794 = vshll.u32 %v793, 23
  %v795 = vor.u32 4788187, %v794
  %v796 = vand.u32 2147483647, %v795
  %v798 = vcvt.s32.f32 %v791
  %v799 = vmul.f32 %v798, %v796
  %v800 = vxor.u32 %v799, 2147483648
  %v801 = vsel %vm718, %v800, %v799
  %v802 = vsub.s32 4, %v778
  %v803 = vsel %vm718, %v802, %v778
  %v804 = vsel %vm717, %v480, %v801
  %v805 = vsel %vm717, 0, %v803
  %v806 = vcosq.f32.pop %v804
  %v807 = vsinq.f32.pop %v804
  %vm808 = vweird.f32 %v480
  %v809 = vand.u32 %v805, 3
  %vm810 = vcmp.lt.s32.totalorder %v809, 2
  %vm811 = vcmp.eq.s32.totalorder %v809, 0
  %v812 = vxor.u32 %v807, 2147483648
  %v813 = vsel %vm811, %v806, %v812
  %vm814 = vcmp.eq.s32.totalorder %v809, 2
  %v815 = vxor.u32 %v806, 2147483648
  %v816 = vsel %vm814, %v815, %v807
  %v817 = vsel %vm810, %v813, %v816
  %v818 = vsel %vm808, nan, %v817
  %v819 = vand.u32 2147483647, %v481
  %vm820 = vcmp.le.f32.partialorder %v819, 0.7853982
  %vm821 = vcmp.lt.s32.totalorder %v481, 0
  %v822 = vand.u32 %v481, 2139095040
  %v823 = vshrl.u32 %v822, 23
  %v824 = vsub.s32 %v823, 127
  %v825 = vand.u32 2147483647, %v481
  %v826 = vand.u32 %v825, 8388607
  %v827 = vor.u32 %v826, 8388608
  %v828 = vsub.s32 0, %v827
  %v829 = vadd.s32 %v824, 1
  %vm830 = vcmp.gt.s32.totalorder %v829, 0
  %v831 = vsel %vm830, %v829, 0
  %v832 = vshrl.u32 %v831, 5
  %v833 = vand.u32 %v831, 31
  %v834 = vsub.s32 32, %v833
  %v835 = vshrl.u32 683565275, %v834
  %v836 = vshll.u32 683565275, %v833
  %v837 = vshrl.u32 2475754826, %v834
  %v838 = vor.u32 %v836, %v837
  %v839 = vshll.u32 2475754826, %v833
  %v840 = vshrl.u32 2131351028, %v834
  %v841 = vor.u32 %v839, %v840
  %v842 = vshll.u32 2131351028, %v833
  %v843 = vshrl.u32 2102212464, %v834
  %v844 = vor.u32 %v842, %v843
  %v845 = vshll.u32 2102212464, %v833
  %v846 = vshrl.u32 920167782, %v834
  %v847 = vor.u32 %v845, %v846
  %v848 = vshll.u32 920167782, %v833
  %v849 = vshrl.u32 1326507024, %v834
  %v850 = vor.u32 %v848, %v849
  %vm851 = vcmp.lt.s32.totalorder %v832, 1
  %vm852 = vcmp.lt.s32.totalorder %v832, 2
  %vm853 = vcmp.lt.s32.totalorder %v832, 3
  %vm854 = vcmp.lt.s32.totalorder %v832, 4
  %v855 = vsel %vm851, %v835, %v838
  %v856 = vsel %vm854, %v844, 2102212464
  %v857 = vsel %vm853, %v841, %v856
  %v858 = vsel %vm852, %v855, %v857
  %v859 = vsel %vm851, %v838, %v841
  %v860 = vsel %vm854, %v847, 920167782
  %v861 = vsel %vm853, %v844, %v860
  %v862 = vsel %vm852, %v859, %v861
  %v863 = vsel %vm851, %v841, %v844
  %v864 = vsel %vm854, %v850, 1326507024
  %v865 = vsel %vm853, %v847, %v864
  %v866 = vsel %vm852, %v863, %v865
  %v867 = vshll.u32 %v827, 8
  %v868 = vmul.u32.u64.compose %v867, %v866
  %v869 = vextract.low.u32 %v868
  %v870 = vextract.high.u32 %v868
  %v871 = vmul.u32.u64.compose %v867, %v862
  %v872 = vextract.low.u32 %v871
  %v873 = vextract.high.u32 %v871
  %v874 = vmul.u32 %v867, %v858
  %v875 = vadd.s32 %v870, %v872
  %vm876 = vc.u32 %v870, %v872
  %v877 = vadd.s32 %v873, 1
  %v878 = vsel %vm876, %v877, %v873
  %v879 = vadd.s32 %v874, %v878
  %v880 = vadd.s32 %v879, 536870912
  %v881 = vshrl.u32 %v880, 30
  %v882 = vshll.u32 %v881, 30
  %v883 = vsub.s32 %v879, %v882
  %vm884 = vcmp.lt.s32.totalorder %v883, 0
  %v885 = vsub.s32 0, %v883
  %v886 = vsel %vm884, %v885, %v883
  %v887 = vclz %v886
  %v888 = vsub.s32 %v887, 2
  %vm889 = vcmp.gt.s32.totalorder 0, %v888
  %v890 = vsel %vm889, 0, %v888
  %v891 = vsub.s32 32, %v890
  %v892 = vshll.u32 %v883, %v890
  %v893 = vshrl.u32 %v875, %v891
  %v894 = vor.u32 %v892, %v893
  %v895 = vsub.s32 4294967266, %v890
  %v896 = vadd.s32 %v895, 127
  %v897 = vshll.u32 %v896, 23
  %v898 = vor.u32 4788187, %v897
  %v899 = vand.u32 2147483647, %v898
  %v901 = vcvt.s32.f32 %v894
  %v902 = vmul.f32 %v901, %v899
  %v903 = vxor.u32 %v902, 2147483648
  %v904 = vsel %vm821, %v903, %v902
  %v905 = vsub.s32 4, %v881
  %v906 = vsel %vm821, %v905, %v881
  %v907 = vsel %vm820, %v481, %v904
  %v908 = vsel %vm820, 0, %v906
  %v909 = vcosq.f32.pop %v907
  %v910 = vsinq.f32.pop %v907
  %vm911 = vweird.f32 %v481
  %v912 = vand.u32 %v908, 3
  %vm913 = vcmp.lt.s32.totalorder %v912, 2
  %vm914 = vcmp.eq.s32.totalorder %v912, 0
  %v915 = vxor.u32 %v910, 2147483648
  %v916 = vsel %vm914, %v909, %v915
  %vm917 = vcmp.eq.s32.totalorder %v912, 2
  %v918 = vxor.u32 %v909, 2147483648
  %v919 = vsel %vm917, %v918, %v910
  %v920 = vsel %vm913, %v916, %v919
  %v921 = vsel %vm911, nan, %v920
  %v922 = vand.u32 2147483647, %v482
  %vm923 = vcmp.le.f32.partialorder %v922, 0.7853982
  %vm924 = vcmp.lt.s32.totalorder %v482, 0
  %v925 = vand.u32 %v482, 2139095040
  %v926 = vshrl.u32 %v925, 23
  %v927 = vsub.s32 %v926, 127
  %v928 = vand.u32 2147483647, %v482
  %v929 = vand.u32 %v928, 8388607
  %v930 = vor.u32 %v929, 8388608
  %v931 = vsub.s32 0, %v930
  %v932 = vadd.s32 %v927, 1
  %vm933 = vcmp.gt.s32.totalorder %v932, 0
  %v934 = vsel %vm933, %v932, 0
  %v935 = vshrl.u32 %v934, 5
  %v936 = vand.u32 %v934, 31
  %v937 = vsub.s32 32, %v936
  %v938 = vshrl.u32 683565275, %v937
  %v939 = vshll.u32 683565275, %v936
  %v940 = vshrl.u32 2475754826, %v937
  %v941 = vor.u32 %v939, %v940
  %v942 = vshll.u32 2475754826, %v936
  %v943 = vshrl.u32 2131351028, %v937
  %v944 = vor.u32 %v942, %v943
  %v945 = vshll.u32 2131351028, %v936
  %v946 = vshrl.u32 2102212464, %v937
  %v947 = vor.u32 %v945, %v946
  %v948 = vshll.u32 2102212464, %v936
  %v949 = vshrl.u32 920167782, %v937
  %v950 = vor.u32 %v948, %v949
  %v951 = vshll.u32 920167782, %v936
  %v952 = vshrl.u32 1326507024, %v937
  %v953 = vor.u32 %v951, %v952
  %vm954 = vcmp.lt.s32.totalorder %v935, 1
  %vm955 = vcmp.lt.s32.totalorder %v935, 2
  %vm956 = vcmp.lt.s32.totalorder %v935, 3
  %vm957 = vcmp.lt.s32.totalorder %v935, 4
  %v958 = vsel %vm954, %v938, %v941
  %v959 = vsel %vm957, %v947, 2102212464
  %v960 = vsel %vm956, %v944, %v959
  %v961 = vsel %vm955, %v958, %v960
  %v962 = vsel %vm954, %v941, %v944
  %v963 = vsel %vm957, %v950, 920167782
  %v964 = vsel %vm956, %v947, %v963
  %v965 = vsel %vm955, %v962, %v964
  %v966 = vsel %vm954, %v944, %v947
  %v967 = vsel %vm957, %v953, 1326507024
  %v968 = vsel %vm956, %v950, %v967
  %v969 = vsel %vm955, %v966, %v968
  %v970 = vshll.u32 %v930, 8
  %v971 = vmul.u32.u64.compose %v970, %v969
  %v972 = vextract.low.u32 %v971
  %v973 = vextract.high.u32 %v971
  %v974 = vmul.u32.u64.compose %v970, %v965
  %v975 = vextract.low.u32 %v974
  %v976 = vextract.high.u32 %v974
  %v977 = vmul.u32 %v970, %v961
  %v978 = vadd.s32 %v973, %v975
  %vm979 = vc.u32 %v973, %v975
  %v980 = vadd.s32 %v976, 1
  %v981 = vsel %vm979, %v980, %v976
  %v982 = vadd.s32 %v977, %v981
  %v983 = vadd.s32 %v982, 536870912
  %v984 = vshrl.u32 %v983, 30
  %v985 = vshll.u32 %v984, 30
  %v986 = vsub.s32 %v982, %v985
  %vm987 = vcmp.lt.s32.totalorder %v986, 0
  %v988 = vsub.s32 0, %v986
  %v989 = vsel %vm987, %v988, %v986
  %v990 = vclz %v989
  %v991 = vsub.s32 %v990, 2
  %vm992 = vcmp.gt.s32.totalorder 0, %v991
  %v993 = vsel %vm992, 0, %v991
  %v994 = vsub.s32 32, %v993
  %v995 = vshll.u32 %v986, %v993
  %v996 = vshrl.u32 %v978, %v994
  %v997 = vor.u32 %v995, %v996
  %v998 = vsub.s32 4294967266, %v993
  %v999 = vadd.s32 %v998, 127
  %v1000 = vshll.u32 %v999, 23
  %v1001 = vor.u32 4788187, %v1000
  %v1002 = vand.u32 2147483647, %v1001
  %v1004 = vcvt.s32.f32 %v997
  %v1005 = vmul.f32 %v1004, %v1002
  %v1006 = vxor.u32 %v1005, 2147483648
  %v1007 = vsel %vm924, %v1006, %v1005
  %v1008 = vsub.s32 4, %v984
  %v1009 = vsel %vm924, %v1008, %v984
  %v1010 = vsel %vm923, %v482, %v1007
  %v1011 = vsel %vm923, 0, %v1009
  %v1012 = vcosq.f32.pop %v1010
  %v1013 = vsinq.f32.pop %v1010
  %vm1014 = vweird.f32 %v482
  %v1015 = vand.u32 %v1011, 3
  %vm1016 = vcmp.lt.s32.totalorder %v1015, 2
  %vm1017 = vcmp.eq.s32.totalorder %v1015, 0
  %v1018 = vxor.u32 %v1013, 2147483648
  %v1019 = vsel %vm1017, %v1012, %v1018
  %vm1020 = vcmp.eq.s32.totalorder %v1015, 2
  %v1021 = vxor.u32 %v1012, 2147483648
  %v1022 = vsel %vm1020, %v1021, %v1013
  %v1023 = vsel %vm1016, %v1019, %v1022
  %v1024 = vsel %vm1014, nan, %v1023
  %v1025 = vand.u32 2147483647, %v483
  %vm1026 = vcmp.le.f32.partialorder %v1025, 0.7853982
  %vm1027 = vcmp.lt.s32.totalorder %v483, 0
  %v1028 = vand.u32 %v483, 2139095040
  %v1029 = vshrl.u32 %v1028, 23
  %v1030 = vsub.s32 %v1029, 127
  %v1031 = vand.u32 2147483647, %v483
  %v1032 = vand.u32 %v1031, 8388607
  %v1033 = vor.u32 %v1032, 8388608
  %v1034 = vsub.s32 0, %v1033
  %v1035 = vadd.s32 %v1030, 1
  %vm1036 = vcmp.gt.s32.totalorder %v1035, 0
  %v1037 = vsel %vm1036, %v1035, 0
  %v1038 = vshrl.u32 %v1037, 5
  %v1039 = vand.u32 %v1037, 31
  %v1040 = vsub.s32 32, %v1039
  %v1041 = vshrl.u32 683565275, %v1040
  %v1042 = vshll.u32 683565275, %v1039
  %v1043 = vshrl.u32 2475754826, %v1040
  %v1044 = vor.u32 %v1042, %v1043
  %v1045 = vshll.u32 2475754826, %v1039
  %v1046 = vshrl.u32 2131351028, %v1040
  %v1047 = vor.u32 %v1045, %v1046
  %v1048 = vshll.u32 2131351028, %v1039
  %v1049 = vshrl.u32 2102212464, %v1040
  %v1050 = vor.u32 %v1048, %v1049
  %v1051 = vshll.u32 2102212464, %v1039
  %v1052 = vshrl.u32 920167782, %v1040
  %v1053 = vor.u32 %v1051, %v1052
  %v1054 = vshll.u32 920167782, %v1039
  %v1055 = vshrl.u32 1326507024, %v1040
  %v1056 = vor.u32 %v1054, %v1055
  %vm1057 = vcmp.lt.s32.totalorder %v1038, 1
  %vm1058 = vcmp.lt.s32.totalorder %v1038, 2
  %vm1059 = vcmp.lt.s32.totalorder %v1038, 3
  %vm1060 = vcmp.lt.s32.totalorder %v1038, 4
  %v1061 = vsel %vm1057, %v1041, %v1044
  %v1062 = vsel %vm1060, %v1050, 2102212464
  %v1063 = vsel %vm1059, %v1047, %v1062
  %v1064 = vsel %vm1058, %v1061, %v1063
  %v1065 = vsel %vm1057, %v1044, %v1047
  %v1066 = vsel %vm1060, %v1053, 920167782
  %v1067 = vsel %vm1059, %v1050, %v1066
  %v1068 = vsel %vm1058, %v1065, %v1067
  %v1069 = vsel %vm1057, %v1047, %v1050
  %v1070 = vsel %vm1060, %v1056, 1326507024
  %v1071 = vsel %vm1059, %v1053, %v1070
  %v1072 = vsel %vm1058, %v1069, %v1071
  %v1073 = vshll.u32 %v1033, 8
  %v1074 = vmul.u32.u64.compose %v1073, %v1072
  %v1075 = vextract.low.u32 %v1074
  %v1076 = vextract.high.u32 %v1074
  %v1077 = vmul.u32.u64.compose %v1073, %v1068
  %v1078 = vextract.low.u32 %v1077
  %v1079 = vextract.high.u32 %v1077
  %v1080 = vmul.u32 %v1073, %v1064
  %v1081 = vadd.s32 %v1076, %v1078
  %vm1082 = vc.u32 %v1076, %v1078
  %v1083 = vadd.s32 %v1079, 1
  %v1084 = vsel %vm1082, %v1083, %v1079
  %v1085 = vadd.s32 %v1080, %v1084
  %v1086 = vadd.s32 %v1085, 536870912
  %v1087 = vshrl.u32 %v1086, 30
  %v1088 = vshll.u32 %v1087, 30
  %v1089 = vsub.s32 %v1085, %v1088
  %vm1090 = vcmp.lt.s32.totalorder %v1089, 0
  %v1091 = vsub.s32 0, %v1089
  %v1092 = vsel %vm1090, %v1091, %v1089
  %v1093 = vclz %v1092
  %v1094 = vsub.s32 %v1093, 2
  %vm1095 = vcmp.gt.s32.totalorder 0, %v1094
  %v1096 = vsel %vm1095, 0, %v1094
  %v1097 = vsub.s32 32, %v1096
  %v1098 = vshll.u32 %v1089, %v1096
  %v1099 = vshrl.u32 %v1081, %v1097
  %v1100 = vor.u32 %v1098, %v1099
  %v1101 = vsub.s32 4294967266, %v1096
  %v1102 = vadd.s32 %v1101, 127
  %v1103 = vshll.u32 %v1102, 23
  %v1104 = vor.u32 4788187, %v1103
  %v1105 = vand.u32 2147483647, %v1104
  %v1107 = vcvt.s32.f32 %v1100
  %v1108 = vmul.f32 %v1107, %v1105
  %v1109 = vxor.u32 %v1108, 2147483648
  %v1110 = vsel %vm1027, %v1109, %v1108
  %v1111 = vsub.s32 4, %v1087
  %v1112 = vsel %vm1027, %v1111, %v1087
  %v1113 = vsel %vm1026, %v483, %v1110
  %v1114 = vsel %vm1026, 0, %v1112
  %v1115 = vcosq.f32.pop %v1113
  %v1116 = vsinq.f32.pop %v1113
  %vm1117 = vweird.f32 %v483
  %v1118 = vand.u32 %v1114, 3
  %vm1119 = vcmp.lt.s32.totalorder %v1118, 2
  %vm1120 = vcmp.eq.s32.totalorder %v1118, 0
  %v1121 = vxor.u32 %v1116, 2147483648
  %v1122 = vsel %vm1120, %v1115, %v1121
  %vm1123 = vcmp.eq.s32.totalorder %v1118, 2
  %v1124 = vxor.u32 %v1115, 2147483648
  %v1125 = vsel %vm1123, %v1124, %v1116
  %v1126 = vsel %vm1119, %v1122, %v1125
  %v1127 = vsel %vm1117, nan, %v1126
  %v1128 = vand.u32 2147483647, %v484
  %vm1129 = vcmp.le.f32.partialorder %v1128, 0.7853982
  %vm1130 = vcmp.lt.s32.totalorder %v484, 0
  %v1131 = vand.u32 %v484, 2139095040
  %v1132 = vshrl.u32 %v1131, 23
  %v1133 = vsub.s32 %v1132, 127
  %v1134 = vand.u32 2147483647, %v484
  %v1135 = vand.u32 %v1134, 8388607
  %v1136 = vor.u32 %v1135, 8388608
  %v1137 = vsub.s32 0, %v1136
  %v1138 = vadd.s32 %v1133, 1
  %vm1139 = vcmp.gt.s32.totalorder %v1138, 0
  %v1140 = vsel %vm1139, %v1138, 0
  %v1141 = vshrl.u32 %v1140, 5
  %v1142 = vand.u32 %v1140, 31
  %v1143 = vsub.s32 32, %v1142
  %v1144 = vshrl.u32 683565275, %v1143
  %v1145 = vshll.u32 683565275, %v1142
  %v1146 = vshrl.u32 2475754826, %v1143
  %v1147 = vor.u32 %v1145, %v1146
  %v1148 = vshll.u32 2475754826, %v1142
  %v1149 = vshrl.u32 2131351028, %v1143
  %v1150 = vor.u32 %v1148, %v1149
  %v1151 = vshll.u32 2131351028, %v1142
  %v1152 = vshrl.u32 2102212464, %v1143
  %v1153 = vor.u32 %v1151, %v1152
  %v1154 = vshll.u32 2102212464, %v1142
  %v1155 = vshrl.u32 920167782, %v1143
  %v1156 = vor.u32 %v1154, %v1155
  %v1157 = vshll.u32 920167782, %v1142
  %v1158 = vshrl.u32 1326507024, %v1143
  %v1159 = vor.u32 %v1157, %v1158
  %vm1160 = vcmp.lt.s32.totalorder %v1141, 1
  %vm1161 = vcmp.lt.s32.totalorder %v1141, 2
  %vm1162 = vcmp.lt.s32.totalorder %v1141, 3
  %vm1163 = vcmp.lt.s32.totalorder %v1141, 4
  %v1164 = vsel %vm1160, %v1144, %v1147
  %v1165 = vsel %vm1163, %v1153, 2102212464
  %v1166 = vsel %vm1162, %v1150, %v1165
  %v1167 = vsel %vm1161, %v1164, %v1166
  %v1168 = vsel %vm1160, %v1147, %v1150
  %v1169 = vsel %vm1163, %v1156, 920167782
  %v1170 = vsel %vm1162, %v1153, %v1169
  %v1171 = vsel %vm1161, %v1168, %v1170
  %v1172 = vsel %vm1160, %v1150, %v1153
  %v1173 = vsel %vm1163, %v1159, 1326507024
  %v1174 = vsel %vm1162, %v1156, %v1173
  %v1175 = vsel %vm1161, %v1172, %v1174
  %v1176 = vshll.u32 %v1136, 8
  %v1177 = vmul.u32.u64.compose %v1176, %v1175
  %v1178 = vextract.low.u32 %v1177
  %v1179 = vextract.high.u32 %v1177
  %v1180 = vmul.u32.u64.compose %v1176, %v1171
  %v1181 = vextract.low.u32 %v1180
  %v1182 = vextract.high.u32 %v1180
  %v1183 = vmul.u32 %v1176, %v1167
  %v1184 = vadd.s32 %v1179, %v1181
  %vm1185 = vc.u32 %v1179, %v1181
  %v1186 = vadd.s32 %v1182, 1
  %v1187 = vsel %vm1185, %v1186, %v1182
  %v1188 = vadd.s32 %v1183, %v1187
  %v1189 = vadd.s32 %v1188, 536870912
  %v1190 = vshrl.u32 %v1189, 30
  %v1191 = vshll.u32 %v1190, 30
  %v1192 = vsub.s32 %v1188, %v1191
  %vm1193 = vcmp.lt.s32.totalorder %v1192, 0
  %v1194 = vsub.s32 0, %v1192
  %v1195 = vsel %vm1193, %v1194, %v1192
  %v1196 = vclz %v1195
  %v1197 = vsub.s32 %v1196, 2
  %vm1198 = vcmp.gt.s32.totalorder 0, %v1197
  %v1199 = vsel %vm1198, 0, %v1197
  %v1200 = vsub.s32 32, %v1199
  %v1201 = vshll.u32 %v1192, %v1199
  %v1202 = vshrl.u32 %v1184, %v1200
  %v1203 = vor.u32 %v1201, %v1202
  %v1204 = vsub.s32 4294967266, %v1199
  %v1205 = vadd.s32 %v1204, 127
  %v1206 = vshll.u32 %v1205, 23
  %v1207 = vor.u32 4788187, %v1206
  %v1208 = vand.u32 2147483647, %v1207
  %v1210 = vcvt.s32.f32 %v1203
  %v1211 = vmul.f32 %v1210, %v1208
  %v1212 = vxor.u32 %v1211, 2147483648
  %v1213 = vsel %vm1130, %v1212, %v1211
  %v1214 = vsub.s32 4, %v1190
  %v1215 = vsel %vm1130, %v1214, %v1190
  %v1216 = vsel %vm1129, %v484, %v1213
  %v1217 = vsel %vm1129, 0, %v1215
  %v1218 = vcosq.f32.pop %v1216
  %v1219 = vsinq.f32.pop %v1216
  %vm1220 = vweird.f32 %v484
  %v1221 = vand.u32 %v1217, 3
  %vm1222 = vcmp.lt.s32.totalorder %v1221, 2
  %vm1223 = vcmp.eq.s32.totalorder %v1221, 0
  %v1224 = vxor.u32 %v1219, 2147483648
  %v1225 = vsel %vm1223, %v1218, %v1224
  %vm1226 = vcmp.eq.s32.totalorder %v1221, 2
  %v1227 = vxor.u32 %v1218, 2147483648
  %v1228 = vsel %vm1226, %v1227, %v1219
  %v1229 = vsel %vm1222, %v1225, %v1228
  %v1230 = vsel %vm1220, nan, %v1229
  %v1231 = vand.u32 2147483647, %v485
  %vm1232 = vcmp.le.f32.partialorder %v1231, 0.7853982
  %vm1233 = vcmp.lt.s32.totalorder %v485, 0
  %v1234 = vand.u32 %v485, 2139095040
  %v1235 = vshrl.u32 %v1234, 23
  %v1236 = vsub.s32 %v1235, 127
  %v1237 = vand.u32 2147483647, %v485
  %v1238 = vand.u32 %v1237, 8388607
  %v1239 = vor.u32 %v1238, 8388608
  %v1240 = vsub.s32 0, %v1239
  %v1241 = vadd.s32 %v1236, 1
  %vm1242 = vcmp.gt.s32.totalorder %v1241, 0
  %v1243 = vsel %vm1242, %v1241, 0
  %v1244 = vshrl.u32 %v1243, 5
  %v1245 = vand.u32 %v1243, 31
  %v1246 = vsub.s32 32, %v1245
  %v1247 = vshrl.u32 683565275, %v1246
  %v1248 = vshll.u32 683565275, %v1245
  %v1249 = vshrl.u32 2475754826, %v1246
  %v1250 = vor.u32 %v1248, %v1249
  %v1251 = vshll.u32 2475754826, %v1245
  %v1252 = vshrl.u32 2131351028, %v1246
  %v1253 = vor.u32 %v1251, %v1252
  %v1254 = vshll.u32 2131351028, %v1245
  %v1255 = vshrl.u32 2102212464, %v1246
  %v1256 = vor.u32 %v1254, %v1255
  %v1257 = vshll.u32 2102212464, %v1245
  %v1258 = vshrl.u32 920167782, %v1246
  %v1259 = vor.u32 %v1257, %v1258
  %v1260 = vshll.u32 920167782, %v1245
  %v1261 = vshrl.u32 1326507024, %v1246
  %v1262 = vor.u32 %v1260, %v1261
  %vm1263 = vcmp.lt.s32.totalorder %v1244, 1
  %vm1264 = vcmp.lt.s32.totalorder %v1244, 2
  %vm1265 = vcmp.lt.s32.totalorder %v1244, 3
  %vm1266 = vcmp.lt.s32.totalorder %v1244, 4
  %v1267 = vsel %vm1263, %v1247, %v1250
  %v1268 = vsel %vm1266, %v1256, 2102212464
  %v1269 = vsel %vm1265, %v1253, %v1268
  %v1270 = vsel %vm1264, %v1267, %v1269
  %v1271 = vsel %vm1263, %v1250, %v1253
  %v1272 = vsel %vm1266, %v1259, 920167782
  %v1273 = vsel %vm1265, %v1256, %v1272
  %v1274 = vsel %vm1264, %v1271, %v1273
  %v1275 = vsel %vm1263, %v1253, %v1256
  %v1276 = vsel %vm1266, %v1262, 1326507024
  %v1277 = vsel %vm1265, %v1259, %v1276
  %v1278 = vsel %vm1264, %v1275, %v1277
  %v1279 = vshll.u32 %v1239, 8
  %v1280 = vmul.u32.u64.compose %v1279, %v1278
  %v1281 = vextract.low.u32 %v1280
  %v1282 = vextract.high.u32 %v1280
  %v1283 = vmul.u32.u64.compose %v1279, %v1274
  %v1284 = vextract.low.u32 %v1283
  %v1285 = vextract.high.u32 %v1283
  %v1286 = vmul.u32 %v1279, %v1270
  %v1287 = vadd.s32 %v1282, %v1284
  %vm1288 = vc.u32 %v1282, %v1284
  %v1289 = vadd.s32 %v1285, 1
  %v1290 = vsel %vm1288, %v1289, %v1285
  %v1291 = vadd.s32 %v1286, %v1290
  %v1292 = vadd.s32 %v1291, 536870912
  %v1293 = vshrl.u32 %v1292, 30
  %v1294 = vshll.u32 %v1293, 30
  %v1295 = vsub.s32 %v1291, %v1294
  %vm1296 = vcmp.lt.s32.totalorder %v1295, 0
  %v1297 = vsub.s32 0, %v1295
  %v1298 = vsel %vm1296, %v1297, %v1295
  %v1299 = vclz %v1298
  %v1300 = vsub.s32 %v1299, 2
  %vm1301 = vcmp.gt.s32.totalorder 0, %v1300
  %v1302 = vsel %vm1301, 0, %v1300
  %v1303 = vsub.s32 32, %v1302
  %v1304 = vshll.u32 %v1295, %v1302
  %v1305 = vshrl.u32 %v1287, %v1303
  %v1306 = vor.u32 %v1304, %v1305
  %v1307 = vsub.s32 4294967266, %v1302
  %v1308 = vadd.s32 %v1307, 127
  %v1309 = vshll.u32 %v1308, 23
  %v1310 = vor.u32 4788187, %v1309
  %v1311 = vand.u32 2147483647, %v1310
  %v1313 = vcvt.s32.f32 %v1306
  %v1314 = vmul.f32 %v1313, %v1311
  %v1315 = vxor.u32 %v1314, 2147483648
  %v1316 = vsel %vm1233, %v1315, %v1314
  %v1317 = vsub.s32 4, %v1293
  %v1318 = vsel %vm1233, %v1317, %v1293
  %v1319 = vsel %vm1232, %v485, %v1316
  %v1320 = vsel %vm1232, 0, %v1318
  %v1321 = vcosq.f32.pop %v1319
  %v1322 = vsinq.f32.pop %v1319
  %vm1323 = vweird.f32 %v485
  %v1324 = vand.u32 %v1320, 3
  %vm1325 = vcmp.lt.s32.totalorder %v1324, 2
  %vm1326 = vcmp.eq.s32.totalorder %v1324, 0
  %v1327 = vxor.u32 %v1322, 2147483648
  %v1328 = vsel %vm1326, %v1321, %v1327
  %vm1329 = vcmp.eq.s32.totalorder %v1324, 2
  %v1330 = vxor.u32 %v1321, 2147483648
  %v1331 = vsel %vm1329, %v1330, %v1322
  %v1332 = vsel %vm1325, %v1328, %v1331
  %v1333 = vsel %vm1323, nan, %v1332
  %v1334 = vand.u32 2147483647, %v486
  %vm1335 = vcmp.le.f32.partialorder %v1334, 0.7853982
  %vm1336 = vcmp.lt.s32.totalorder %v486, 0
  %v1337 = vand.u32 %v486, 2139095040
  %v1338 = vshrl.u32 %v1337, 23
  %v1339 = vsub.s32 %v1338, 127
  %v1340 = vand.u32 2147483647, %v486
  %v1341 = vand.u32 %v1340, 8388607
  %v1342 = vor.u32 %v1341, 8388608
  %v1343 = vsub.s32 0, %v1342
  %v1344 = vadd.s32 %v1339, 1
  %vm1345 = vcmp.gt.s32.totalorder %v1344, 0
  %v1346 = vsel %vm1345, %v1344, 0
  %v1347 = vshrl.u32 %v1346, 5
  %v1348 = vand.u32 %v1346, 31
  %v1349 = vsub.s32 32, %v1348
  %v1350 = vshrl.u32 683565275, %v1349
  %v1351 = vshll.u32 683565275, %v1348
  %v1352 = vshrl.u32 2475754826, %v1349
  %v1353 = vor.u32 %v1351, %v1352
  %v1354 = vshll.u32 2475754826, %v1348
  %v1355 = vshrl.u32 2131351028, %v1349
  %v1356 = vor.u32 %v1354, %v1355
  %v1357 = vshll.u32 2131351028, %v1348
  %v1358 = vshrl.u32 2102212464, %v1349
  %v1359 = vor.u32 %v1357, %v1358
  %v1360 = vshll.u32 2102212464, %v1348
  %v1361 = vshrl.u32 920167782, %v1349
  %v1362 = vor.u32 %v1360, %v1361
  %v1363 = vshll.u32 920167782, %v1348
  %v1364 = vshrl.u32 1326507024, %v1349
  %v1365 = vor.u32 %v1363, %v1364
  %vm1366 = vcmp.lt.s32.totalorder %v1347, 1
  %vm1367 = vcmp.lt.s32.totalorder %v1347, 2
  %vm1368 = vcmp.lt.s32.totalorder %v1347, 3
  %vm1369 = vcmp.lt.s32.totalorder %v1347, 4
  %v1370 = vsel %vm1366, %v1350, %v1353
  %v1371 = vsel %vm1369, %v1359, 2102212464
  %v1372 = vsel %vm1368, %v1356, %v1371
  %v1373 = vsel %vm1367, %v1370, %v1372
  %v1374 = vsel %vm1366, %v1353, %v1356
  %v1375 = vsel %vm1369, %v1362, 920167782
  %v1376 = vsel %vm1368, %v1359, %v1375
  %v1377 = vsel %vm1367, %v1374, %v1376
  %v1378 = vsel %vm1366, %v1356, %v1359
  %v1379 = vsel %vm1369, %v1365, 1326507024
  %v1380 = vsel %vm1368, %v1362, %v1379
  %v1381 = vsel %vm1367, %v1378, %v1380
  %v1382 = vshll.u32 %v1342, 8
  %v1383 = vmul.u32.u64.compose %v1382, %v1381
  %v1384 = vextract.low.u32 %v1383
  %v1385 = vextract.high.u32 %v1383
  %v1386 = vmul.u32.u64.compose %v1382, %v1377
  %v1387 = vextract.low.u32 %v1386
  %v1388 = vextract.high.u32 %v1386
  %v1389 = vmul.u32 %v1382, %v1373
  %v1390 = vadd.s32 %v1385, %v1387
  %vm1391 = vc.u32 %v1385, %v1387
  %v1392 = vadd.s32 %v1388, 1
  %v1393 = vsel %vm1391, %v1392, %v1388
  %v1394 = vadd.s32 %v1389, %v1393
  %v1395 = vadd.s32 %v1394, 536870912
  %v1396 = vshrl.u32 %v1395, 30
  %v1397 = vshll.u32 %v1396, 30
  %v1398 = vsub.s32 %v1394, %v1397
  %vm1399 = vcmp.lt.s32.totalorder %v1398, 0
  %v1400 = vsub.s32 0, %v1398
  %v1401 = vsel %vm1399, %v1400, %v1398
  %v1402 = vclz %v1401
  %v1403 = vsub.s32 %v1402, 2
  %vm1404 = vcmp.gt.s32.totalorder 0, %v1403
  %v1405 = vsel %vm1404, 0, %v1403
  %v1406 = vsub.s32 32, %v1405
  %v1407 = vshll.u32 %v1398, %v1405
  %v1408 = vshrl.u32 %v1390, %v1406
  %v1409 = vor.u32 %v1407, %v1408
  %v1410 = vsub.s32 4294967266, %v1405
  %v1411 = vadd.s32 %v1410, 127
  %v1412 = vshll.u32 %v1411, 23
  %v1413 = vor.u32 4788187, %v1412
  %v1414 = vand.u32 2147483647, %v1413
  %v1416 = vcvt.s32.f32 %v1409
  %v1417 = vmul.f32 %v1416, %v1414
  %v1418 = vxor.u32 %v1417, 2147483648
  %v1419 = vsel %vm1336, %v1418, %v1417
  %v1420 = vsub.s32 4, %v1396
  %v1421 = vsel %vm1336, %v1420, %v1396
  %v1422 = vsel %vm1335, %v486, %v1419
  %v1423 = vsel %vm1335, 0, %v1421
  %v1424 = vcosq.f32.pop %v1422
  %v1425 = vsinq.f32.pop %v1422
  %vm1426 = vweird.f32 %v486
  %v1427 = vand.u32 %v1423, 3
  %vm1428 = vcmp.lt.s32.totalorder %v1427, 2
  %vm1429 = vcmp.eq.s32.totalorder %v1427, 0
  %v1430 = vxor.u32 %v1425, 2147483648
  %v1431 = vsel %vm1429, %v1424, %v1430
  %vm1432 = vcmp.eq.s32.totalorder %v1427, 2
  %v1433 = vxor.u32 %v1424, 2147483648
  %v1434 = vsel %vm1432, %v1433, %v1425
  %v1435 = vsel %vm1428, %v1431, %v1434
  %v1436 = vsel %vm1426, nan, %v1435
  %v1437 = vand.u32 2147483647, %v487
  %vm1438 = vcmp.le.f32.partialorder %v1437, 0.7853982
  %vm1439 = vcmp.lt.s32.totalorder %v487, 0
  %v1440 = vand.u32 %v487, 2139095040
  %v1441 = vshrl.u32 %v1440, 23
  %v1442 = vsub.s32 %v1441, 127
  %v1443 = vand.u32 2147483647, %v487
  %v1444 = vand.u32 %v1443, 8388607
  %v1445 = vor.u32 %v1444, 8388608
  %v1446 = vsub.s32 0, %v1445
  %v1447 = vadd.s32 %v1442, 1
  %vm1448 = vcmp.gt.s32.totalorder %v1447, 0
  %v1449 = vsel %vm1448, %v1447, 0
  %v1450 = vshrl.u32 %v1449, 5
  %v1451 = vand.u32 %v1449, 31
  %v1452 = vsub.s32 32, %v1451
  %v1453 = vshrl.u32 683565275, %v1452
  %v1454 = vshll.u32 683565275, %v1451
  %v1455 = vshrl.u32 2475754826, %v1452
  %v1456 = vor.u32 %v1454, %v1455
  %v1457 = vshll.u32 2475754826, %v1451
  %v1458 = vshrl.u32 2131351028, %v1452
  %v1459 = vor.u32 %v1457, %v1458
  %v1460 = vshll.u32 2131351028, %v1451
  %v1461 = vshrl.u32 2102212464, %v1452
  %v1462 = vor.u32 %v1460, %v1461
  %v1463 = vshll.u32 2102212464, %v1451
  %v1464 = vshrl.u32 920167782, %v1452
  %v1465 = vor.u32 %v1463, %v1464
  %v1466 = vshll.u32 920167782, %v1451
  %v1467 = vshrl.u32 1326507024, %v1452
  %v1468 = vor.u32 %v1466, %v1467
  %vm1469 = vcmp.lt.s32.totalorder %v1450, 1
  %vm1470 = vcmp.lt.s32.totalorder %v1450, 2
  %vm1471 = vcmp.lt.s32.totalorder %v1450, 3
  %vm1472 = vcmp.lt.s32.totalorder %v1450, 4
  %v1473 = vsel %vm1469, %v1453, %v1456
  %v1474 = vsel %vm1472, %v1462, 2102212464
  %v1475 = vsel %vm1471, %v1459, %v1474
  %v1476 = vsel %vm1470, %v1473, %v1475
  %v1477 = vsel %vm1469, %v1456, %v1459
  %v1478 = vsel %vm1472, %v1465, 920167782
  %v1479 = vsel %vm1471, %v1462, %v1478
  %v1480 = vsel %vm1470, %v1477, %v1479
  %v1481 = vsel %vm1469, %v1459, %v1462
  %v1482 = vsel %vm1472, %v1468, 1326507024
  %v1483 = vsel %vm1471, %v1465, %v1482
  %v1484 = vsel %vm1470, %v1481, %v1483
  %v1485 = vshll.u32 %v1445, 8
  %v1486 = vmul.u32.u64.compose %v1485, %v1484
  %v1487 = vextract.low.u32 %v1486
  %v1488 = vextract.high.u32 %v1486
  %v1489 = vmul.u32.u64.compose %v1485, %v1480
  %v1490 = vextract.low.u32 %v1489
  %v1491 = vextract.high.u32 %v1489
  %v1492 = vmul.u32 %v1485, %v1476
  %v1493 = vadd.s32 %v1488, %v1490
  %vm1494 = vc.u32 %v1488, %v1490
  %v1495 = vadd.s32 %v1491, 1
  %v1496 = vsel %vm1494, %v1495, %v1491
  %v1497 = vadd.s32 %v1492, %v1496
  %v1498 = vadd.s32 %v1497, 536870912
  %v1499 = vshrl.u32 %v1498, 30
  %v1500 = vshll.u32 %v1499, 30
  %v1501 = vsub.s32 %v1497, %v1500
  %vm1502 = vcmp.lt.s32.totalorder %v1501, 0
  %v1503 = vsub.s32 0, %v1501
  %v1504 = vsel %vm1502, %v1503, %v1501
  %v1505 = vclz %v1504
  %v1506 = vsub.s32 %v1505, 2
  %vm1507 = vcmp.gt.s32.totalorder 0, %v1506
  %v1508 = vsel %vm1507, 0, %v1506
  %v1509 = vsub.s32 32, %v1508
  %v1510 = vshll.u32 %v1501, %v1508
  %v1511 = vshrl.u32 %v1493, %v1509
  %v1512 = vor.u32 %v1510, %v1511
  %v1513 = vsub.s32 4294967266, %v1508
  %v1514 = vadd.s32 %v1513, 127
  %v1515 = vshll.u32 %v1514, 23
  %v1516 = vor.u32 4788187, %v1515
  %v1517 = vand.u32 2147483647, %v1516
  %v1519 = vcvt.s32.f32 %v1512
  %v1520 = vmul.f32 %v1519, %v1517
  %v1521 = vxor.u32 %v1520, 2147483648
  %v1522 = vsel %vm1439, %v1521, %v1520
  %v1523 = vsub.s32 4, %v1499
  %v1524 = vsel %vm1439, %v1523, %v1499
  %v1525 = vsel %vm1438, %v487, %v1522
  %v1526 = vsel %vm1438, 0, %v1524
  %v1527 = vcosq.f32.pop %v1525
  %v1528 = vsinq.f32.pop %v1525
  %vm1529 = vweird.f32 %v487
  %v1530 = vand.u32 %v1526, 3
  %vm1531 = vcmp.lt.s32.totalorder %v1530, 2
  %vm1532 = vcmp.eq.s32.totalorder %v1530, 0
  %v1533 = vxor.u32 %v1528, 2147483648
  %v1534 = vsel %vm1532, %v1527, %v1533
  %vm1535 = vcmp.eq.s32.totalorder %v1530, 2
  %v1536 = vxor.u32 %v1527, 2147483648
  %v1537 = vsel %vm1535, %v1536, %v1528
  %v1538 = vsel %vm1531, %v1534, %v1537
  %v1539 = vsel %vm1529, nan, %v1538
  %v1540 = vand.u32 2147483647, %v488
  %vm1541 = vcmp.le.f32.partialorder %v1540, 0.7853982
  %vm1542 = vcmp.lt.s32.totalorder %v488, 0
  %v1543 = vand.u32 %v488, 2139095040
  %v1544 = vshrl.u32 %v1543, 23
  %v1545 = vsub.s32 %v1544, 127
  %v1546 = vand.u32 2147483647, %v488
  %v1547 = vand.u32 %v1546, 8388607
  %v1548 = vor.u32 %v1547, 8388608
  %v1549 = vsub.s32 0, %v1548
  %v1550 = vadd.s32 %v1545, 1
  %vm1551 = vcmp.gt.s32.totalorder %v1550, 0
  %v1552 = vsel %vm1551, %v1550, 0
  %v1553 = vshrl.u32 %v1552, 5
  %v1554 = vand.u32 %v1552, 31
  %v1555 = vsub.s32 32, %v1554
  %v1556 = vshrl.u32 683565275, %v1555
  %v1557 = vshll.u32 683565275, %v1554
  %v1558 = vshrl.u32 2475754826, %v1555
  %v1559 = vor.u32 %v1557, %v1558
  %v1560 = vshll.u32 2475754826, %v1554
  %v1561 = vshrl.u32 2131351028, %v1555
  %v1562 = vor.u32 %v1560, %v1561
  %v1563 = vshll.u32 2131351028, %v1554
  %v1564 = vshrl.u32 2102212464, %v1555
  %v1565 = vor.u32 %v1563, %v1564
  %v1566 = vshll.u32 2102212464, %v1554
  %v1567 = vshrl.u32 920167782, %v1555
  %v1568 = vor.u32 %v1566, %v1567
  %v1569 = vshll.u32 920167782, %v1554
  %v1570 = vshrl.u32 1326507024, %v1555
  %v1571 = vor.u32 %v1569, %v1570
  %vm1572 = vcmp.lt.s32.totalorder %v1553, 1
  %vm1573 = vcmp.lt.s32.totalorder %v1553, 2
  %vm1574 = vcmp.lt.s32.totalorder %v1553, 3
  %vm1575 = vcmp.lt.s32.totalorder %v1553, 4
  %v1576 = vsel %vm1572, %v1556, %v1559
  %v1577 = vsel %vm1575, %v1565, 2102212464
  %v1578 = vsel %vm1574, %v1562, %v1577
  %v1579 = vsel %vm1573, %v1576, %v1578
  %v1580 = vsel %vm1572, %v1559, %v1562
  %v1581 = vsel %vm1575, %v1568, 920167782
  %v1582 = vsel %vm1574, %v1565, %v1581
  %v1583 = vsel %vm1573, %v1580, %v1582
  %v1584 = vsel %vm1572, %v1562, %v1565
  %v1585 = vsel %vm1575, %v1571, 1326507024
  %v1586 = vsel %vm1574, %v1568, %v1585
  %v1587 = vsel %vm1573, %v1584, %v1586
  %v1588 = vshll.u32 %v1548, 8
  %v1589 = vmul.u32.u64.compose %v1588, %v1587
  %v1590 = vextract.low.u32 %v1589
  %v1591 = vextract.high.u32 %v1589
  %v1592 = vmul.u32.u64.compose %v1588, %v1583
  %v1593 = vextract.low.u32 %v1592
  %v1594 = vextract.high.u32 %v1592
  %v1595 = vmul.u32 %v1588, %v1579
  %v1596 = vadd.s32 %v1591, %v1593
  %vm1597 = vc.u32 %v1591, %v1593
  %v1598 = vadd.s32 %v1594, 1
  %v1599 = vsel %vm1597, %v1598, %v1594
  %v1600 = vadd.s32 %v1595, %v1599
  %v1601 = vadd.s32 %v1600, 536870912
  %v1602 = vshrl.u32 %v1601, 30
  %v1603 = vshll.u32 %v1602, 30
  %v1604 = vsub.s32 %v1600, %v1603
  %vm1605 = vcmp.lt.s32.totalorder %v1604, 0
  %v1606 = vsub.s32 0, %v1604
  %v1607 = vsel %vm1605, %v1606, %v1604
  %v1608 = vclz %v1607
  %v1609 = vsub.s32 %v1608, 2
  %vm1610 = vcmp.gt.s32.totalorder 0, %v1609
  %v1611 = vsel %vm1610, 0, %v1609
  %v1612 = vsub.s32 32, %v1611
  %v1613 = vshll.u32 %v1604, %v1611
  %v1614 = vshrl.u32 %v1596, %v1612
  %v1615 = vor.u32 %v1613, %v1614
  %v1616 = vsub.s32 4294967266, %v1611
  %v1617 = vadd.s32 %v1616, 127
  %v1618 = vshll.u32 %v1617, 23
  %v1619 = vor.u32 4788187, %v1618
  %v1620 = vand.u32 2147483647, %v1619
  %v1622 = vcvt.s32.f32 %v1615
  %v1623 = vmul.f32 %v1622, %v1620
  %v1624 = vxor.u32 %v1623, 2147483648
  %v1625 = vsel %vm1542, %v1624, %v1623
  %v1626 = vsub.s32 4, %v1602
  %v1627 = vsel %vm1542, %v1626, %v1602
  %v1628 = vsel %vm1541, %v488, %v1625
  %v1629 = vsel %vm1541, 0, %v1627
  %v1630 = vcosq.f32.pop %v1628
  %v1631 = vsinq.f32.pop %v1628
  %vm1632 = vweird.f32 %v488
  %v1633 = vand.u32 %v1629, 3
  %vm1634 = vcmp.lt.s32.totalorder %v1633, 2
  %vm1635 = vcmp.eq.s32.totalorder %v1633, 0
  %v1636 = vxor.u32 %v1631, 2147483648
  %v1637 = vsel %vm1635, %v1630, %v1636
  %vm1638 = vcmp.eq.s32.totalorder %v1633, 2
  %v1639 = vxor.u32 %v1630, 2147483648
  %v1640 = vsel %vm1638, %v1639, %v1631
  %v1641 = vsel %vm1634, %v1637, %v1640
  %v1642 = vsel %vm1632, nan, %v1641
  %v1643 = vand.u32 2147483647, %v489
  %vm1644 = vcmp.le.f32.partialorder %v1643, 0.7853982
  %vm1645 = vcmp.lt.s32.totalorder %v489, 0
  %v1646 = vand.u32 %v489, 2139095040
  %v1647 = vshrl.u32 %v1646, 23
  %v1648 = vsub.s32 %v1647, 127
  %v1649 = vand.u32 2147483647, %v489
  %v1650 = vand.u32 %v1649, 8388607
  %v1651 = vor.u32 %v1650, 8388608
  %v1652 = vsub.s32 0, %v1651
  %v1653 = vadd.s32 %v1648, 1
  %vm1654 = vcmp.gt.s32.totalorder %v1653, 0
  %v1655 = vsel %vm1654, %v1653, 0
  %v1656 = vshrl.u32 %v1655, 5
  %v1657 = vand.u32 %v1655, 31
  %v1658 = vsub.s32 32, %v1657
  %v1659 = vshrl.u32 683565275, %v1658
  %v1660 = vshll.u32 683565275, %v1657
  %v1661 = vshrl.u32 2475754826, %v1658
  %v1662 = vor.u32 %v1660, %v1661
  %v1663 = vshll.u32 2475754826, %v1657
  %v1664 = vshrl.u32 2131351028, %v1658
  %v1665 = vor.u32 %v1663, %v1664
  %v1666 = vshll.u32 2131351028, %v1657
  %v1667 = vshrl.u32 2102212464, %v1658
  %v1668 = vor.u32 %v1666, %v1667
  %v1669 = vshll.u32 2102212464, %v1657
  %v1670 = vshrl.u32 920167782, %v1658
  %v1671 = vor.u32 %v1669, %v1670
  %v1672 = vshll.u32 920167782, %v1657
  %v1673 = vshrl.u32 1326507024, %v1658
  %v1674 = vor.u32 %v1672, %v1673
  %vm1675 = vcmp.lt.s32.totalorder %v1656, 1
  %vm1676 = vcmp.lt.s32.totalorder %v1656, 2
  %vm1677 = vcmp.lt.s32.totalorder %v1656, 3
  %vm1678 = vcmp.lt.s32.totalorder %v1656, 4
  %v1679 = vsel %vm1675, %v1659, %v1662
  %v1680 = vsel %vm1678, %v1668, 2102212464
  %v1681 = vsel %vm1677, %v1665, %v1680
  %v1682 = vsel %vm1676, %v1679, %v1681
  %v1683 = vsel %vm1675, %v1662, %v1665
  %v1684 = vsel %vm1678, %v1671, 920167782
  %v1685 = vsel %vm1677, %v1668, %v1684
  %v1686 = vsel %vm1676, %v1683, %v1685
  %v1687 = vsel %vm1675, %v1665, %v1668
  %v1688 = vsel %vm1678, %v1674, 1326507024
  %v1689 = vsel %vm1677, %v1671, %v1688
  %v1690 = vsel %vm1676, %v1687, %v1689
  %v1691 = vshll.u32 %v1651, 8
  %v1692 = vmul.u32.u64.compose %v1691, %v1690
  %v1693 = vextract.low.u32 %v1692
  %v1694 = vextract.high.u32 %v1692
  %v1695 = vmul.u32.u64.compose %v1691, %v1686
  %v1696 = vextract.low.u32 %v1695
  %v1697 = vextract.high.u32 %v1695
  %v1698 = vmul.u32 %v1691, %v1682
  %v1699 = vadd.s32 %v1694, %v1696
  %vm1700 = vc.u32 %v1694, %v1696
  %v1701 = vadd.s32 %v1697, 1
  %v1702 = vsel %vm1700, %v1701, %v1697
  %v1703 = vadd.s32 %v1698, %v1702
  %v1704 = vadd.s32 %v1703, 536870912
  %v1705 = vshrl.u32 %v1704, 30
  %v1706 = vshll.u32 %v1705, 30
  %v1707 = vsub.s32 %v1703, %v1706
  %vm1708 = vcmp.lt.s32.totalorder %v1707, 0
  %v1709 = vsub.s32 0, %v1707
  %v1710 = vsel %vm1708, %v1709, %v1707
  %v1711 = vclz %v1710
  %v1712 = vsub.s32 %v1711, 2
  %vm1713 = vcmp.gt.s32.totalorder 0, %v1712
  %v1714 = vsel %vm1713, 0, %v1712
  %v1715 = vsub.s32 32, %v1714
  %v1716 = vshll.u32 %v1707, %v1714
  %v1717 = vshrl.u32 %v1699, %v1715
  %v1718 = vor.u32 %v1716, %v1717
  %v1719 = vsub.s32 4294967266, %v1714
  %v1720 = vadd.s32 %v1719, 127
  %v1721 = vshll.u32 %v1720, 23
  %v1722 = vor.u32 4788187, %v1721
  %v1723 = vand.u32 2147483647, %v1722
  %v1725 = vcvt.s32.f32 %v1718
  %v1726 = vmul.f32 %v1725, %v1723
  %v1727 = vxor.u32 %v1726, 2147483648
  %v1728 = vsel %vm1645, %v1727, %v1726
  %v1729 = vsub.s32 4, %v1705
  %v1730 = vsel %vm1645, %v1729, %v1705
  %v1731 = vsel %vm1644, %v489, %v1728
  %v1732 = vsel %vm1644, 0, %v1730
  %v1733 = vcosq.f32.pop %v1731
  %v1734 = vsinq.f32.pop %v1731
  %vm1735 = vweird.f32 %v489
  %v1736 = vand.u32 %v1732, 3
  %vm1737 = vcmp.lt.s32.totalorder %v1736, 2
  %vm1738 = vcmp.eq.s32.totalorder %v1736, 0
  %v1739 = vxor.u32 %v1734, 2147483648
  %v1740 = vsel %vm1738, %v1733, %v1739
  %vm1741 = vcmp.eq.s32.totalorder %v1736, 2
  %v1742 = vxor.u32 %v1733, 2147483648
  %v1743 = vsel %vm1741, %v1742, %v1734
  %v1744 = vsel %vm1737, %v1740, %v1743
  %v1745 = vsel %vm1735, nan, %v1744
  %v1746 = vand.u32 2147483647, %v490
  %vm1747 = vcmp.le.f32.partialorder %v1746, 0.7853982
  %vm1748 = vcmp.lt.s32.totalorder %v490, 0
  %v1749 = vand.u32 %v490, 2139095040
  %v1750 = vshrl.u32 %v1749, 23
  %v1751 = vsub.s32 %v1750, 127
  %v1752 = vand.u32 2147483647, %v490
  %v1753 = vand.u32 %v1752, 8388607
  %v1754 = vor.u32 %v1753, 8388608
  %v1755 = vsub.s32 0, %v1754
  %v1756 = vadd.s32 %v1751, 1
  %vm1757 = vcmp.gt.s32.totalorder %v1756, 0
  %v1758 = vsel %vm1757, %v1756, 0
  %v1759 = vshrl.u32 %v1758, 5
  %v1760 = vand.u32 %v1758, 31
  %v1761 = vsub.s32 32, %v1760
  %v1762 = vshrl.u32 683565275, %v1761
  %v1763 = vshll.u32 683565275, %v1760
  %v1764 = vshrl.u32 2475754826, %v1761
  %v1765 = vor.u32 %v1763, %v1764
  %v1766 = vshll.u32 2475754826, %v1760
  %v1767 = vshrl.u32 2131351028, %v1761
  %v1768 = vor.u32 %v1766, %v1767
  %v1769 = vshll.u32 2131351028, %v1760
  %v1770 = vshrl.u32 2102212464, %v1761
  %v1771 = vor.u32 %v1769, %v1770
  %v1772 = vshll.u32 2102212464, %v1760
  %v1773 = vshrl.u32 920167782, %v1761
  %v1774 = vor.u32 %v1772, %v1773
  %v1775 = vshll.u32 920167782, %v1760
  %v1776 = vshrl.u32 1326507024, %v1761
  %v1777 = vor.u32 %v1775, %v1776
  %vm1778 = vcmp.lt.s32.totalorder %v1759, 1
  %vm1779 = vcmp.lt.s32.totalorder %v1759, 2
  %vm1780 = vcmp.lt.s32.totalorder %v1759, 3
  %vm1781 = vcmp.lt.s32.totalorder %v1759, 4
  %v1782 = vsel %vm1778, %v1762, %v1765
  %v1783 = vsel %vm1781, %v1771, 2102212464
  %v1784 = vsel %vm1780, %v1768, %v1783
  %v1785 = vsel %vm1779, %v1782, %v1784
  %v1786 = vsel %vm1778, %v1765, %v1768
  %v1787 = vsel %vm1781, %v1774, 920167782
  %v1788 = vsel %vm1780, %v1771, %v1787
  %v1789 = vsel %vm1779, %v1786, %v1788
  %v1790 = vsel %vm1778, %v1768, %v1771
  %v1791 = vsel %vm1781, %v1777, 1326507024
  %v1792 = vsel %vm1780, %v1774, %v1791
  %v1793 = vsel %vm1779, %v1790, %v1792
  %v1794 = vshll.u32 %v1754, 8
  %v1795 = vmul.u32.u64.compose %v1794, %v1793
  %v1796 = vextract.low.u32 %v1795
  %v1797 = vextract.high.u32 %v1795
  %v1798 = vmul.u32.u64.compose %v1794, %v1789
  %v1799 = vextract.low.u32 %v1798
  %v1800 = vextract.high.u32 %v1798
  %v1801 = vmul.u32 %v1794, %v1785
  %v1802 = vadd.s32 %v1797, %v1799
  %vm1803 = vc.u32 %v1797, %v1799
  %v1804 = vadd.s32 %v1800, 1
  %v1805 = vsel %vm1803, %v1804, %v1800
  %v1806 = vadd.s32 %v1801, %v1805
  %v1807 = vadd.s32 %v1806, 536870912
  %v1808 = vshrl.u32 %v1807, 30
  %v1809 = vshll.u32 %v1808, 30
  %v1810 = vsub.s32 %v1806, %v1809
  %vm1811 = vcmp.lt.s32.totalorder %v1810, 0
  %v1812 = vsub.s32 0, %v1810
  %v1813 = vsel %vm1811, %v1812, %v1810
  %v1814 = vclz %v1813
  %v1815 = vsub.s32 %v1814, 2
  %vm1816 = vcmp.gt.s32.totalorder 0, %v1815
  %v1817 = vsel %vm1816, 0, %v1815
  %v1818 = vsub.s32 32, %v1817
  %v1819 = vshll.u32 %v1810, %v1817
  %v1820 = vshrl.u32 %v1802, %v1818
  %v1821 = vor.u32 %v1819, %v1820
  %v1822 = vsub.s32 4294967266, %v1817
  %v1823 = vadd.s32 %v1822, 127
  %v1824 = vshll.u32 %v1823, 23
  %v1825 = vor.u32 4788187, %v1824
  %v1826 = vand.u32 2147483647, %v1825
  %v1828 = vcvt.s32.f32 %v1821
  %v1829 = vmul.f32 %v1828, %v1826
  %v1830 = vxor.u32 %v1829, 2147483648
  %v1831 = vsel %vm1748, %v1830, %v1829
  %v1832 = vsub.s32 4, %v1808
  %v1833 = vsel %vm1748, %v1832, %v1808
  %v1834 = vsel %vm1747, %v490, %v1831
  %v1835 = vsel %vm1747, 0, %v1833
  %v1836 = vcosq.f32.pop %v1834
  %v1837 = vsinq.f32.pop %v1834
  %vm1838 = vweird.f32 %v490
  %v1839 = vand.u32 %v1835, 3
  %vm1840 = vcmp.lt.s32.totalorder %v1839, 2
  %vm1841 = vcmp.eq.s32.totalorder %v1839, 0
  %v1842 = vxor.u32 %v1837, 2147483648
  %v1843 = vsel %vm1841, %v1836, %v1842
  %vm1844 = vcmp.eq.s32.totalorder %v1839, 2
  %v1845 = vxor.u32 %v1836, 2147483648
  %v1846 = vsel %vm1844, %v1845, %v1837
  %v1847 = vsel %vm1840, %v1843, %v1846
  %v1848 = vsel %vm1838, nan, %v1847
  %v1849 = vand.u32 2147483647, %v491
  %vm1850 = vcmp.le.f32.partialorder %v1849, 0.7853982
  %vm1851 = vcmp.lt.s32.totalorder %v491, 0
  %v1852 = vand.u32 %v491, 2139095040
  %v1853 = vshrl.u32 %v1852, 23
  %v1854 = vsub.s32 %v1853, 127
  %v1855 = vand.u32 2147483647, %v491
  %v1856 = vand.u32 %v1855, 8388607
  %v1857 = vor.u32 %v1856, 8388608
  %v1858 = vsub.s32 0, %v1857
  %v1859 = vadd.s32 %v1854, 1
  %vm1860 = vcmp.gt.s32.totalorder %v1859, 0
  %v1861 = vsel %vm1860, %v1859, 0
  %v1862 = vshrl.u32 %v1861, 5
  %v1863 = vand.u32 %v1861, 31
  %v1864 = vsub.s32 32, %v1863
  %v1865 = vshrl.u32 683565275, %v1864
  %v1866 = vshll.u32 683565275, %v1863
  %v1867 = vshrl.u32 2475754826, %v1864
  %v1868 = vor.u32 %v1866, %v1867
  %v1869 = vshll.u32 2475754826, %v1863
  %v1870 = vshrl.u32 2131351028, %v1864
  %v1871 = vor.u32 %v1869, %v1870
  %v1872 = vshll.u32 2131351028, %v1863
  %v1873 = vshrl.u32 2102212464, %v1864
  %v1874 = vor.u32 %v1872, %v1873
  %v1875 = vshll.u32 2102212464, %v1863
  %v1876 = vshrl.u32 920167782, %v1864
  %v1877 = vor.u32 %v1875, %v1876
  %v1878 = vshll.u32 920167782, %v1863
  %v1879 = vshrl.u32 1326507024, %v1864
  %v1880 = vor.u32 %v1878, %v1879
  %vm1881 = vcmp.lt.s32.totalorder %v1862, 1
  %vm1882 = vcmp.lt.s32.totalorder %v1862, 2
  %vm1883 = vcmp.lt.s32.totalorder %v1862, 3
  %vm1884 = vcmp.lt.s32.totalorder %v1862, 4
  %v1885 = vsel %vm1881, %v1865, %v1868
  %v1886 = vsel %vm1884, %v1874, 2102212464
  %v1887 = vsel %vm1883, %v1871, %v1886
  %v1888 = vsel %vm1882, %v1885, %v1887
  %v1889 = vsel %vm1881, %v1868, %v1871
  %v1890 = vsel %vm1884, %v1877, 920167782
  %v1891 = vsel %vm1883, %v1874, %v1890
  %v1892 = vsel %vm1882, %v1889, %v1891
  %v1893 = vsel %vm1881, %v1871, %v1874
  %v1894 = vsel %vm1884, %v1880, 1326507024
  %v1895 = vsel %vm1883, %v1877, %v1894
  %v1896 = vsel %vm1882, %v1893, %v1895
  %v1897 = vshll.u32 %v1857, 8
  %v1898 = vmul.u32.u64.compose %v1897, %v1896
  %v1899 = vextract.low.u32 %v1898
  %v1900 = vextract.high.u32 %v1898
  %v1901 = vmul.u32.u64.compose %v1897, %v1892
  %v1902 = vextract.low.u32 %v1901
  %v1903 = vextract.high.u32 %v1901
  %v1904 = vmul.u32 %v1897, %v1888
  %v1905 = vadd.s32 %v1900, %v1902
  %vm1906 = vc.u32 %v1900, %v1902
  %v1907 = vadd.s32 %v1903, 1
  %v1908 = vsel %vm1906, %v1907, %v1903
  %v1909 = vadd.s32 %v1904, %v1908
  %v1910 = vadd.s32 %v1909, 536870912
  %v1911 = vshrl.u32 %v1910, 30
  %v1912 = vshll.u32 %v1911, 30
  %v1913 = vsub.s32 %v1909, %v1912
  %vm1914 = vcmp.lt.s32.totalorder %v1913, 0
  %v1915 = vsub.s32 0, %v1913
  %v1916 = vsel %vm1914, %v1915, %v1913
  %v1917 = vclz %v1916
  %v1918 = vsub.s32 %v1917, 2
  %vm1919 = vcmp.gt.s32.totalorder 0, %v1918
  %v1920 = vsel %vm1919, 0, %v1918
  %v1921 = vsub.s32 32, %v1920
  %v1922 = vshll.u32 %v1913, %v1920
  %v1923 = vshrl.u32 %v1905, %v1921
  %v1924 = vor.u32 %v1922, %v1923
  %v1925 = vsub.s32 4294967266, %v1920
  %v1926 = vadd.s32 %v1925, 127
  %v1927 = vshll.u32 %v1926, 23
  %v1928 = vor.u32 4788187, %v1927
  %v1929 = vand.u32 2147483647, %v1928
  %v1931 = vcvt.s32.f32 %v1924
  %v1932 = vmul.f32 %v1931, %v1929
  %v1933 = vxor.u32 %v1932, 2147483648
  %v1934 = vsel %vm1851, %v1933, %v1932
  %v1935 = vsub.s32 4, %v1911
  %v1936 = vsel %vm1851, %v1935, %v1911
  %v1937 = vsel %vm1850, %v491, %v1934
  %v1938 = vsel %vm1850, 0, %v1936
  %v1939 = vcosq.f32.pop %v1937
  %v1940 = vsinq.f32.pop %v1937
  %vm1941 = vweird.f32 %v491
  %v1942 = vand.u32 %v1938, 3
  %vm1943 = vcmp.lt.s32.totalorder %v1942, 2
  %vm1944 = vcmp.eq.s32.totalorder %v1942, 0
  %v1945 = vxor.u32 %v1940, 2147483648
  %v1946 = vsel %vm1944, %v1939, %v1945
  %vm1947 = vcmp.eq.s32.totalorder %v1942, 2
  %v1948 = vxor.u32 %v1939, 2147483648
  %v1949 = vsel %vm1947, %v1948, %v1940
  %v1950 = vsel %vm1943, %v1946, %v1949
  %v1951 = vsel %vm1941, nan, %v1950
  %v1952 = vand.u32 2147483647, %v492
  %vm1953 = vcmp.le.f32.partialorder %v1952, 0.7853982
  %vm1954 = vcmp.lt.s32.totalorder %v492, 0
  %v1955 = vand.u32 %v492, 2139095040
  %v1956 = vshrl.u32 %v1955, 23
  %v1957 = vsub.s32 %v1956, 127
  %v1958 = vand.u32 2147483647, %v492
  %v1959 = vand.u32 %v1958, 8388607
  %v1960 = vor.u32 %v1959, 8388608
  %v1961 = vsub.s32 0, %v1960
  %v1962 = vadd.s32 %v1957, 1
  %vm1963 = vcmp.gt.s32.totalorder %v1962, 0
  %v1964 = vsel %vm1963, %v1962, 0
  %v1965 = vshrl.u32 %v1964, 5
  %v1966 = vand.u32 %v1964, 31
  %v1967 = vsub.s32 32, %v1966
  %v1968 = vshrl.u32 683565275, %v1967
  %v1969 = vshll.u32 683565275, %v1966
  %v1970 = vshrl.u32 2475754826, %v1967
  %v1971 = vor.u32 %v1969, %v1970
  %v1972 = vshll.u32 2475754826, %v1966
  %v1973 = vshrl.u32 2131351028, %v1967
  %v1974 = vor.u32 %v1972, %v1973
  %v1975 = vshll.u32 2131351028, %v1966
  %v1976 = vshrl.u32 2102212464, %v1967
  %v1977 = vor.u32 %v1975, %v1976
  %v1978 = vshll.u32 2102212464, %v1966
  %v1979 = vshrl.u32 920167782, %v1967
  %v1980 = vor.u32 %v1978, %v1979
  %v1981 = vshll.u32 920167782, %v1966
  %v1982 = vshrl.u32 1326507024, %v1967
  %v1983 = vor.u32 %v1981, %v1982
  %vm1984 = vcmp.lt.s32.totalorder %v1965, 1
  %vm1985 = vcmp.lt.s32.totalorder %v1965, 2
  %vm1986 = vcmp.lt.s32.totalorder %v1965, 3
  %vm1987 = vcmp.lt.s32.totalorder %v1965, 4
  %v1988 = vsel %vm1984, %v1968, %v1971
  %v1989 = vsel %vm1987, %v1977, 2102212464
  %v1990 = vsel %vm1986, %v1974, %v1989
  %v1991 = vsel %vm1985, %v1988, %v1990
  %v1992 = vsel %vm1984, %v1971, %v1974
  %v1993 = vsel %vm1987, %v1980, 920167782
  %v1994 = vsel %vm1986, %v1977, %v1993
  %v1995 = vsel %vm1985, %v1992, %v1994
  %v1996 = vsel %vm1984, %v1974, %v1977
  %v1997 = vsel %vm1987, %v1983, 1326507024
  %v1998 = vsel %vm1986, %v1980, %v1997
  %v1999 = vsel %vm1985, %v1996, %v1998
  %v2000 = vshll.u32 %v1960, 8
  %v2001 = vmul.u32.u64.compose %v2000, %v1999
  %v2002 = vextract.low.u32 %v2001
  %v2003 = vextract.high.u32 %v2001
  %v2004 = vmul.u32.u64.compose %v2000, %v1995
  %v2005 = vextract.low.u32 %v2004
  %v2006 = vextract.high.u32 %v2004
  %v2007 = vmul.u32 %v2000, %v1991
  %v2008 = vadd.s32 %v2003, %v2005
  %vm2009 = vc.u32 %v2003, %v2005
  %v2010 = vadd.s32 %v2006, 1
  %v2011 = vsel %vm2009, %v2010, %v2006
  %v2012 = vadd.s32 %v2007, %v2011
  %v2013 = vadd.s32 %v2012, 536870912
  %v2014 = vshrl.u32 %v2013, 30
  %v2015 = vshll.u32 %v2014, 30
  %v2016 = vsub.s32 %v2012, %v2015
  %vm2017 = vcmp.lt.s32.totalorder %v2016, 0
  %v2018 = vsub.s32 0, %v2016
  %v2019 = vsel %vm2017, %v2018, %v2016
  %v2020 = vclz %v2019
  %v2021 = vsub.s32 %v2020, 2
  %vm2022 = vcmp.gt.s32.totalorder 0, %v2021
  %v2023 = vsel %vm2022, 0, %v2021
  %v2024 = vsub.s32 32, %v2023
  %v2025 = vshll.u32 %v2016, %v2023
  %v2026 = vshrl.u32 %v2008, %v2024
  %v2027 = vor.u32 %v2025, %v2026
  %v2028 = vsub.s32 4294967266, %v2023
  %v2029 = vadd.s32 %v2028, 127
  %v2030 = vshll.u32 %v2029, 23
  %v2031 = vor.u32 4788187, %v2030
  %v2032 = vand.u32 2147483647, %v2031
  %v2034 = vcvt.s32.f32 %v2027
  %v2035 = vmul.f32 %v2034, %v2032
  %v2036 = vxor.u32 %v2035, 2147483648
  %v2037 = vsel %vm1954, %v2036, %v2035
  %v2038 = vsub.s32 4, %v2014
  %v2039 = vsel %vm1954, %v2038, %v2014
  %v2040 = vsel %vm1953, %v492, %v2037
  %v2041 = vsel %vm1953, 0, %v2039
  %v2042 = vcosq.f32.pop %v2040
  %v2043 = vsinq.f32.pop %v2040
  %vm2044 = vweird.f32 %v492
  %v2045 = vand.u32 %v2041, 3
  %vm2046 = vcmp.lt.s32.totalorder %v2045, 2
  %vm2047 = vcmp.eq.s32.totalorder %v2045, 0
  %v2048 = vxor.u32 %v2043, 2147483648
  %v2049 = vsel %vm2047, %v2042, %v2048
  %vm2050 = vcmp.eq.s32.totalorder %v2045, 2
  %v2051 = vxor.u32 %v2042, 2147483648
  %v2052 = vsel %vm2050, %v2051, %v2043
  %v2053 = vsel %vm2046, %v2049, %v2052
  %v2054 = vsel %vm2044, nan, %v2053
  %v2055 = vand.u32 2147483647, %v493
  %vm2056 = vcmp.le.f32.partialorder %v2055, 0.7853982
  %vm2057 = vcmp.lt.s32.totalorder %v493, 0
  %v2058 = vand.u32 %v493, 2139095040
  %v2059 = vshrl.u32 %v2058, 23
  %v2060 = vsub.s32 %v2059, 127
  %v2061 = vand.u32 2147483647, %v493
  %v2062 = vand.u32 %v2061, 8388607
  %v2063 = vor.u32 %v2062, 8388608
  %v2064 = vsub.s32 0, %v2063
  %v2065 = vadd.s32 %v2060, 1
  %vm2066 = vcmp.gt.s32.totalorder %v2065, 0
  %v2067 = vsel %vm2066, %v2065, 0
  %v2068 = vshrl.u32 %v2067, 5
  %v2069 = vand.u32 %v2067, 31
  %v2070 = vsub.s32 32, %v2069
  %v2071 = vshrl.u32 683565275, %v2070
  %v2072 = vshll.u32 683565275, %v2069
  %v2073 = vshrl.u32 2475754826, %v2070
  %v2074 = vor.u32 %v2072, %v2073
  %v2075 = vshll.u32 2475754826, %v2069
  %v2076 = vshrl.u32 2131351028, %v2070
  %v2077 = vor.u32 %v2075, %v2076
  %v2078 = vshll.u32 2131351028, %v2069
  %v2079 = vshrl.u32 2102212464, %v2070
  %v2080 = vor.u32 %v2078, %v2079
  %v2081 = vshll.u32 2102212464, %v2069
  %v2082 = vshrl.u32 920167782, %v2070
  %v2083 = vor.u32 %v2081, %v2082
  %v2084 = vshll.u32 920167782, %v2069
  %v2085 = vshrl.u32 1326507024, %v2070
  %v2086 = vor.u32 %v2084, %v2085
  %vm2087 = vcmp.lt.s32.totalorder %v2068, 1
  %vm2088 = vcmp.lt.s32.totalorder %v2068, 2
  %vm2089 = vcmp.lt.s32.totalorder %v2068, 3
  %vm2090 = vcmp.lt.s32.totalorder %v2068, 4
  %v2091 = vsel %vm2087, %v2071, %v2074
  %v2092 = vsel %vm2090, %v2080, 2102212464
  %v2093 = vsel %vm2089, %v2077, %v2092
  %v2094 = vsel %vm2088, %v2091, %v2093
  %v2095 = vsel %vm2087, %v2074, %v2077
  %v2096 = vsel %vm2090, %v2083, 920167782
  %v2097 = vsel %vm2089, %v2080, %v2096
  %v2098 = vsel %vm2088, %v2095, %v2097
  %v2099 = vsel %vm2087, %v2077, %v2080
  %v2100 = vsel %vm2090, %v2086, 1326507024
  %v2101 = vsel %vm2089, %v2083, %v2100
  %v2102 = vsel %vm2088, %v2099, %v2101
  %v2103 = vshll.u32 %v2063, 8
  %v2104 = vmul.u32.u64.compose %v2103, %v2102
  %v2105 = vextract.low.u32 %v2104
  %v2106 = vextract.high.u32 %v2104
  %v2107 = vmul.u32.u64.compose %v2103, %v2098
  %v2108 = vextract.low.u32 %v2107
  %v2109 = vextract.high.u32 %v2107
  %v2110 = vmul.u32 %v2103, %v2094
  %v2111 = vadd.s32 %v2106, %v2108
  %vm2112 = vc.u32 %v2106, %v2108
  %v2113 = vadd.s32 %v2109, 1
  %v2114 = vsel %vm2112, %v2113, %v2109
  %v2115 = vadd.s32 %v2110, %v2114
  %v2116 = vadd.s32 %v2115, 536870912
  %v2117 = vshrl.u32 %v2116, 30
  %v2118 = vshll.u32 %v2117, 30
  %v2119 = vsub.s32 %v2115, %v2118
  %vm2120 = vcmp.lt.s32.totalorder %v2119, 0
  %v2121 = vsub.s32 0, %v2119
  %v2122 = vsel %vm2120, %v2121, %v2119
  %v2123 = vclz %v2122
  %v2124 = vsub.s32 %v2123, 2
  %vm2125 = vcmp.gt.s32.totalorder 0, %v2124
  %v2126 = vsel %vm2125, 0, %v2124
  %v2127 = vsub.s32 32, %v2126
  %v2128 = vshll.u32 %v2119, %v2126
  %v2129 = vshrl.u32 %v2111, %v2127
  %v2130 = vor.u32 %v2128, %v2129
  %v2131 = vsub.s32 4294967266, %v2126
  %v2132 = vadd.s32 %v2131, 127
  %v2133 = vshll.u32 %v2132, 23
  %v2134 = vor.u32 4788187, %v2133
  %v2135 = vand.u32 2147483647, %v2134
  %v2137 = vcvt.s32.f32 %v2130
  %v2138 = vmul.f32 %v2137, %v2135
  %v2139 = vxor.u32 %v2138, 2147483648
  %v2140 = vsel %vm2057, %v2139, %v2138
  %v2141 = vsub.s32 4, %v2117
  %v2142 = vsel %vm2057, %v2141, %v2117
  %v2143 = vsel %vm2056, %v493, %v2140
  %v2144 = vsel %vm2056, 0, %v2142
  %v2145 = vcosq.f32.pop %v2143
  %v2146 = vsinq.f32.pop %v2143
  %vm2147 = vweird.f32 %v493
  %v2148 = vand.u32 %v2144, 3
  %vm2149 = vcmp.lt.s32.totalorder %v2148, 2
  %vm2150 = vcmp.eq.s32.totalorder %v2148, 0
  %v2151 = vxor.u32 %v2146, 2147483648
  %v2152 = vsel %vm2150, %v2145, %v2151
  %vm2153 = vcmp.eq.s32.totalorder %v2148, 2
  %v2154 = vxor.u32 %v2145, 2147483648
  %v2155 = vsel %vm2153, %v2154, %v2146
  %v2156 = vsel %vm2149, %v2152, %v2155
  %v2157 = vsel %vm2147, nan, %v2156
  %v2158 = vand.u32 2147483647, %v494
  %vm2159 = vcmp.le.f32.partialorder %v2158, 0.7853982
  %vm2160 = vcmp.lt.s32.totalorder %v494, 0
  %v2161 = vand.u32 %v494, 2139095040
  %v2162 = vshrl.u32 %v2161, 23
  %v2163 = vsub.s32 %v2162, 127
  %v2164 = vand.u32 2147483647, %v494
  %v2165 = vand.u32 %v2164, 8388607
  %v2166 = vor.u32 %v2165, 8388608
  %v2167 = vsub.s32 0, %v2166
  %v2168 = vadd.s32 %v2163, 1
  %vm2169 = vcmp.gt.s32.totalorder %v2168, 0
  %v2170 = vsel %vm2169, %v2168, 0
  %v2171 = vshrl.u32 %v2170, 5
  %v2172 = vand.u32 %v2170, 31
  %v2173 = vsub.s32 32, %v2172
  %v2174 = vshrl.u32 683565275, %v2173
  %v2175 = vshll.u32 683565275, %v2172
  %v2176 = vshrl.u32 2475754826, %v2173
  %v2177 = vor.u32 %v2175, %v2176
  %v2178 = vshll.u32 2475754826, %v2172
  %v2179 = vshrl.u32 2131351028, %v2173
  %v2180 = vor.u32 %v2178, %v2179
  %v2181 = vshll.u32 2131351028, %v2172
  %v2182 = vshrl.u32 2102212464, %v2173
  %v2183 = vor.u32 %v2181, %v2182
  %v2184 = vshll.u32 2102212464, %v2172
  %v2185 = vshrl.u32 920167782, %v2173
  %v2186 = vor.u32 %v2184, %v2185
  %v2187 = vshll.u32 920167782, %v2172
  %v2188 = vshrl.u32 1326507024, %v2173
  %v2189 = vor.u32 %v2187, %v2188
  %vm2190 = vcmp.lt.s32.totalorder %v2171, 1
  %vm2191 = vcmp.lt.s32.totalorder %v2171, 2
  %vm2192 = vcmp.lt.s32.totalorder %v2171, 3
  %vm2193 = vcmp.lt.s32.totalorder %v2171, 4
  %v2194 = vsel %vm2190, %v2174, %v2177
  %v2195 = vsel %vm2193, %v2183, 2102212464
  %v2196 = vsel %vm2192, %v2180, %v2195
  %v2197 = vsel %vm2191, %v2194, %v2196
  %v2198 = vsel %vm2190, %v2177, %v2180
  %v2199 = vsel %vm2193, %v2186, 920167782
  %v2200 = vsel %vm2192, %v2183, %v2199
  %v2201 = vsel %vm2191, %v2198, %v2200
  %v2202 = vsel %vm2190, %v2180, %v2183
  %v2203 = vsel %vm2193, %v2189, 1326507024
  %v2204 = vsel %vm2192, %v2186, %v2203
  %v2205 = vsel %vm2191, %v2202, %v2204
  %v2206 = vshll.u32 %v2166, 8
  %v2207 = vmul.u32.u64.compose %v2206, %v2205
  %v2208 = vextract.low.u32 %v2207
  %v2209 = vextract.high.u32 %v2207
  %v2210 = vmul.u32.u64.compose %v2206, %v2201
  %v2211 = vextract.low.u32 %v2210
  %v2212 = vextract.high.u32 %v2210
  %v2213 = vmul.u32 %v2206, %v2197
  %v2214 = vadd.s32 %v2209, %v2211
  %vm2215 = vc.u32 %v2209, %v2211
  %v2216 = vadd.s32 %v2212, 1
  %v2217 = vsel %vm2215, %v2216, %v2212
  %v2218 = vadd.s32 %v2213, %v2217
  %v2219 = vadd.s32 %v2218, 536870912
  %v2220 = vshrl.u32 %v2219, 30
  %v2221 = vshll.u32 %v2220, 30
  %v2222 = vsub.s32 %v2218, %v2221
  %vm2223 = vcmp.lt.s32.totalorder %v2222, 0
  %v2224 = vsub.s32 0, %v2222
  %v2225 = vsel %vm2223, %v2224, %v2222
  %v2226 = vclz %v2225
  %v2227 = vsub.s32 %v2226, 2
  %vm2228 = vcmp.gt.s32.totalorder 0, %v2227
  %v2229 = vsel %vm2228, 0, %v2227
  %v2230 = vsub.s32 32, %v2229
  %v2231 = vshll.u32 %v2222, %v2229
  %v2232 = vshrl.u32 %v2214, %v2230
  %v2233 = vor.u32 %v2231, %v2232
  %v2234 = vsub.s32 4294967266, %v2229
  %v2235 = vadd.s32 %v2234, 127
  %v2236 = vshll.u32 %v2235, 23
  %v2237 = vor.u32 4788187, %v2236
  %v2238 = vand.u32 2147483647, %v2237
  %v2240 = vcvt.s32.f32 %v2233
  %v2241 = vmul.f32 %v2240, %v2238
  %v2242 = vxor.u32 %v2241, 2147483648
  %v2243 = vsel %vm2160, %v2242, %v2241
  %v2244 = vsub.s32 4, %v2220
  %v2245 = vsel %vm2160, %v2244, %v2220
  %v2246 = vsel %vm2159, %v494, %v2243
  %v2247 = vsel %vm2159, 0, %v2245
  %v2248 = vcosq.f32.pop %v2246
  %v2249 = vsinq.f32.pop %v2246
  %vm2250 = vweird.f32 %v494
  %v2251 = vand.u32 %v2247, 3
  %vm2252 = vcmp.lt.s32.totalorder %v2251, 2
  %vm2253 = vcmp.eq.s32.totalorder %v2251, 0
  %v2254 = vxor.u32 %v2249, 2147483648
  %v2255 = vsel %vm2253, %v2248, %v2254
  %vm2256 = vcmp.eq.s32.totalorder %v2251, 2
  %v2257 = vxor.u32 %v2248, 2147483648
  %v2258 = vsel %vm2256, %v2257, %v2249
  %v2259 = vsel %vm2252, %v2255, %v2258
  %v2260 = vsel %vm2250, nan, %v2259
  %v2261 = vand.u32 2147483647, %v495
  %vm2262 = vcmp.le.f32.partialorder %v2261, 0.7853982
  %vm2263 = vcmp.lt.s32.totalorder %v495, 0
  %v2264 = vand.u32 %v495, 2139095040
  %v2265 = vshrl.u32 %v2264, 23
  %v2266 = vsub.s32 %v2265, 127
  %v2267 = vand.u32 2147483647, %v495
  %v2268 = vand.u32 %v2267, 8388607
  %v2269 = vor.u32 %v2268, 8388608
  %v2270 = vsub.s32 0, %v2269
  %v2271 = vadd.s32 %v2266, 1
  %vm2272 = vcmp.gt.s32.totalorder %v2271, 0
  %v2273 = vsel %vm2272, %v2271, 0
  %v2274 = vshrl.u32 %v2273, 5
  %v2275 = vand.u32 %v2273, 31
  %v2276 = vsub.s32 32, %v2275
  %v2277 = vshrl.u32 683565275, %v2276
  %v2278 = vshll.u32 683565275, %v2275
  %v2279 = vshrl.u32 2475754826, %v2276
  %v2280 = vor.u32 %v2278, %v2279
  %v2281 = vshll.u32 2475754826, %v2275
  %v2282 = vshrl.u32 2131351028, %v2276
  %v2283 = vor.u32 %v2281, %v2282
  %v2284 = vshll.u32 2131351028, %v2275
  %v2285 = vshrl.u32 2102212464, %v2276
  %v2286 = vor.u32 %v2284, %v2285
  %v2287 = vshll.u32 2102212464, %v2275
  %v2288 = vshrl.u32 920167782, %v2276
  %v2289 = vor.u32 %v2287, %v2288
  %v2290 = vshll.u32 920167782, %v2275
  %v2291 = vshrl.u32 1326507024, %v2276
  %v2292 = vor.u32 %v2290, %v2291
  %vm2293 = vcmp.lt.s32.totalorder %v2274, 1
  %vm2294 = vcmp.lt.s32.totalorder %v2274, 2
  %vm2295 = vcmp.lt.s32.totalorder %v2274, 3
  %vm2296 = vcmp.lt.s32.totalorder %v2274, 4
  %v2297 = vsel %vm2293, %v2277, %v2280
  %v2298 = vsel %vm2296, %v2286, 2102212464
  %v2299 = vsel %vm2295, %v2283, %v2298
  %v2300 = vsel %vm2294, %v2297, %v2299
  %v2301 = vsel %vm2293, %v2280, %v2283
  %v2302 = vsel %vm2296, %v2289, 920167782
  %v2303 = vsel %vm2295, %v2286, %v2302
  %v2304 = vsel %vm2294, %v2301, %v2303
  %v2305 = vsel %vm2293, %v2283, %v2286
  %v2306 = vsel %vm2296, %v2292, 1326507024
  %v2307 = vsel %vm2295, %v2289, %v2306
  %v2308 = vsel %vm2294, %v2305, %v2307
  %v2309 = vshll.u32 %v2269, 8
  %v2310 = vmul.u32.u64.compose %v2309, %v2308
  %v2311 = vextract.low.u32 %v2310
  %v2312 = vextract.high.u32 %v2310
  %v2313 = vmul.u32.u64.compose %v2309, %v2304
  %v2314 = vextract.low.u32 %v2313
  %v2315 = vextract.high.u32 %v2313
  %v2316 = vmul.u32 %v2309, %v2300
  %v2317 = vadd.s32 %v2312, %v2314
  %vm2318 = vc.u32 %v2312, %v2314
  %v2319 = vadd.s32 %v2315, 1
  %v2320 = vsel %vm2318, %v2319, %v2315
  %v2321 = vadd.s32 %v2316, %v2320
  %v2322 = vadd.s32 %v2321, 536870912
  %v2323 = vshrl.u32 %v2322, 30
  %v2324 = vshll.u32 %v2323, 30
  %v2325 = vsub.s32 %v2321, %v2324
  %vm2326 = vcmp.lt.s32.totalorder %v2325, 0
  %v2327 = vsub.s32 0, %v2325
  %v2328 = vsel %vm2326, %v2327, %v2325
  %v2329 = vclz %v2328
  %v2330 = vsub.s32 %v2329, 2
  %vm2331 = vcmp.gt.s32.totalorder 0, %v2330
  %v2332 = vsel %vm2331, 0, %v2330
  %v2333 = vsub.s32 32, %v2332
  %v2334 = vshll.u32 %v2325, %v2332
  %v2335 = vshrl.u32 %v2317, %v2333
  %v2336 = vor.u32 %v2334, %v2335
  %v2337 = vsub.s32 4294967266, %v2332
  %v2338 = vadd.s32 %v2337, 127
  %v2339 = vshll.u32 %v2338, 23
  %v2340 = vor.u32 4788187, %v2339
  %v2341 = vand.u32 2147483647, %v2340
  %v2343 = vcvt.s32.f32 %v2336
  %v2344 = vmul.f32 %v2343, %v2341
  %v2345 = vxor.u32 %v2344, 2147483648
  %v2346 = vsel %vm2263, %v2345, %v2344
  %v2347 = vsub.s32 4, %v2323
  %v2348 = vsel %vm2263, %v2347, %v2323
  %v2349 = vsel %vm2262, %v495, %v2346
  %v2350 = vsel %vm2262, 0, %v2348
  %v2351 = vcosq.f32.pop %v2349
  %v2352 = vsinq.f32.pop %v2349
  %vm2353 = vweird.f32 %v495
  %v2354 = vand.u32 %v2350, 3
  %vm2355 = vcmp.lt.s32.totalorder %v2354, 2
  %vm2356 = vcmp.eq.s32.totalorder %v2354, 0
  %v2357 = vxor.u32 %v2352, 2147483648
  %v2358 = vsel %vm2356, %v2351, %v2357
  %vm2359 = vcmp.eq.s32.totalorder %v2354, 2
  %v2360 = vxor.u32 %v2351, 2147483648
  %v2361 = vsel %vm2359, %v2360, %v2352
  %v2362 = vsel %vm2355, %v2358, %v2361
  %v2363 = vsel %vm2353, nan, %v2362
  %v2364 = vand.u32 2147483647, %v496
  %vm2365 = vcmp.le.f32.partialorder %v2364, 0.7853982
  %vm2366 = vcmp.lt.s32.totalorder %v496, 0
  %v2367 = vand.u32 %v496, 2139095040
  %v2368 = vshrl.u32 %v2367, 23
  %v2369 = vsub.s32 %v2368, 127
  %v2370 = vand.u32 2147483647, %v496
  %v2371 = vand.u32 %v2370, 8388607
  %v2372 = vor.u32 %v2371, 8388608
  %v2373 = vsub.s32 0, %v2372
  %v2374 = vadd.s32 %v2369, 1
  %vm2375 = vcmp.gt.s32.totalorder %v2374, 0
  %v2376 = vsel %vm2375, %v2374, 0
  %v2377 = vshrl.u32 %v2376, 5
  %v2378 = vand.u32 %v2376, 31
  %v2379 = vsub.s32 32, %v2378
  %v2380 = vshrl.u32 683565275, %v2379
  %v2381 = vshll.u32 683565275, %v2378
  %v2382 = vshrl.u32 2475754826, %v2379
  %v2383 = vor.u32 %v2381, %v2382
  %v2384 = vshll.u32 2475754826, %v2378
  %v2385 = vshrl.u32 2131351028, %v2379
  %v2386 = vor.u32 %v2384, %v2385
  %v2387 = vshll.u32 2131351028, %v2378
  %v2388 = vshrl.u32 2102212464, %v2379
  %v2389 = vor.u32 %v2387, %v2388
  %v2390 = vshll.u32 2102212464, %v2378
  %v2391 = vshrl.u32 920167782, %v2379
  %v2392 = vor.u32 %v2390, %v2391
  %v2393 = vshll.u32 920167782, %v2378
  %v2394 = vshrl.u32 1326507024, %v2379
  %v2395 = vor.u32 %v2393, %v2394
  %vm2396 = vcmp.lt.s32.totalorder %v2377, 1
  %vm2397 = vcmp.lt.s32.totalorder %v2377, 2
  %vm2398 = vcmp.lt.s32.totalorder %v2377, 3
  %vm2399 = vcmp.lt.s32.totalorder %v2377, 4
  %v2400 = vsel %vm2396, %v2380, %v2383
  %v2401 = vsel %vm2399, %v2389, 2102212464
  %v2402 = vsel %vm2398, %v2386, %v2401
  %v2403 = vsel %vm2397, %v2400, %v2402
  %v2404 = vsel %vm2396, %v2383, %v2386
  %v2405 = vsel %vm2399, %v2392, 920167782
  %v2406 = vsel %vm2398, %v2389, %v2405
  %v2407 = vsel %vm2397, %v2404, %v2406
  %v2408 = vsel %vm2396, %v2386, %v2389
  %v2409 = vsel %vm2399, %v2395, 1326507024
  %v2410 = vsel %vm2398, %v2392, %v2409
  %v2411 = vsel %vm2397, %v2408, %v2410
  %v2412 = vshll.u32 %v2372, 8
  %v2413 = vmul.u32.u64.compose %v2412, %v2411
  %v2414 = vextract.low.u32 %v2413
  %v2415 = vextract.high.u32 %v2413
  %v2416 = vmul.u32.u64.compose %v2412, %v2407
  %v2417 = vextract.low.u32 %v2416
  %v2418 = vextract.high.u32 %v2416
  %v2419 = vmul.u32 %v2412, %v2403
  %v2420 = vadd.s32 %v2415, %v2417
  %vm2421 = vc.u32 %v2415, %v2417
  %v2422 = vadd.s32 %v2418, 1
  %v2423 = vsel %vm2421, %v2422, %v2418
  %v2424 = vadd.s32 %v2419, %v2423
  %v2425 = vadd.s32 %v2424, 536870912
  %v2426 = vshrl.u32 %v2425, 30
  %v2427 = vshll.u32 %v2426, 30
  %v2428 = vsub.s32 %v2424, %v2427
  %vm2429 = vcmp.lt.s32.totalorder %v2428, 0
  %v2430 = vsub.s32 0, %v2428
  %v2431 = vsel %vm2429, %v2430, %v2428
  %v2432 = vclz %v2431
  %v2433 = vsub.s32 %v2432, 2
  %vm2434 = vcmp.gt.s32.totalorder 0, %v2433
  %v2435 = vsel %vm2434, 0, %v2433
  %v2436 = vsub.s32 32, %v2435
  %v2437 = vshll.u32 %v2428, %v2435
  %v2438 = vshrl.u32 %v2420, %v2436
  %v2439 = vor.u32 %v2437, %v2438
  %v2440 = vsub.s32 4294967266, %v2435
  %v2441 = vadd.s32 %v2440, 127
  %v2442 = vshll.u32 %v2441, 23
  %v2443 = vor.u32 4788187, %v2442
  %v2444 = vand.u32 2147483647, %v2443
  %v2446 = vcvt.s32.f32 %v2439
  %v2447 = vmul.f32 %v2446, %v2444
  %v2448 = vxor.u32 %v2447, 2147483648
  %v2449 = vsel %vm2366, %v2448, %v2447
  %v2450 = vsub.s32 4, %v2426
  %v2451 = vsel %vm2366, %v2450, %v2426
  %v2452 = vsel %vm2365, %v496, %v2449
  %v2453 = vsel %vm2365, 0, %v2451
  %v2454 = vcosq.f32.pop %v2452
  %v2455 = vsinq.f32.pop %v2452
  %vm2456 = vweird.f32 %v496
  %v2457 = vand.u32 %v2453, 3
  %vm2458 = vcmp.lt.s32.totalorder %v2457, 2
  %vm2459 = vcmp.eq.s32.totalorder %v2457, 0
  %v2460 = vxor.u32 %v2455, 2147483648
  %v2461 = vsel %vm2459, %v2454, %v2460
  %vm2462 = vcmp.eq.s32.totalorder %v2457, 2
  %v2463 = vxor.u32 %v2454, 2147483648
  %v2464 = vsel %vm2462, %v2463, %v2455
  %v2465 = vsel %vm2458, %v2461, %v2464
  %v2466 = vsel %vm2456, nan, %v2465
  %v2467 = vand.u32 2147483647, %v497
  %vm2468 = vcmp.le.f32.partialorder %v2467, 0.7853982
  %vm2469 = vcmp.lt.s32.totalorder %v497, 0
  %v2470 = vand.u32 %v497, 2139095040
  %v2471 = vshrl.u32 %v2470, 23
  %v2472 = vsub.s32 %v2471, 127
  %v2473 = vand.u32 2147483647, %v497
  %v2474 = vand.u32 %v2473, 8388607
  %v2475 = vor.u32 %v2474, 8388608
  %v2476 = vsub.s32 0, %v2475
  %v2477 = vadd.s32 %v2472, 1
  %vm2478 = vcmp.gt.s32.totalorder %v2477, 0
  %v2479 = vsel %vm2478, %v2477, 0
  %v2480 = vshrl.u32 %v2479, 5
  %v2481 = vand.u32 %v2479, 31
  %v2482 = vsub.s32 32, %v2481
  %v2483 = vshrl.u32 683565275, %v2482
  %v2484 = vshll.u32 683565275, %v2481
  %v2485 = vshrl.u32 2475754826, %v2482
  %v2486 = vor.u32 %v2484, %v2485
  %v2487 = vshll.u32 2475754826, %v2481
  %v2488 = vshrl.u32 2131351028, %v2482
  %v2489 = vor.u32 %v2487, %v2488
  %v2490 = vshll.u32 2131351028, %v2481
  %v2491 = vshrl.u32 2102212464, %v2482
  %v2492 = vor.u32 %v2490, %v2491
  %v2493 = vshll.u32 2102212464, %v2481
  %v2494 = vshrl.u32 920167782, %v2482
  %v2495 = vor.u32 %v2493, %v2494
  %v2496 = vshll.u32 920167782, %v2481
  %v2497 = vshrl.u32 1326507024, %v2482
  %v2498 = vor.u32 %v2496, %v2497
  %vm2499 = vcmp.lt.s32.totalorder %v2480, 1
  %vm2500 = vcmp.lt.s32.totalorder %v2480, 2
  %vm2501 = vcmp.lt.s32.totalorder %v2480, 3
  %vm2502 = vcmp.lt.s32.totalorder %v2480, 4
  %v2503 = vsel %vm2499, %v2483, %v2486
  %v2504 = vsel %vm2502, %v2492, 2102212464
  %v2505 = vsel %vm2501, %v2489, %v2504
  %v2506 = vsel %vm2500, %v2503, %v2505
  %v2507 = vsel %vm2499, %v2486, %v2489
  %v2508 = vsel %vm2502, %v2495, 920167782
  %v2509 = vsel %vm2501, %v2492, %v2508
  %v2510 = vsel %vm2500, %v2507, %v2509
  %v2511 = vsel %vm2499, %v2489, %v2492
  %v2512 = vsel %vm2502, %v2498, 1326507024
  %v2513 = vsel %vm2501, %v2495, %v2512
  %v2514 = vsel %vm2500, %v2511, %v2513
  %v2515 = vshll.u32 %v2475, 8
  %v2516 = vmul.u32.u64.compose %v2515, %v2514
  %v2517 = vextract.low.u32 %v2516
  %v2518 = vextract.high.u32 %v2516
  %v2519 = vmul.u32.u64.compose %v2515, %v2510
  %v2520 = vextract.low.u32 %v2519
  %v2521 = vextract.high.u32 %v2519
  %v2522 = vmul.u32 %v2515, %v2506
  %v2523 = vadd.s32 %v2518, %v2520
  %vm2524 = vc.u32 %v2518, %v2520
  %v2525 = vadd.s32 %v2521, 1
  %v2526 = vsel %vm2524, %v2525, %v2521
  %v2527 = vadd.s32 %v2522, %v2526
  %v2528 = vadd.s32 %v2527, 536870912
  %v2529 = vshrl.u32 %v2528, 30
  %v2530 = vshll.u32 %v2529, 30
  %v2531 = vsub.s32 %v2527, %v2530
  %vm2532 = vcmp.lt.s32.totalorder %v2531, 0
  %v2533 = vsub.s32 0, %v2531
  %v2534 = vsel %vm2532, %v2533, %v2531
  %v2535 = vclz %v2534
  %v2536 = vsub.s32 %v2535, 2
  %vm2537 = vcmp.gt.s32.totalorder 0, %v2536
  %v2538 = vsel %vm2537, 0, %v2536
  %v2539 = vsub.s32 32, %v2538
  %v2540 = vshll.u32 %v2531, %v2538
  %v2541 = vshrl.u32 %v2523, %v2539
  %v2542 = vor.u32 %v2540, %v2541
  %v2543 = vsub.s32 4294967266, %v2538
  %v2544 = vadd.s32 %v2543, 127
  %v2545 = vshll.u32 %v2544, 23
  %v2546 = vor.u32 4788187, %v2545
  %v2547 = vand.u32 2147483647, %v2546
  %v2549 = vcvt.s32.f32 %v2542
  %v2550 = vmul.f32 %v2549, %v2547
  %v2551 = vxor.u32 %v2550, 2147483648
  %v2552 = vsel %vm2469, %v2551, %v2550
  %v2553 = vsub.s32 4, %v2529
  %v2554 = vsel %vm2469, %v2553, %v2529
  %v2555 = vsel %vm2468, %v497, %v2552
  %v2556 = vsel %vm2468, 0, %v2554
  %v2557 = vcosq.f32.pop %v2555
  %v2558 = vsinq.f32.pop %v2555
  %vm2559 = vweird.f32 %v497
  %v2560 = vand.u32 %v2556, 3
  %vm2561 = vcmp.lt.s32.totalorder %v2560, 2
  %vm2562 = vcmp.eq.s32.totalorder %v2560, 0
  %v2563 = vxor.u32 %v2558, 2147483648
  %v2564 = vsel %vm2562, %v2557, %v2563
  %vm2565 = vcmp.eq.s32.totalorder %v2560, 2
  %v2566 = vxor.u32 %v2557, 2147483648
  %v2567 = vsel %vm2565, %v2566, %v2558
  %v2568 = vsel %vm2561, %v2564, %v2567
  %v2569 = vsel %vm2559, nan, %v2568
  %v2570 = vand.u32 2147483647, %v498
  %vm2571 = vcmp.le.f32.partialorder %v2570, 0.7853982
  %vm2572 = vcmp.lt.s32.totalorder %v498, 0
  %v2573 = vand.u32 %v498, 2139095040
  %v2574 = vshrl.u32 %v2573, 23
  %v2575 = vsub.s32 %v2574, 127
  %v2576 = vand.u32 2147483647, %v498
  %v2577 = vand.u32 %v2576, 8388607
  %v2578 = vor.u32 %v2577, 8388608
  %v2579 = vsub.s32 0, %v2578
  %v2580 = vadd.s32 %v2575, 1
  %vm2581 = vcmp.gt.s32.totalorder %v2580, 0
  %v2582 = vsel %vm2581, %v2580, 0
  %v2583 = vshrl.u32 %v2582, 5
  %v2584 = vand.u32 %v2582, 31
  %v2585 = vsub.s32 32, %v2584
  %v2586 = vshrl.u32 683565275, %v2585
  %v2587 = vshll.u32 683565275, %v2584
  %v2588 = vshrl.u32 2475754826, %v2585
  %v2589 = vor.u32 %v2587, %v2588
  %v2590 = vshll.u32 2475754826, %v2584
  %v2591 = vshrl.u32 2131351028, %v2585
  %v2592 = vor.u32 %v2590, %v2591
  %v2593 = vshll.u32 2131351028, %v2584
  %v2594 = vshrl.u32 2102212464, %v2585
  %v2595 = vor.u32 %v2593, %v2594
  %v2596 = vshll.u32 2102212464, %v2584
  %v2597 = vshrl.u32 920167782, %v2585
  %v2598 = vor.u32 %v2596, %v2597
  %v2599 = vshll.u32 920167782, %v2584
  %v2600 = vshrl.u32 1326507024, %v2585
  %v2601 = vor.u32 %v2599, %v2600
  %vm2602 = vcmp.lt.s32.totalorder %v2583, 1
  %vm2603 = vcmp.lt.s32.totalorder %v2583, 2
  %vm2604 = vcmp.lt.s32.totalorder %v2583, 3
  %vm2605 = vcmp.lt.s32.totalorder %v2583, 4
  %v2606 = vsel %vm2602, %v2586, %v2589
  %v2607 = vsel %vm2605, %v2595, 2102212464
  %v2608 = vsel %vm2604, %v2592, %v2607
  %v2609 = vsel %vm2603, %v2606, %v2608
  %v2610 = vsel %vm2602, %v2589, %v2592
  %v2611 = vsel %vm2605, %v2598, 920167782
  %v2612 = vsel %vm2604, %v2595, %v2611
  %v2613 = vsel %vm2603, %v2610, %v2612
  %v2614 = vsel %vm2602, %v2592, %v2595
  %v2615 = vsel %vm2605, %v2601, 1326507024
  %v2616 = vsel %vm2604, %v2598, %v2615
  %v2617 = vsel %vm2603, %v2614, %v2616
  %v2618 = vshll.u32 %v2578, 8
  %v2619 = vmul.u32.u64.compose %v2618, %v2617
  %v2620 = vextract.low.u32 %v2619
  %v2621 = vextract.high.u32 %v2619
  %v2622 = vmul.u32.u64.compose %v2618, %v2613
  %v2623 = vextract.low.u32 %v2622
  %v2624 = vextract.high.u32 %v2622
  %v2625 = vmul.u32 %v2618, %v2609
  %v2626 = vadd.s32 %v2621, %v2623
  %vm2627 = vc.u32 %v2621, %v2623
  %v2628 = vadd.s32 %v2624, 1
  %v2629 = vsel %vm2627, %v2628, %v2624
  %v2630 = vadd.s32 %v2625, %v2629
  %v2631 = vadd.s32 %v2630, 536870912
  %v2632 = vshrl.u32 %v2631, 30
  %v2633 = vshll.u32 %v2632, 30
  %v2634 = vsub.s32 %v2630, %v2633
  %vm2635 = vcmp.lt.s32.totalorder %v2634, 0
  %v2636 = vsub.s32 0, %v2634
  %v2637 = vsel %vm2635, %v2636, %v2634
  %v2638 = vclz %v2637
  %v2639 = vsub.s32 %v2638, 2
  %vm2640 = vcmp.gt.s32.totalorder 0, %v2639
  %v2641 = vsel %vm2640, 0, %v2639
  %v2642 = vsub.s32 32, %v2641
  %v2643 = vshll.u32 %v2634, %v2641
  %v2644 = vshrl.u32 %v2626, %v2642
  %v2645 = vor.u32 %v2643, %v2644
  %v2646 = vsub.s32 4294967266, %v2641
  %v2647 = vadd.s32 %v2646, 127
  %v2648 = vshll.u32 %v2647, 23
  %v2649 = vor.u32 4788187, %v2648
  %v2650 = vand.u32 2147483647, %v2649
  %v2652 = vcvt.s32.f32 %v2645
  %v2653 = vmul.f32 %v2652, %v2650
  %v2654 = vxor.u32 %v2653, 2147483648
  %v2655 = vsel %vm2572, %v2654, %v2653
  %v2656 = vsub.s32 4, %v2632
  %v2657 = vsel %vm2572, %v2656, %v2632
  %v2658 = vsel %vm2571, %v498, %v2655
  %v2659 = vsel %vm2571, 0, %v2657
  %v2660 = vcosq.f32.pop %v2658
  %v2661 = vsinq.f32.pop %v2658
  %vm2662 = vweird.f32 %v498
  %v2663 = vand.u32 %v2659, 3
  %vm2664 = vcmp.lt.s32.totalorder %v2663, 2
  %vm2665 = vcmp.eq.s32.totalorder %v2663, 0
  %v2666 = vxor.u32 %v2661, 2147483648
  %v2667 = vsel %vm2665, %v2660, %v2666
  %vm2668 = vcmp.eq.s32.totalorder %v2663, 2
  %v2669 = vxor.u32 %v2660, 2147483648
  %v2670 = vsel %vm2668, %v2669, %v2661
  %v2671 = vsel %vm2664, %v2667, %v2670
  %v2672 = vsel %vm2662, nan, %v2671
  %v2673 = vand.u32 2147483647, %v499
  %vm2674 = vcmp.le.f32.partialorder %v2673, 0.7853982
  %vm2675 = vcmp.lt.s32.totalorder %v499, 0
  %v2676 = vand.u32 %v499, 2139095040
  %v2677 = vshrl.u32 %v2676, 23
  %v2678 = vsub.s32 %v2677, 127
  %v2679 = vand.u32 2147483647, %v499
  %v2680 = vand.u32 %v2679, 8388607
  %v2681 = vor.u32 %v2680, 8388608
  %v2682 = vsub.s32 0, %v2681
  %v2683 = vadd.s32 %v2678, 1
  %vm2684 = vcmp.gt.s32.totalorder %v2683, 0
  %v2685 = vsel %vm2684, %v2683, 0
  %v2686 = vshrl.u32 %v2685, 5
  %v2687 = vand.u32 %v2685, 31
  %v2688 = vsub.s32 32, %v2687
  %v2689 = vshrl.u32 683565275, %v2688
  %v2690 = vshll.u32 683565275, %v2687
  %v2691 = vshrl.u32 2475754826, %v2688
  %v2692 = vor.u32 %v2690, %v2691
  %v2693 = vshll.u32 2475754826, %v2687
  %v2694 = vshrl.u32 2131351028, %v2688
  %v2695 = vor.u32 %v2693, %v2694
  %v2696 = vshll.u32 2131351028, %v2687
  %v2697 = vshrl.u32 2102212464, %v2688
  %v2698 = vor.u32 %v2696, %v2697
  %v2699 = vshll.u32 2102212464, %v2687
  %v2700 = vshrl.u32 920167782, %v2688
  %v2701 = vor.u32 %v2699, %v2700
  %v2702 = vshll.u32 920167782, %v2687
  %v2703 = vshrl.u32 1326507024, %v2688
  %v2704 = vor.u32 %v2702, %v2703
  %vm2705 = vcmp.lt.s32.totalorder %v2686, 1
  %vm2706 = vcmp.lt.s32.totalorder %v2686, 2
  %vm2707 = vcmp.lt.s32.totalorder %v2686, 3
  %vm2708 = vcmp.lt.s32.totalorder %v2686, 4
  %v2709 = vsel %vm2705, %v2689, %v2692
  %v2710 = vsel %vm2708, %v2698, 2102212464
  %v2711 = vsel %vm2707, %v2695, %v2710
  %v2712 = vsel %vm2706, %v2709, %v2711
  %v2713 = vsel %vm2705, %v2692, %v2695
  %v2714 = vsel %vm2708, %v2701, 920167782
  %v2715 = vsel %vm2707, %v2698, %v2714
  %v2716 = vsel %vm2706, %v2713, %v2715
  %v2717 = vsel %vm2705, %v2695, %v2698
  %v2718 = vsel %vm2708, %v2704, 1326507024
  %v2719 = vsel %vm2707, %v2701, %v2718
  %v2720 = vsel %vm2706, %v2717, %v2719
  %v2721 = vshll.u32 %v2681, 8
  %v2722 = vmul.u32.u64.compose %v2721, %v2720
  %v2723 = vextract.low.u32 %v2722
  %v2724 = vextract.high.u32 %v2722
  %v2725 = vmul.u32.u64.compose %v2721, %v2716
  %v2726 = vextract.low.u32 %v2725
  %v2727 = vextract.high.u32 %v2725
  %v2728 = vmul.u32 %v2721, %v2712
  %v2729 = vadd.s32 %v2724, %v2726
  %vm2730 = vc.u32 %v2724, %v2726
  %v2731 = vadd.s32 %v2727, 1
  %v2732 = vsel %vm2730, %v2731, %v2727
  %v2733 = vadd.s32 %v2728, %v2732
  %v2734 = vadd.s32 %v2733, 536870912
  %v2735 = vshrl.u32 %v2734, 30
  %v2736 = vshll.u32 %v2735, 30
  %v2737 = vsub.s32 %v2733, %v2736
  %vm2738 = vcmp.lt.s32.totalorder %v2737, 0
  %v2739 = vsub.s32 0, %v2737
  %v2740 = vsel %vm2738, %v2739, %v2737
  %v2741 = vclz %v2740
  %v2742 = vsub.s32 %v2741, 2
  %vm2743 = vcmp.gt.s32.totalorder 0, %v2742
  %v2744 = vsel %vm2743, 0, %v2742
  %v2745 = vsub.s32 32, %v2744
  %v2746 = vshll.u32 %v2737, %v2744
  %v2747 = vshrl.u32 %v2729, %v2745
  %v2748 = vor.u32 %v2746, %v2747
  %v2749 = vsub.s32 4294967266, %v2744
  %v2750 = vadd.s32 %v2749, 127
  %v2751 = vshll.u32 %v2750, 23
  %v2752 = vor.u32 4788187, %v2751
  %v2753 = vand.u32 2147483647, %v2752
  %v2755 = vcvt.s32.f32 %v2748
  %v2756 = vmul.f32 %v2755, %v2753
  %v2757 = vxor.u32 %v2756, 2147483648
  %v2758 = vsel %vm2675, %v2757, %v2756
  %v2759 = vsub.s32 4, %v2735
  %v2760 = vsel %vm2675, %v2759, %v2735
  %v2761 = vsel %vm2674, %v499, %v2758
  %v2762 = vsel %vm2674, 0, %v2760
  %v2763 = vcosq.f32.pop %v2761
  %v2764 = vsinq.f32.pop %v2761
  %vm2765 = vweird.f32 %v499
  %v2766 = vand.u32 %v2762, 3
  %vm2767 = vcmp.lt.s32.totalorder %v2766, 2
  %vm2768 = vcmp.eq.s32.totalorder %v2766, 0
  %v2769 = vxor.u32 %v2764, 2147483648
  %v2770 = vsel %vm2768, %v2763, %v2769
  %vm2771 = vcmp.eq.s32.totalorder %v2766, 2
  %v2772 = vxor.u32 %v2763, 2147483648
  %v2773 = vsel %vm2771, %v2772, %v2764
  %v2774 = vsel %vm2767, %v2770, %v2773
  %v2775 = vsel %vm2765, nan, %v2774
  %v2776 = vand.u32 2147483647, %v500
  %vm2777 = vcmp.le.f32.partialorder %v2776, 0.7853982
  %vm2778 = vcmp.lt.s32.totalorder %v500, 0
  %v2779 = vand.u32 %v500, 2139095040
  %v2780 = vshrl.u32 %v2779, 23
  %v2781 = vsub.s32 %v2780, 127
  %v2782 = vand.u32 2147483647, %v500
  %v2783 = vand.u32 %v2782, 8388607
  %v2784 = vor.u32 %v2783, 8388608
  %v2785 = vsub.s32 0, %v2784
  %v2786 = vadd.s32 %v2781, 1
  %vm2787 = vcmp.gt.s32.totalorder %v2786, 0
  %v2788 = vsel %vm2787, %v2786, 0
  %v2789 = vshrl.u32 %v2788, 5
  %v2790 = vand.u32 %v2788, 31
  %v2791 = vsub.s32 32, %v2790
  %v2792 = vshrl.u32 683565275, %v2791
  %v2793 = vshll.u32 683565275, %v2790
  %v2794 = vshrl.u32 2475754826, %v2791
  %v2795 = vor.u32 %v2793, %v2794
  %v2796 = vshll.u32 2475754826, %v2790
  %v2797 = vshrl.u32 2131351028, %v2791
  %v2798 = vor.u32 %v2796, %v2797
  %v2799 = vshll.u32 2131351028, %v2790
  %v2800 = vshrl.u32 2102212464, %v2791
  %v2801 = vor.u32 %v2799, %v2800
  %v2802 = vshll.u32 2102212464, %v2790
  %v2803 = vshrl.u32 920167782, %v2791
  %v2804 = vor.u32 %v2802, %v2803
  %v2805 = vshll.u32 920167782, %v2790
  %v2806 = vshrl.u32 1326507024, %v2791
  %v2807 = vor.u32 %v2805, %v2806
  %vm2808 = vcmp.lt.s32.totalorder %v2789, 1
  %vm2809 = vcmp.lt.s32.totalorder %v2789, 2
  %vm2810 = vcmp.lt.s32.totalorder %v2789, 3
  %vm2811 = vcmp.lt.s32.totalorder %v2789, 4
  %v2812 = vsel %vm2808, %v2792, %v2795
  %v2813 = vsel %vm2811, %v2801, 2102212464
  %v2814 = vsel %vm2810, %v2798, %v2813
  %v2815 = vsel %vm2809, %v2812, %v2814
  %v2816 = vsel %vm2808, %v2795, %v2798
  %v2817 = vsel %vm2811, %v2804, 920167782
  %v2818 = vsel %vm2810, %v2801, %v2817
  %v2819 = vsel %vm2809, %v2816, %v2818
  %v2820 = vsel %vm2808, %v2798, %v2801
  %v2821 = vsel %vm2811, %v2807, 1326507024
  %v2822 = vsel %vm2810, %v2804, %v2821
  %v2823 = vsel %vm2809, %v2820, %v2822
  %v2824 = vshll.u32 %v2784, 8
  %v2825 = vmul.u32.u64.compose %v2824, %v2823
  %v2826 = vextract.low.u32 %v2825
  %v2827 = vextract.high.u32 %v2825
  %v2828 = vmul.u32.u64.compose %v2824, %v2819
  %v2829 = vextract.low.u32 %v2828
  %v2830 = vextract.high.u32 %v2828
  %v2831 = vmul.u32 %v2824, %v2815
  %v2832 = vadd.s32 %v2827, %v2829
  %vm2833 = vc.u32 %v2827, %v2829
  %v2834 = vadd.s32 %v2830, 1
  %v2835 = vsel %vm2833, %v2834, %v2830
  %v2836 = vadd.s32 %v2831, %v2835
  %v2837 = vadd.s32 %v2836, 536870912
  %v2838 = vshrl.u32 %v2837, 30
  %v2839 = vshll.u32 %v2838, 30
  %v2840 = vsub.s32 %v2836, %v2839
  %vm2841 = vcmp.lt.s32.totalorder %v2840, 0
  %v2842 = vsub.s32 0, %v2840
  %v2843 = vsel %vm2841, %v2842, %v2840
  %v2844 = vclz %v2843
  %v2845 = vsub.s32 %v2844, 2
  %vm2846 = vcmp.gt.s32.totalorder 0, %v2845
  %v2847 = vsel %vm2846, 0, %v2845
  %v2848 = vsub.s32 32, %v2847
  %v2849 = vshll.u32 %v2840, %v2847
  %v2850 = vshrl.u32 %v2832, %v2848
  %v2851 = vor.u32 %v2849, %v2850
  %v2852 = vsub.s32 4294967266, %v2847
  %v2853 = vadd.s32 %v2852, 127
  %v2854 = vshll.u32 %v2853, 23
  %v2855 = vor.u32 4788187, %v2854
  %v2856 = vand.u32 2147483647, %v2855
  %v2858 = vcvt.s32.f32 %v2851
  %v2859 = vmul.f32 %v2858, %v2856
  %v2860 = vxor.u32 %v2859, 2147483648
  %v2861 = vsel %vm2778, %v2860, %v2859
  %v2862 = vsub.s32 4, %v2838
  %v2863 = vsel %vm2778, %v2862, %v2838
  %v2864 = vsel %vm2777, %v500, %v2861
  %v2865 = vsel %vm2777, 0, %v2863
  %v2866 = vcosq.f32.pop %v2864
  %v2867 = vsinq.f32.pop %v2864
  %vm2868 = vweird.f32 %v500
  %v2869 = vand.u32 %v2865, 3
  %vm2870 = vcmp.lt.s32.totalorder %v2869, 2
  %vm2871 = vcmp.eq.s32.totalorder %v2869, 0
  %v2872 = vxor.u32 %v2867, 2147483648
  %v2873 = vsel %vm2871, %v2866, %v2872
  %vm2874 = vcmp.eq.s32.totalorder %v2869, 2
  %v2875 = vxor.u32 %v2866, 2147483648
  %v2876 = vsel %vm2874, %v2875, %v2867
  %v2877 = vsel %vm2870, %v2873, %v2876
  %v2878 = vsel %vm2868, nan, %v2877
  %v2879 = vand.u32 2147483647, %v501
  %vm2880 = vcmp.le.f32.partialorder %v2879, 0.7853982
  %vm2881 = vcmp.lt.s32.totalorder %v501, 0
  %v2882 = vand.u32 %v501, 2139095040
  %v2883 = vshrl.u32 %v2882, 23
  %v2884 = vsub.s32 %v2883, 127
  %v2885 = vand.u32 2147483647, %v501
  %v2886 = vand.u32 %v2885, 8388607
  %v2887 = vor.u32 %v2886, 8388608
  %v2888 = vsub.s32 0, %v2887
  %v2889 = vadd.s32 %v2884, 1
  %vm2890 = vcmp.gt.s32.totalorder %v2889, 0
  %v2891 = vsel %vm2890, %v2889, 0
  %v2892 = vshrl.u32 %v2891, 5
  %v2893 = vand.u32 %v2891, 31
  %v2894 = vsub.s32 32, %v2893
  %v2895 = vshrl.u32 683565275, %v2894
  %v2896 = vshll.u32 683565275, %v2893
  %v2897 = vshrl.u32 2475754826, %v2894
  %v2898 = vor.u32 %v2896, %v2897
  %v2899 = vshll.u32 2475754826, %v2893
  %v2900 = vshrl.u32 2131351028, %v2894
  %v2901 = vor.u32 %v2899, %v2900
  %v2902 = vshll.u32 2131351028, %v2893
  %v2903 = vshrl.u32 2102212464, %v2894
  %v2904 = vor.u32 %v2902, %v2903
  %v2905 = vshll.u32 2102212464, %v2893
  %v2906 = vshrl.u32 920167782, %v2894
  %v2907 = vor.u32 %v2905, %v2906
  %v2908 = vshll.u32 920167782, %v2893
  %v2909 = vshrl.u32 1326507024, %v2894
  %v2910 = vor.u32 %v2908, %v2909
  %vm2911 = vcmp.lt.s32.totalorder %v2892, 1
  %vm2912 = vcmp.lt.s32.totalorder %v2892, 2
  %vm2913 = vcmp.lt.s32.totalorder %v2892, 3
  %vm2914 = vcmp.lt.s32.totalorder %v2892, 4
  %v2915 = vsel %vm2911, %v2895, %v2898
  %v2916 = vsel %vm2914, %v2904, 2102212464
  %v2917 = vsel %vm2913, %v2901, %v2916
  %v2918 = vsel %vm2912, %v2915, %v2917
  %v2919 = vsel %vm2911, %v2898, %v2901
  %v2920 = vsel %vm2914, %v2907, 920167782
  %v2921 = vsel %vm2913, %v2904, %v2920
  %v2922 = vsel %vm2912, %v2919, %v2921
  %v2923 = vsel %vm2911, %v2901, %v2904
  %v2924 = vsel %vm2914, %v2910, 1326507024
  %v2925 = vsel %vm2913, %v2907, %v2924
  %v2926 = vsel %vm2912, %v2923, %v2925
  %v2927 = vshll.u32 %v2887, 8
  %v2928 = vmul.u32.u64.compose %v2927, %v2926
  %v2929 = vextract.low.u32 %v2928
  %v2930 = vextract.high.u32 %v2928
  %v2931 = vmul.u32.u64.compose %v2927, %v2922
  %v2932 = vextract.low.u32 %v2931
  %v2933 = vextract.high.u32 %v2931
  %v2934 = vmul.u32 %v2927, %v2918
  %v2935 = vadd.s32 %v2930, %v2932
  %vm2936 = vc.u32 %v2930, %v2932
  %v2937 = vadd.s32 %v2933, 1
  %v2938 = vsel %vm2936, %v2937, %v2933
  %v2939 = vadd.s32 %v2934, %v2938
  %v2940 = vadd.s32 %v2939, 536870912
  %v2941 = vshrl.u32 %v2940, 30
  %v2942 = vshll.u32 %v2941, 30
  %v2943 = vsub.s32 %v2939, %v2942
  %vm2944 = vcmp.lt.s32.totalorder %v2943, 0
  %v2945 = vsub.s32 0, %v2943
  %v2946 = vsel %vm2944, %v2945, %v2943
  %v2947 = vclz %v2946
  %v2948 = vsub.s32 %v2947, 2
  %vm2949 = vcmp.gt.s32.totalorder 0, %v2948
  %v2950 = vsel %vm2949, 0, %v2948
  %v2951 = vsub.s32 32, %v2950
  %v2952 = vshll.u32 %v2943, %v2950
  %v2953 = vshrl.u32 %v2935, %v2951
  %v2954 = vor.u32 %v2952, %v2953
  %v2955 = vsub.s32 4294967266, %v2950
  %v2956 = vadd.s32 %v2955, 127
  %v2957 = vshll.u32 %v2956, 23
  %v2958 = vor.u32 4788187, %v2957
  %v2959 = vand.u32 2147483647, %v2958
  %v2961 = vcvt.s32.f32 %v2954
  %v2962 = vmul.f32 %v2961, %v2959
  %v2963 = vxor.u32 %v2962, 2147483648
  %v2964 = vsel %vm2881, %v2963, %v2962
  %v2965 = vsub.s32 4, %v2941
  %v2966 = vsel %vm2881, %v2965, %v2941
  %v2967 = vsel %vm2880, %v501, %v2964
  %v2968 = vsel %vm2880, 0, %v2966
  %v2969 = vcosq.f32.pop %v2967
  %v2970 = vsinq.f32.pop %v2967
  %vm2971 = vweird.f32 %v501
  %v2972 = vand.u32 %v2968, 3
  %vm2973 = vcmp.lt.s32.totalorder %v2972, 2
  %vm2974 = vcmp.eq.s32.totalorder %v2972, 0
  %v2975 = vxor.u32 %v2970, 2147483648
  %v2976 = vsel %vm2974, %v2969, %v2975
  %vm2977 = vcmp.eq.s32.totalorder %v2972, 2
  %v2978 = vxor.u32 %v2969, 2147483648
  %v2979 = vsel %vm2977, %v2978, %v2970
  %v2980 = vsel %vm2973, %v2976, %v2979
  %v2981 = vsel %vm2971, nan, %v2980
  %v2982 = vand.u32 2147483647, %v502
  %vm2983 = vcmp.le.f32.partialorder %v2982, 0.7853982
  %vm2984 = vcmp.lt.s32.totalorder %v502, 0
  %v2985 = vand.u32 %v502, 2139095040
  %v2986 = vshrl.u32 %v2985, 23
  %v2987 = vsub.s32 %v2986, 127
  %v2988 = vand.u32 2147483647, %v502
  %v2989 = vand.u32 %v2988, 8388607
  %v2990 = vor.u32 %v2989, 8388608
  %v2991 = vsub.s32 0, %v2990
  %v2992 = vadd.s32 %v2987, 1
  %vm2993 = vcmp.gt.s32.totalorder %v2992, 0
  %v2994 = vsel %vm2993, %v2992, 0
  %v2995 = vshrl.u32 %v2994, 5
  %v2996 = vand.u32 %v2994, 31
  %v2997 = vsub.s32 32, %v2996
  %v2998 = vshrl.u32 683565275, %v2997
  %v2999 = vshll.u32 683565275, %v2996
  %v3000 = vshrl.u32 2475754826, %v2997
  %v3001 = vor.u32 %v2999, %v3000
  %v3002 = vshll.u32 2475754826, %v2996
  %v3003 = vshrl.u32 2131351028, %v2997
  %v3004 = vor.u32 %v3002, %v3003
  %v3005 = vshll.u32 2131351028, %v2996
  %v3006 = vshrl.u32 2102212464, %v2997
  %v3007 = vor.u32 %v3005, %v3006
  %v3008 = vshll.u32 2102212464, %v2996
  %v3009 = vshrl.u32 920167782, %v2997
  %v3010 = vor.u32 %v3008, %v3009
  %v3011 = vshll.u32 920167782, %v2996
  %v3012 = vshrl.u32 1326507024, %v2997
  %v3013 = vor.u32 %v3011, %v3012
  %vm3014 = vcmp.lt.s32.totalorder %v2995, 1
  %vm3015 = vcmp.lt.s32.totalorder %v2995, 2
  %vm3016 = vcmp.lt.s32.totalorder %v2995, 3
  %vm3017 = vcmp.lt.s32.totalorder %v2995, 4
  %v3018 = vsel %vm3014, %v2998, %v3001
  %v3019 = vsel %vm3017, %v3007, 2102212464
  %v3020 = vsel %vm3016, %v3004, %v3019
  %v3021 = vsel %vm3015, %v3018, %v3020
  %v3022 = vsel %vm3014, %v3001, %v3004
  %v3023 = vsel %vm3017, %v3010, 920167782
  %v3024 = vsel %vm3016, %v3007, %v3023
  %v3025 = vsel %vm3015, %v3022, %v3024
  %v3026 = vsel %vm3014, %v3004, %v3007
  %v3027 = vsel %vm3017, %v3013, 1326507024
  %v3028 = vsel %vm3016, %v3010, %v3027
  %v3029 = vsel %vm3015, %v3026, %v3028
  %v3030 = vshll.u32 %v2990, 8
  %v3031 = vmul.u32.u64.compose %v3030, %v3029
  %v3032 = vextract.low.u32 %v3031
  %v3033 = vextract.high.u32 %v3031
  %v3034 = vmul.u32.u64.compose %v3030, %v3025
  %v3035 = vextract.low.u32 %v3034
  %v3036 = vextract.high.u32 %v3034
  %v3037 = vmul.u32 %v3030, %v3021
  %v3038 = vadd.s32 %v3033, %v3035
  %vm3039 = vc.u32 %v3033, %v3035
  %v3040 = vadd.s32 %v3036, 1
  %v3041 = vsel %vm3039, %v3040, %v3036
  %v3042 = vadd.s32 %v3037, %v3041
  %v3043 = vadd.s32 %v3042, 536870912
  %v3044 = vshrl.u32 %v3043, 30
  %v3045 = vshll.u32 %v3044, 30
  %v3046 = vsub.s32 %v3042, %v3045
  %vm3047 = vcmp.lt.s32.totalorder %v3046, 0
  %v3048 = vsub.s32 0, %v3046
  %v3049 = vsel %vm3047, %v3048, %v3046
  %v3050 = vclz %v3049
  %v3051 = vsub.s32 %v3050, 2
  %vm3052 = vcmp.gt.s32.totalorder 0, %v3051
  %v3053 = vsel %vm3052, 0, %v3051
  %v3054 = vsub.s32 32, %v3053
  %v3055 = vshll.u32 %v3046, %v3053
  %v3056 = vshrl.u32 %v3038, %v3054
  %v3057 = vor.u32 %v3055, %v3056
  %v3058 = vsub.s32 4294967266, %v3053
  %v3059 = vadd.s32 %v3058, 127
  %v3060 = vshll.u32 %v3059, 23
  %v3061 = vor.u32 4788187, %v3060
  %v3062 = vand.u32 2147483647, %v3061
  %v3064 = vcvt.s32.f32 %v3057
  %v3065 = vmul.f32 %v3064, %v3062
  %v3066 = vxor.u32 %v3065, 2147483648
  %v3067 = vsel %vm2984, %v3066, %v3065
  %v3068 = vsub.s32 4, %v3044
  %v3069 = vsel %vm2984, %v3068, %v3044
  %v3070 = vsel %vm2983, %v502, %v3067
  %v3071 = vsel %vm2983, 0, %v3069
  %v3072 = vcosq.f32.pop %v3070
  %v3073 = vsinq.f32.pop %v3070
  %vm3074 = vweird.f32 %v502
  %v3075 = vand.u32 %v3071, 3
  %vm3076 = vcmp.lt.s32.totalorder %v3075, 2
  %vm3077 = vcmp.eq.s32.totalorder %v3075, 0
  %v3078 = vxor.u32 %v3073, 2147483648
  %v3079 = vsel %vm3077, %v3072, %v3078
  %vm3080 = vcmp.eq.s32.totalorder %v3075, 2
  %v3081 = vxor.u32 %v3072, 2147483648
  %v3082 = vsel %vm3080, %v3081, %v3073
  %v3083 = vsel %vm3076, %v3079, %v3082
  %v3084 = vsel %vm3074, nan, %v3083
  %v3085 = vand.u32 2147483647, %v503
  %vm3086 = vcmp.le.f32.partialorder %v3085, 0.7853982
  %vm3087 = vcmp.lt.s32.totalorder %v503, 0
  %v3088 = vand.u32 %v503, 2139095040
  %v3089 = vshrl.u32 %v3088, 23
  %v3090 = vsub.s32 %v3089, 127
  %v3091 = vand.u32 2147483647, %v503
  %v3092 = vand.u32 %v3091, 8388607
  %v3093 = vor.u32 %v3092, 8388608
  %v3094 = vsub.s32 0, %v3093
  %v3095 = vadd.s32 %v3090, 1
  %vm3096 = vcmp.gt.s32.totalorder %v3095, 0
  %v3097 = vsel %vm3096, %v3095, 0
  %v3098 = vshrl.u32 %v3097, 5
  %v3099 = vand.u32 %v3097, 31
  %v3100 = vsub.s32 32, %v3099
  %v3101 = vshrl.u32 683565275, %v3100
  %v3102 = vshll.u32 683565275, %v3099
  %v3103 = vshrl.u32 2475754826, %v3100
  %v3104 = vor.u32 %v3102, %v3103
  %v3105 = vshll.u32 2475754826, %v3099
  %v3106 = vshrl.u32 2131351028, %v3100
  %v3107 = vor.u32 %v3105, %v3106
  %v3108 = vshll.u32 2131351028, %v3099
  %v3109 = vshrl.u32 2102212464, %v3100
  %v3110 = vor.u32 %v3108, %v3109
  %v3111 = vshll.u32 2102212464, %v3099
  %v3112 = vshrl.u32 920167782, %v3100
  %v3113 = vor.u32 %v3111, %v3112
  %v3114 = vshll.u32 920167782, %v3099
  %v3115 = vshrl.u32 1326507024, %v3100
  %v3116 = vor.u32 %v3114, %v3115
  %vm3117 = vcmp.lt.s32.totalorder %v3098, 1
  %vm3118 = vcmp.lt.s32.totalorder %v3098, 2
  %vm3119 = vcmp.lt.s32.totalorder %v3098, 3
  %vm3120 = vcmp.lt.s32.totalorder %v3098, 4
  %v3121 = vsel %vm3117, %v3101, %v3104
  %v3122 = vsel %vm3120, %v3110, 2102212464
  %v3123 = vsel %vm3119, %v3107, %v3122
  %v3124 = vsel %vm3118, %v3121, %v3123
  %v3125 = vsel %vm3117, %v3104, %v3107
  %v3126 = vsel %vm3120, %v3113, 920167782
  %v3127 = vsel %vm3119, %v3110, %v3126
  %v3128 = vsel %vm3118, %v3125, %v3127
  %v3129 = vsel %vm3117, %v3107, %v3110
  %v3130 = vsel %vm3120, %v3116, 1326507024
  %v3131 = vsel %vm3119, %v3113, %v3130
  %v3132 = vsel %vm3118, %v3129, %v3131
  %v3133 = vshll.u32 %v3093, 8
  %v3134 = vmul.u32.u64.compose %v3133, %v3132
  %v3135 = vextract.low.u32 %v3134
  %v3136 = vextract.high.u32 %v3134
  %v3137 = vmul.u32.u64.compose %v3133, %v3128
  %v3138 = vextract.low.u32 %v3137
  %v3139 = vextract.high.u32 %v3137
  %v3140 = vmul.u32 %v3133, %v3124
  %v3141 = vadd.s32 %v3136, %v3138
  %vm3142 = vc.u32 %v3136, %v3138
  %v3143 = vadd.s32 %v3139, 1
  %v3144 = vsel %vm3142, %v3143, %v3139
  %v3145 = vadd.s32 %v3140, %v3144
  %v3146 = vadd.s32 %v3145, 536870912
  %v3147 = vshrl.u32 %v3146, 30
  %v3148 = vshll.u32 %v3147, 30
  %v3149 = vsub.s32 %v3145, %v3148
  %vm3150 = vcmp.lt.s32.totalorder %v3149, 0
  %v3151 = vsub.s32 0, %v3149
  %v3152 = vsel %vm3150, %v3151, %v3149
  %v3153 = vclz %v3152
  %v3154 = vsub.s32 %v3153, 2
  %vm3155 = vcmp.gt.s32.totalorder 0, %v3154
  %v3156 = vsel %vm3155, 0, %v3154
  %v3157 = vsub.s32 32, %v3156
  %v3158 = vshll.u32 %v3149, %v3156
  %v3159 = vshrl.u32 %v3141, %v3157
  %v3160 = vor.u32 %v3158, %v3159
  %v3161 = vsub.s32 4294967266, %v3156
  %v3162 = vadd.s32 %v3161, 127
  %v3163 = vshll.u32 %v3162, 23
  %v3164 = vor.u32 4788187, %v3163
  %v3165 = vand.u32 2147483647, %v3164
  %v3167 = vcvt.s32.f32 %v3160
  %v3168 = vmul.f32 %v3167, %v3165
  %v3169 = vxor.u32 %v3168, 2147483648
  %v3170 = vsel %vm3087, %v3169, %v3168
  %v3171 = vsub.s32 4, %v3147
  %v3172 = vsel %vm3087, %v3171, %v3147
  %v3173 = vsel %vm3086, %v503, %v3170
  %v3174 = vsel %vm3086, 0, %v3172
  %v3175 = vcosq.f32.pop %v3173
  %v3176 = vsinq.f32.pop %v3173
  %vm3177 = vweird.f32 %v503
  %v3178 = vand.u32 %v3174, 3
  %vm3179 = vcmp.lt.s32.totalorder %v3178, 2
  %vm3180 = vcmp.eq.s32.totalorder %v3178, 0
  %v3181 = vxor.u32 %v3176, 2147483648
  %v3182 = vsel %vm3180, %v3175, %v3181
  %vm3183 = vcmp.eq.s32.totalorder %v3178, 2
  %v3184 = vxor.u32 %v3175, 2147483648
  %v3185 = vsel %vm3183, %v3184, %v3176
  %v3186 = vsel %vm3179, %v3182, %v3185
  %v3187 = vsel %vm3177, nan, %v3186
  %v3188 = vand.u32 2147483647, %v504
  %vm3189 = vcmp.le.f32.partialorder %v3188, 0.7853982
  %vm3190 = vcmp.lt.s32.totalorder %v504, 0
  %v3191 = vand.u32 %v504, 2139095040
  %v3192 = vshrl.u32 %v3191, 23
  %v3193 = vsub.s32 %v3192, 127
  %v3194 = vand.u32 2147483647, %v504
  %v3195 = vand.u32 %v3194, 8388607
  %v3196 = vor.u32 %v3195, 8388608
  %v3197 = vsub.s32 0, %v3196
  %v3198 = vadd.s32 %v3193, 1
  %vm3199 = vcmp.gt.s32.totalorder %v3198, 0
  %v3200 = vsel %vm3199, %v3198, 0
  %v3201 = vshrl.u32 %v3200, 5
  %v3202 = vand.u32 %v3200, 31
  %v3203 = vsub.s32 32, %v3202
  %v3204 = vshrl.u32 683565275, %v3203
  %v3205 = vshll.u32 683565275, %v3202
  %v3206 = vshrl.u32 2475754826, %v3203
  %v3207 = vor.u32 %v3205, %v3206
  %v3208 = vshll.u32 2475754826, %v3202
  %v3209 = vshrl.u32 2131351028, %v3203
  %v3210 = vor.u32 %v3208, %v3209
  %v3211 = vshll.u32 2131351028, %v3202
  %v3212 = vshrl.u32 2102212464, %v3203
  %v3213 = vor.u32 %v3211, %v3212
  %v3214 = vshll.u32 2102212464, %v3202
  %v3215 = vshrl.u32 920167782, %v3203
  %v3216 = vor.u32 %v3214, %v3215
  %v3217 = vshll.u32 920167782, %v3202
  %v3218 = vshrl.u32 1326507024, %v3203
  %v3219 = vor.u32 %v3217, %v3218
  %vm3220 = vcmp.lt.s32.totalorder %v3201, 1
  %vm3221 = vcmp.lt.s32.totalorder %v3201, 2
  %vm3222 = vcmp.lt.s32.totalorder %v3201, 3
  %vm3223 = vcmp.lt.s32.totalorder %v3201, 4
  %v3224 = vsel %vm3220, %v3204, %v3207
  %v3225 = vsel %vm3223, %v3213, 2102212464
  %v3226 = vsel %vm3222, %v3210, %v3225
  %v3227 = vsel %vm3221, %v3224, %v3226
  %v3228 = vsel %vm3220, %v3207, %v3210
  %v3229 = vsel %vm3223, %v3216, 920167782
  %v3230 = vsel %vm3222, %v3213, %v3229
  %v3231 = vsel %vm3221, %v3228, %v3230
  %v3232 = vsel %vm3220, %v3210, %v3213
  %v3233 = vsel %vm3223, %v3219, 1326507024
  %v3234 = vsel %vm3222, %v3216, %v3233
  %v3235 = vsel %vm3221, %v3232, %v3234
  %v3236 = vshll.u32 %v3196, 8
  %v3237 = vmul.u32.u64.compose %v3236, %v3235
  %v3238 = vextract.low.u32 %v3237
  %v3239 = vextract.high.u32 %v3237
  %v3240 = vmul.u32.u64.compose %v3236, %v3231
  %v3241 = vextract.low.u32 %v3240
  %v3242 = vextract.high.u32 %v3240
  %v3243 = vmul.u32 %v3236, %v3227
  %v3244 = vadd.s32 %v3239, %v3241
  %vm3245 = vc.u32 %v3239, %v3241
  %v3246 = vadd.s32 %v3242, 1
  %v3247 = vsel %vm3245, %v3246, %v3242
  %v3248 = vadd.s32 %v3243, %v3247
  %v3249 = vadd.s32 %v3248, 536870912
  %v3250 = vshrl.u32 %v3249, 30
  %v3251 = vshll.u32 %v3250, 30
  %v3252 = vsub.s32 %v3248, %v3251
  %vm3253 = vcmp.lt.s32.totalorder %v3252, 0
  %v3254 = vsub.s32 0, %v3252
  %v3255 = vsel %vm3253, %v3254, %v3252
  %v3256 = vclz %v3255
  %v3257 = vsub.s32 %v3256, 2
  %vm3258 = vcmp.gt.s32.totalorder 0, %v3257
  %v3259 = vsel %vm3258, 0, %v3257
  %v3260 = vsub.s32 32, %v3259
  %v3261 = vshll.u32 %v3252, %v3259
  %v3262 = vshrl.u32 %v3244, %v3260
  %v3263 = vor.u32 %v3261, %v3262
  %v3264 = vsub.s32 4294967266, %v3259
  %v3265 = vadd.s32 %v3264, 127
  %v3266 = vshll.u32 %v3265, 23
  %v3267 = vor.u32 4788187, %v3266
  %v3268 = vand.u32 2147483647, %v3267
  %v3270 = vcvt.s32.f32 %v3263
  %v3271 = vmul.f32 %v3270, %v3268
  %v3272 = vxor.u32 %v3271, 2147483648
  %v3273 = vsel %vm3190, %v3272, %v3271
  %v3274 = vsub.s32 4, %v3250
  %v3275 = vsel %vm3190, %v3274, %v3250
  %v3276 = vsel %vm3189, %v504, %v3273
  %v3277 = vsel %vm3189, 0, %v3275
  %v3278 = vcosq.f32.pop %v3276
  %v3279 = vsinq.f32.pop %v3276
  %vm3280 = vweird.f32 %v504
  %v3281 = vand.u32 %v3277, 3
  %vm3282 = vcmp.lt.s32.totalorder %v3281, 2
  %vm3283 = vcmp.eq.s32.totalorder %v3281, 0
  %v3284 = vxor.u32 %v3279, 2147483648
  %v3285 = vsel %vm3283, %v3278, %v3284
  %vm3286 = vcmp.eq.s32.totalorder %v3281, 2
  %v3287 = vxor.u32 %v3278, 2147483648
  %v3288 = vsel %vm3286, %v3287, %v3279
  %v3289 = vsel %vm3282, %v3285, %v3288
  %v3290 = vsel %vm3280, nan, %v3289
  %v3291 = vand.u32 2147483647, %v505
  %vm3292 = vcmp.le.f32.partialorder %v3291, 0.7853982
  %vm3293 = vcmp.lt.s32.totalorder %v505, 0
  %v3294 = vand.u32 %v505, 2139095040
  %v3295 = vshrl.u32 %v3294, 23
  %v3296 = vsub.s32 %v3295, 127
  %v3297 = vand.u32 2147483647, %v505
  %v3298 = vand.u32 %v3297, 8388607
  %v3299 = vor.u32 %v3298, 8388608
  %v3300 = vsub.s32 0, %v3299
  %v3301 = vadd.s32 %v3296, 1
  %vm3302 = vcmp.gt.s32.totalorder %v3301, 0
  %v3303 = vsel %vm3302, %v3301, 0
  %v3304 = vshrl.u32 %v3303, 5
  %v3305 = vand.u32 %v3303, 31
  %v3306 = vsub.s32 32, %v3305
  %v3307 = vshrl.u32 683565275, %v3306
  %v3308 = vshll.u32 683565275, %v3305
  %v3309 = vshrl.u32 2475754826, %v3306
  %v3310 = vor.u32 %v3308, %v3309
  %v3311 = vshll.u32 2475754826, %v3305
  %v3312 = vshrl.u32 2131351028, %v3306
  %v3313 = vor.u32 %v3311, %v3312
  %v3314 = vshll.u32 2131351028, %v3305
  %v3315 = vshrl.u32 2102212464, %v3306
  %v3316 = vor.u32 %v3314, %v3315
  %v3317 = vshll.u32 2102212464, %v3305
  %v3318 = vshrl.u32 920167782, %v3306
  %v3319 = vor.u32 %v3317, %v3318
  %v3320 = vshll.u32 920167782, %v3305
  %v3321 = vshrl.u32 1326507024, %v3306
  %v3322 = vor.u32 %v3320, %v3321
  %vm3323 = vcmp.lt.s32.totalorder %v3304, 1
  %vm3324 = vcmp.lt.s32.totalorder %v3304, 2
  %vm3325 = vcmp.lt.s32.totalorder %v3304, 3
  %vm3326 = vcmp.lt.s32.totalorder %v3304, 4
  %v3327 = vsel %vm3323, %v3307, %v3310
  %v3328 = vsel %vm3326, %v3316, 2102212464
  %v3329 = vsel %vm3325, %v3313, %v3328
  %v3330 = vsel %vm3324, %v3327, %v3329
  %v3331 = vsel %vm3323, %v3310, %v3313
  %v3332 = vsel %vm3326, %v3319, 920167782
  %v3333 = vsel %vm3325, %v3316, %v3332
  %v3334 = vsel %vm3324, %v3331, %v3333
  %v3335 = vsel %vm3323, %v3313, %v3316
  %v3336 = vsel %vm3326, %v3322, 1326507024
  %v3337 = vsel %vm3325, %v3319, %v3336
  %v3338 = vsel %vm3324, %v3335, %v3337
  %v3339 = vshll.u32 %v3299, 8
  %v3340 = vmul.u32.u64.compose %v3339, %v3338
  %v3341 = vextract.low.u32 %v3340
  %v3342 = vextract.high.u32 %v3340
  %v3343 = vmul.u32.u64.compose %v3339, %v3334
  %v3344 = vextract.low.u32 %v3343
  %v3345 = vextract.high.u32 %v3343
  %v3346 = vmul.u32 %v3339, %v3330
  %v3347 = vadd.s32 %v3342, %v3344
  %vm3348 = vc.u32 %v3342, %v3344
  %v3349 = vadd.s32 %v3345, 1
  %v3350 = vsel %vm3348, %v3349, %v3345
  %v3351 = vadd.s32 %v3346, %v3350
  %v3352 = vadd.s32 %v3351, 536870912
  %v3353 = vshrl.u32 %v3352, 30
  %v3354 = vshll.u32 %v3353, 30
  %v3355 = vsub.s32 %v3351, %v3354
  %vm3356 = vcmp.lt.s32.totalorder %v3355, 0
  %v3357 = vsub.s32 0, %v3355
  %v3358 = vsel %vm3356, %v3357, %v3355
  %v3359 = vclz %v3358
  %v3360 = vsub.s32 %v3359, 2
  %vm3361 = vcmp.gt.s32.totalorder 0, %v3360
  %v3362 = vsel %vm3361, 0, %v3360
  %v3363 = vsub.s32 32, %v3362
  %v3364 = vshll.u32 %v3355, %v3362
  %v3365 = vshrl.u32 %v3347, %v3363
  %v3366 = vor.u32 %v3364, %v3365
  %v3367 = vsub.s32 4294967266, %v3362
  %v3368 = vadd.s32 %v3367, 127
  %v3369 = vshll.u32 %v3368, 23
  %v3370 = vor.u32 4788187, %v3369
  %v3371 = vand.u32 2147483647, %v3370
  %v3373 = vcvt.s32.f32 %v3366
  %v3374 = vmul.f32 %v3373, %v3371
  %v3375 = vxor.u32 %v3374, 2147483648
  %v3376 = vsel %vm3293, %v3375, %v3374
  %v3377 = vsub.s32 4, %v3353
  %v3378 = vsel %vm3293, %v3377, %v3353
  %v3379 = vsel %vm3292, %v505, %v3376
  %v3380 = vsel %vm3292, 0, %v3378
  %v3381 = vcosq.f32.pop %v3379
  %v3382 = vsinq.f32.pop %v3379
  %vm3383 = vweird.f32 %v505
  %v3384 = vand.u32 %v3380, 3
  %vm3385 = vcmp.lt.s32.totalorder %v3384, 2
  %vm3386 = vcmp.eq.s32.totalorder %v3384, 0
  %v3387 = vxor.u32 %v3382, 2147483648
  %v3388 = vsel %vm3386, %v3381, %v3387
  %vm3389 = vcmp.eq.s32.totalorder %v3384, 2
  %v3390 = vxor.u32 %v3381, 2147483648
  %v3391 = vsel %vm3389, %v3390, %v3382
  %v3392 = vsel %vm3385, %v3388, %v3391
  %v3393 = vsel %vm3383, nan, %v3392
  %v3394 = vand.u32 2147483647, %v506
  %vm3395 = vcmp.le.f32.partialorder %v3394, 0.7853982
  %vm3396 = vcmp.lt.s32.totalorder %v506, 0
  %v3397 = vand.u32 %v506, 2139095040
  %v3398 = vshrl.u32 %v3397, 23
  %v3399 = vsub.s32 %v3398, 127
  %v3400 = vand.u32 2147483647, %v506
  %v3401 = vand.u32 %v3400, 8388607
  %v3402 = vor.u32 %v3401, 8388608
  %v3403 = vsub.s32 0, %v3402
  %v3404 = vadd.s32 %v3399, 1
  %vm3405 = vcmp.gt.s32.totalorder %v3404, 0
  %v3406 = vsel %vm3405, %v3404, 0
  %v3407 = vshrl.u32 %v3406, 5
  %v3408 = vand.u32 %v3406, 31
  %v3409 = vsub.s32 32, %v3408
  %v3410 = vshrl.u32 683565275, %v3409
  %v3411 = vshll.u32 683565275, %v3408
  %v3412 = vshrl.u32 2475754826, %v3409
  %v3413 = vor.u32 %v3411, %v3412
  %v3414 = vshll.u32 2475754826, %v3408
  %v3415 = vshrl.u32 2131351028, %v3409
  %v3416 = vor.u32 %v3414, %v3415
  %v3417 = vshll.u32 2131351028, %v3408
  %v3418 = vshrl.u32 2102212464, %v3409
  %v3419 = vor.u32 %v3417, %v3418
  %v3420 = vshll.u32 2102212464, %v3408
  %v3421 = vshrl.u32 920167782, %v3409
  %v3422 = vor.u32 %v3420, %v3421
  %v3423 = vshll.u32 920167782, %v3408
  %v3424 = vshrl.u32 1326507024, %v3409
  %v3425 = vor.u32 %v3423, %v3424
  %vm3426 = vcmp.lt.s32.totalorder %v3407, 1
  %vm3427 = vcmp.lt.s32.totalorder %v3407, 2
  %vm3428 = vcmp.lt.s32.totalorder %v3407, 3
  %vm3429 = vcmp.lt.s32.totalorder %v3407, 4
  %v3430 = vsel %vm3426, %v3410, %v3413
  %v3431 = vsel %vm3429, %v3419, 2102212464
  %v3432 = vsel %vm3428, %v3416, %v3431
  %v3433 = vsel %vm3427, %v3430, %v3432
  %v3434 = vsel %vm3426, %v3413, %v3416
  %v3435 = vsel %vm3429, %v3422, 920167782
  %v3436 = vsel %vm3428, %v3419, %v3435
  %v3437 = vsel %vm3427, %v3434, %v3436
  %v3438 = vsel %vm3426, %v3416, %v3419
  %v3439 = vsel %vm3429, %v3425, 1326507024
  %v3440 = vsel %vm3428, %v3422, %v3439
  %v3441 = vsel %vm3427, %v3438, %v3440
  %v3442 = vshll.u32 %v3402, 8
  %v3443 = vmul.u32.u64.compose %v3442, %v3441
  %v3444 = vextract.low.u32 %v3443
  %v3445 = vextract.high.u32 %v3443
  %v3446 = vmul.u32.u64.compose %v3442, %v3437
  %v3447 = vextract.low.u32 %v3446
  %v3448 = vextract.high.u32 %v3446
  %v3449 = vmul.u32 %v3442, %v3433
  %v3450 = vadd.s32 %v3445, %v3447
  %vm3451 = vc.u32 %v3445, %v3447
  %v3452 = vadd.s32 %v3448, 1
  %v3453 = vsel %vm3451, %v3452, %v3448
  %v3454 = vadd.s32 %v3449, %v3453
  %v3455 = vadd.s32 %v3454, 536870912
  %v3456 = vshrl.u32 %v3455, 30
  %v3457 = vshll.u32 %v3456, 30
  %v3458 = vsub.s32 %v3454, %v3457
  %vm3459 = vcmp.lt.s32.totalorder %v3458, 0
  %v3460 = vsub.s32 0, %v3458
  %v3461 = vsel %vm3459, %v3460, %v3458
  %v3462 = vclz %v3461
  %v3463 = vsub.s32 %v3462, 2
  %vm3464 = vcmp.gt.s32.totalorder 0, %v3463
  %v3465 = vsel %vm3464, 0, %v3463
  %v3466 = vsub.s32 32, %v3465
  %v3467 = vshll.u32 %v3458, %v3465
  %v3468 = vshrl.u32 %v3450, %v3466
  %v3469 = vor.u32 %v3467, %v3468
  %v3470 = vsub.s32 4294967266, %v3465
  %v3471 = vadd.s32 %v3470, 127
  %v3472 = vshll.u32 %v3471, 23
  %v3473 = vor.u32 4788187, %v3472
  %v3474 = vand.u32 2147483647, %v3473
  %v3476 = vcvt.s32.f32 %v3469
  %v3477 = vmul.f32 %v3476, %v3474
  %v3478 = vxor.u32 %v3477, 2147483648
  %v3479 = vsel %vm3396, %v3478, %v3477
  %v3480 = vsub.s32 4, %v3456
  %v3481 = vsel %vm3396, %v3480, %v3456
  %v3482 = vsel %vm3395, %v506, %v3479
  %v3483 = vsel %vm3395, 0, %v3481
  %v3484 = vcosq.f32.pop %v3482
  %v3485 = vsinq.f32.pop %v3482
  %vm3486 = vweird.f32 %v506
  %v3487 = vand.u32 %v3483, 3
  %vm3488 = vcmp.lt.s32.totalorder %v3487, 2
  %vm3489 = vcmp.eq.s32.totalorder %v3487, 0
  %v3490 = vxor.u32 %v3485, 2147483648
  %v3491 = vsel %vm3489, %v3484, %v3490
  %vm3492 = vcmp.eq.s32.totalorder %v3487, 2
  %v3493 = vxor.u32 %v3484, 2147483648
  %v3494 = vsel %vm3492, %v3493, %v3485
  %v3495 = vsel %vm3488, %v3491, %v3494
  %v3496 = vsel %vm3486, nan, %v3495
  %v3497 = vand.u32 2147483647, %v507
  %vm3498 = vcmp.le.f32.partialorder %v3497, 0.7853982
  %vm3499 = vcmp.lt.s32.totalorder %v507, 0
  %v3500 = vand.u32 %v507, 2139095040
  %v3501 = vshrl.u32 %v3500, 23
  %v3502 = vsub.s32 %v3501, 127
  %v3503 = vand.u32 2147483647, %v507
  %v3504 = vand.u32 %v3503, 8388607
  %v3505 = vor.u32 %v3504, 8388608
  %v3506 = vsub.s32 0, %v3505
  %v3507 = vadd.s32 %v3502, 1
  %vm3508 = vcmp.gt.s32.totalorder %v3507, 0
  %v3509 = vsel %vm3508, %v3507, 0
  %v3510 = vshrl.u32 %v3509, 5
  %v3511 = vand.u32 %v3509, 31
  %v3512 = vsub.s32 32, %v3511
  %v3513 = vshrl.u32 683565275, %v3512
  %v3514 = vshll.u32 683565275, %v3511
  %v3515 = vshrl.u32 2475754826, %v3512
  %v3516 = vor.u32 %v3514, %v3515
  %v3517 = vshll.u32 2475754826, %v3511
  %v3518 = vshrl.u32 2131351028, %v3512
  %v3519 = vor.u32 %v3517, %v3518
  %v3520 = vshll.u32 2131351028, %v3511
  %v3521 = vshrl.u32 2102212464, %v3512
  %v3522 = vor.u32 %v3520, %v3521
  %v3523 = vshll.u32 2102212464, %v3511
  %v3524 = vshrl.u32 920167782, %v3512
  %v3525 = vor.u32 %v3523, %v3524
  %v3526 = vshll.u32 920167782, %v3511
  %v3527 = vshrl.u32 1326507024, %v3512
  %v3528 = vor.u32 %v3526, %v3527
  %vm3529 = vcmp.lt.s32.totalorder %v3510, 1
  %vm3530 = vcmp.lt.s32.totalorder %v3510, 2
  %vm3531 = vcmp.lt.s32.totalorder %v3510, 3
  %vm3532 = vcmp.lt.s32.totalorder %v3510, 4
  %v3533 = vsel %vm3529, %v3513, %v3516
  %v3534 = vsel %vm3532, %v3522, 2102212464
  %v3535 = vsel %vm3531, %v3519, %v3534
  %v3536 = vsel %vm3530, %v3533, %v3535
  %v3537 = vsel %vm3529, %v3516, %v3519
  %v3538 = vsel %vm3532, %v3525, 920167782
  %v3539 = vsel %vm3531, %v3522, %v3538
  %v3540 = vsel %vm3530, %v3537, %v3539
  %v3541 = vsel %vm3529, %v3519, %v3522
  %v3542 = vsel %vm3532, %v3528, 1326507024
  %v3543 = vsel %vm3531, %v3525, %v3542
  %v3544 = vsel %vm3530, %v3541, %v3543
  %v3545 = vshll.u32 %v3505, 8
  %v3546 = vmul.u32.u64.compose %v3545, %v3544
  %v3547 = vextract.low.u32 %v3546
  %v3548 = vextract.high.u32 %v3546
  %v3549 = vmul.u32.u64.compose %v3545, %v3540
  %v3550 = vextract.low.u32 %v3549
  %v3551 = vextract.high.u32 %v3549
  %v3552 = vmul.u32 %v3545, %v3536
  %v3553 = vadd.s32 %v3548, %v3550
  %vm3554 = vc.u32 %v3548, %v3550
  %v3555 = vadd.s32 %v3551, 1
  %v3556 = vsel %vm3554, %v3555, %v3551
  %v3557 = vadd.s32 %v3552, %v3556
  %v3558 = vadd.s32 %v3557, 536870912
  %v3559 = vshrl.u32 %v3558, 30
  %v3560 = vshll.u32 %v3559, 30
  %v3561 = vsub.s32 %v3557, %v3560
  %vm3562 = vcmp.lt.s32.totalorder %v3561, 0
  %v3563 = vsub.s32 0, %v3561
  %v3564 = vsel %vm3562, %v3563, %v3561
  %v3565 = vclz %v3564
  %v3566 = vsub.s32 %v3565, 2
  %vm3567 = vcmp.gt.s32.totalorder 0, %v3566
  %v3568 = vsel %vm3567, 0, %v3566
  %v3569 = vsub.s32 32, %v3568
  %v3570 = vshll.u32 %v3561, %v3568
  %v3571 = vshrl.u32 %v3553, %v3569
  %v3572 = vor.u32 %v3570, %v3571
  %v3573 = vsub.s32 4294967266, %v3568
  %v3574 = vadd.s32 %v3573, 127
  %v3575 = vshll.u32 %v3574, 23
  %v3576 = vor.u32 4788187, %v3575
  %v3577 = vand.u32 2147483647, %v3576
  %v3579 = vcvt.s32.f32 %v3572
  %v3580 = vmul.f32 %v3579, %v3577
  %v3581 = vxor.u32 %v3580, 2147483648
  %v3582 = vsel %vm3499, %v3581, %v3580
  %v3583 = vsub.s32 4, %v3559
  %v3584 = vsel %vm3499, %v3583, %v3559
  %v3585 = vsel %vm3498, %v507, %v3582
  %v3586 = vsel %vm3498, 0, %v3584
  %v3587 = vcosq.f32.pop %v3585
  %v3588 = vsinq.f32.pop %v3585
  %vm3589 = vweird.f32 %v507
  %v3590 = vand.u32 %v3586, 3
  %vm3591 = vcmp.lt.s32.totalorder %v3590, 2
  %vm3592 = vcmp.eq.s32.totalorder %v3590, 0
  %v3593 = vxor.u32 %v3588, 2147483648
  %v3594 = vsel %vm3592, %v3587, %v3593
  %vm3595 = vcmp.eq.s32.totalorder %v3590, 2
  %v3596 = vxor.u32 %v3587, 2147483648
  %v3597 = vsel %vm3595, %v3596, %v3588
  %v3598 = vsel %vm3591, %v3594, %v3597
  %v3599 = vsel %vm3589, nan, %v3598
  %v3600 = vand.u32 2147483647, %v508
  %vm3601 = vcmp.le.f32.partialorder %v3600, 0.7853982
  %vm3602 = vcmp.lt.s32.totalorder %v508, 0
  %v3603 = vand.u32 %v508, 2139095040
  %v3604 = vshrl.u32 %v3603, 23
  %v3605 = vsub.s32 %v3604, 127
  %v3606 = vand.u32 2147483647, %v508
  %v3607 = vand.u32 %v3606, 8388607
  %v3608 = vor.u32 %v3607, 8388608
  %v3609 = vsub.s32 0, %v3608
  %v3610 = vadd.s32 %v3605, 1
  %vm3611 = vcmp.gt.s32.totalorder %v3610, 0
  %v3612 = vsel %vm3611, %v3610, 0
  %v3613 = vshrl.u32 %v3612, 5
  %v3614 = vand.u32 %v3612, 31
  %v3615 = vsub.s32 32, %v3614
  %v3616 = vshrl.u32 683565275, %v3615
  %v3617 = vshll.u32 683565275, %v3614
  %v3618 = vshrl.u32 2475754826, %v3615
  %v3619 = vor.u32 %v3617, %v3618
  %v3620 = vshll.u32 2475754826, %v3614
  %v3621 = vshrl.u32 2131351028, %v3615
  %v3622 = vor.u32 %v3620, %v3621
  %v3623 = vshll.u32 2131351028, %v3614
  %v3624 = vshrl.u32 2102212464, %v3615
  %v3625 = vor.u32 %v3623, %v3624
  %v3626 = vshll.u32 2102212464, %v3614
  %v3627 = vshrl.u32 920167782, %v3615
  %v3628 = vor.u32 %v3626, %v3627
  %v3629 = vshll.u32 920167782, %v3614
  %v3630 = vshrl.u32 1326507024, %v3615
  %v3631 = vor.u32 %v3629, %v3630
  %vm3632 = vcmp.lt.s32.totalorder %v3613, 1
  %vm3633 = vcmp.lt.s32.totalorder %v3613, 2
  %vm3634 = vcmp.lt.s32.totalorder %v3613, 3
  %vm3635 = vcmp.lt.s32.totalorder %v3613, 4
  %v3636 = vsel %vm3632, %v3616, %v3619
  %v3637 = vsel %vm3635, %v3625, 2102212464
  %v3638 = vsel %vm3634, %v3622, %v3637
  %v3639 = vsel %vm3633, %v3636, %v3638
  %v3640 = vsel %vm3632, %v3619, %v3622
  %v3641 = vsel %vm3635, %v3628, 920167782
  %v3642 = vsel %vm3634, %v3625, %v3641
  %v3643 = vsel %vm3633, %v3640, %v3642
  %v3644 = vsel %vm3632, %v3622, %v3625
  %v3645 = vsel %vm3635, %v3631, 1326507024
  %v3646 = vsel %vm3634, %v3628, %v3645
  %v3647 = vsel %vm3633, %v3644, %v3646
  %v3648 = vshll.u32 %v3608, 8
  %v3649 = vmul.u32.u64.compose %v3648, %v3647
  %v3650 = vextract.low.u32 %v3649
  %v3651 = vextract.high.u32 %v3649
  %v3652 = vmul.u32.u64.compose %v3648, %v3643
  %v3653 = vextract.low.u32 %v3652
  %v3654 = vextract.high.u32 %v3652
  %v3655 = vmul.u32 %v3648, %v3639
  %v3656 = vadd.s32 %v3651, %v3653
  %vm3657 = vc.u32 %v3651, %v3653
  %v3658 = vadd.s32 %v3654, 1
  %v3659 = vsel %vm3657, %v3658, %v3654
  %v3660 = vadd.s32 %v3655, %v3659
  %v3661 = vadd.s32 %v3660, 536870912
  %v3662 = vshrl.u32 %v3661, 30
  %v3663 = vshll.u32 %v3662, 30
  %v3664 = vsub.s32 %v3660, %v3663
  %vm3665 = vcmp.lt.s32.totalorder %v3664, 0
  %v3666 = vsub.s32 0, %v3664
  %v3667 = vsel %vm3665, %v3666, %v3664
  %v3668 = vclz %v3667
  %v3669 = vsub.s32 %v3668, 2
  %vm3670 = vcmp.gt.s32.totalorder 0, %v3669
  %v3671 = vsel %vm3670, 0, %v3669
  %v3672 = vsub.s32 32, %v3671
  %v3673 = vshll.u32 %v3664, %v3671
  %v3674 = vshrl.u32 %v3656, %v3672
  %v3675 = vor.u32 %v3673, %v3674
  %v3676 = vsub.s32 4294967266, %v3671
  %v3677 = vadd.s32 %v3676, 127
  %v3678 = vshll.u32 %v3677, 23
  %v3679 = vor.u32 4788187, %v3678
  %v3680 = vand.u32 2147483647, %v3679
  %v3682 = vcvt.s32.f32 %v3675
  %v3683 = vmul.f32 %v3682, %v3680
  %v3684 = vxor.u32 %v3683, 2147483648
  %v3685 = vsel %vm3602, %v3684, %v3683
  %v3686 = vsub.s32 4, %v3662
  %v3687 = vsel %vm3602, %v3686, %v3662
  %v3688 = vsel %vm3601, %v508, %v3685
  %v3689 = vsel %vm3601, 0, %v3687
  %v3690 = vcosq.f32.pop %v3688
  %v3691 = vsinq.f32.pop %v3688
  %vm3692 = vweird.f32 %v508
  %v3693 = vand.u32 %v3689, 3
  %vm3694 = vcmp.lt.s32.totalorder %v3693, 2
  %vm3695 = vcmp.eq.s32.totalorder %v3693, 0
  %v3696 = vxor.u32 %v3691, 2147483648
  %v3697 = vsel %vm3695, %v3690, %v3696
  %vm3698 = vcmp.eq.s32.totalorder %v3693, 2
  %v3699 = vxor.u32 %v3690, 2147483648
  %v3700 = vsel %vm3698, %v3699, %v3691
  %v3701 = vsel %vm3694, %v3697, %v3700
  %v3702 = vsel %vm3692, nan, %v3701
  %v3703 = vand.u32 2147483647, %v509
  %vm3704 = vcmp.le.f32.partialorder %v3703, 0.7853982
  %vm3705 = vcmp.lt.s32.totalorder %v509, 0
  %v3706 = vand.u32 %v509, 2139095040
  %v3707 = vshrl.u32 %v3706, 23
  %v3708 = vsub.s32 %v3707, 127
  %v3709 = vand.u32 2147483647, %v509
  %v3710 = vand.u32 %v3709, 8388607
  %v3711 = vor.u32 %v3710, 8388608
  %v3712 = vsub.s32 0, %v3711
  %v3713 = vadd.s32 %v3708, 1
  %vm3714 = vcmp.gt.s32.totalorder %v3713, 0
  %v3715 = vsel %vm3714, %v3713, 0
  %v3716 = vshrl.u32 %v3715, 5
  %v3717 = vand.u32 %v3715, 31
  %v3718 = vsub.s32 32, %v3717
  %v3719 = vshrl.u32 683565275, %v3718
  %v3720 = vshll.u32 683565275, %v3717
  %v3721 = vshrl.u32 2475754826, %v3718
  %v3722 = vor.u32 %v3720, %v3721
  %v3723 = vshll.u32 2475754826, %v3717
  %v3724 = vshrl.u32 2131351028, %v3718
  %v3725 = vor.u32 %v3723, %v3724
  %v3726 = vshll.u32 2131351028, %v3717
  %v3727 = vshrl.u32 2102212464, %v3718
  %v3728 = vor.u32 %v3726, %v3727
  %v3729 = vshll.u32 2102212464, %v3717
  %v3730 = vshrl.u32 920167782, %v3718
  %v3731 = vor.u32 %v3729, %v3730
  %v3732 = vshll.u32 920167782, %v3717
  %v3733 = vshrl.u32 1326507024, %v3718
  %v3734 = vor.u32 %v3732, %v3733
  %vm3735 = vcmp.lt.s32.totalorder %v3716, 1
  %vm3736 = vcmp.lt.s32.totalorder %v3716, 2
  %vm3737 = vcmp.lt.s32.totalorder %v3716, 3
  %vm3738 = vcmp.lt.s32.totalorder %v3716, 4
  %v3739 = vsel %vm3735, %v3719, %v3722
  %v3740 = vsel %vm3738, %v3728, 2102212464
  %v3741 = vsel %vm3737, %v3725, %v3740
  %v3742 = vsel %vm3736, %v3739, %v3741
  %v3743 = vsel %vm3735, %v3722, %v3725
  %v3744 = vsel %vm3738, %v3731, 920167782
  %v3745 = vsel %vm3737, %v3728, %v3744
  %v3746 = vsel %vm3736, %v3743, %v3745
  %v3747 = vsel %vm3735, %v3725, %v3728
  %v3748 = vsel %vm3738, %v3734, 1326507024
  %v3749 = vsel %vm3737, %v3731, %v3748
  %v3750 = vsel %vm3736, %v3747, %v3749
  %v3751 = vshll.u32 %v3711, 8
  %v3752 = vmul.u32.u64.compose %v3751, %v3750
  %v3753 = vextract.low.u32 %v3752
  %v3754 = vextract.high.u32 %v3752
  %v3755 = vmul.u32.u64.compose %v3751, %v3746
  %v3756 = vextract.low.u32 %v3755
  %v3757 = vextract.high.u32 %v3755
  %v3758 = vmul.u32 %v3751, %v3742
  %v3759 = vadd.s32 %v3754, %v3756
  %vm3760 = vc.u32 %v3754, %v3756
  %v3761 = vadd.s32 %v3757, 1
  %v3762 = vsel %vm3760, %v3761, %v3757
  %v3763 = vadd.s32 %v3758, %v3762
  %v3764 = vadd.s32 %v3763, 536870912
  %v3765 = vshrl.u32 %v3764, 30
  %v3766 = vshll.u32 %v3765, 30
  %v3767 = vsub.s32 %v3763, %v3766
  %vm3768 = vcmp.lt.s32.totalorder %v3767, 0
  %v3769 = vsub.s32 0, %v3767
  %v3770 = vsel %vm3768, %v3769, %v3767
  %v3771 = vclz %v3770
  %v3772 = vsub.s32 %v3771, 2
  %vm3773 = vcmp.gt.s32.totalorder 0, %v3772
  %v3774 = vsel %vm3773, 0, %v3772
  %v3775 = vsub.s32 32, %v3774
  %v3776 = vshll.u32 %v3767, %v3774
  %v3777 = vshrl.u32 %v3759, %v3775
  %v3778 = vor.u32 %v3776, %v3777
  %v3779 = vsub.s32 4294967266, %v3774
  %v3780 = vadd.s32 %v3779, 127
  %v3781 = vshll.u32 %v3780, 23
  %v3782 = vor.u32 4788187, %v3781
  %v3783 = vand.u32 2147483647, %v3782
  %v3785 = vcvt.s32.f32 %v3778
  %v3786 = vmul.f32 %v3785, %v3783
  %v3787 = vxor.u32 %v3786, 2147483648
  %v3788 = vsel %vm3705, %v3787, %v3786
  %v3789 = vsub.s32 4, %v3765
  %v3790 = vsel %vm3705, %v3789, %v3765
  %v3791 = vsel %vm3704, %v509, %v3788
  %v3792 = vsel %vm3704, 0, %v3790
  %v3793 = vcosq.f32.pop %v3791
  %v3794 = vsinq.f32.pop %v3791
  %vm3795 = vweird.f32 %v509
  %v3796 = vand.u32 %v3792, 3
  %vm3797 = vcmp.lt.s32.totalorder %v3796, 2
  %vm3798 = vcmp.eq.s32.totalorder %v3796, 0
  %v3799 = vxor.u32 %v3794, 2147483648
  %v3800 = vsel %vm3798, %v3793, %v3799
  %vm3801 = vcmp.eq.s32.totalorder %v3796, 2
  %v3802 = vxor.u32 %v3793, 2147483648
  %v3803 = vsel %vm3801, %v3802, %v3794
  %v3804 = vsel %vm3797, %v3800, %v3803
  %v3805 = vsel %vm3795, nan, %v3804
  %vm3806 = vcmask 523264
  %3807 = vst.msk [vmem:[%s3] sm:$0xff] %vm3806, %v612
  %3808 = vst.msk [vmem:[%s3 + $0x8] sm:$0xff] %vm3806, %v715
  %3809 = vst.msk [vmem:[%s3 + $0x10] sm:$0xff] %vm3806, %v818
  %3810 = vst.msk [vmem:[%s3 + $0x18] sm:$0xff] %vm3806, %v921
  %3811 = vst.msk [vmem:[%s3 + $0x20] sm:$0xff] %vm3806, %v1024
  %3812 = vst.msk [vmem:[%s3 + $0x28] sm:$0xff] %vm3806, %v1127
  %3813 = vst.msk [vmem:[%s3 + $0x30] sm:$0xff] %vm3806, %v1230
  %3814 = vst.msk [vmem:[%s3 + $0x38] sm:$0xff] %vm3806, %v1333
  %3815 = vst.msk [vmem:[%s3 + $0x40] sm:$0xff] %vm3806, %v1436
  %3816 = vst.msk [vmem:[%s3 + $0x48] sm:$0xff] %vm3806, %v1539
  %3817 = vst.msk [vmem:[%s3 + $0x50] sm:$0xff] %vm3806, %v1642
  %3818 = vst.msk [vmem:[%s3 + $0x58] sm:$0xff] %vm3806, %v1745
  %3819 = vst.msk [vmem:[%s3 + $0x60] sm:$0xff] %vm3806, %v1848
  %3820 = vst.msk [vmem:[%s3 + $0x68] sm:$0xff] %vm3806, %v1951
  %3821 = vst.msk [vmem:[%s3 + $0x70] sm:$0xff] %vm3806, %v2054
  %3822 = vst.msk [vmem:[%s3 + $0x78] sm:$0xff] %vm3806, %v2157
  %3823 = vst.msk [vmem:[%s3 + $0x80] sm:$0xff] %vm3806, %v2260
  %3824 = vst.msk [vmem:[%s3 + $0x88] sm:$0xff] %vm3806, %v2363
  %3825 = vst.msk [vmem:[%s3 + $0x90] sm:$0xff] %vm3806, %v2466
  %3826 = vst.msk [vmem:[%s3 + $0x98] sm:$0xff] %vm3806, %v2569
  %3827 = vst.msk [vmem:[%s3 + $0xa0] sm:$0xff] %vm3806, %v2672
  %3828 = vst.msk [vmem:[%s3 + $0xa8] sm:$0xff] %vm3806, %v2775
  %3829 = vst.msk [vmem:[%s3 + $0xb0] sm:$0xff] %vm3806, %v2878
  %3830 = vst.msk [vmem:[%s3 + $0xb8] sm:$0xff] %vm3806, %v2981
  %3831 = vst.msk [vmem:[%s3 + $0xc0] sm:$0xff] %vm3806, %v3084
  %3832 = vst.msk [vmem:[%s3 + $0xc8] sm:$0xff] %vm3806, %v3187
  %3833 = vst.msk [vmem:[%s3 + $0xd0] sm:$0xff] %vm3806, %v3290
  %3834 = vst.msk [vmem:[%s3 + $0xd8] sm:$0xff] %vm3806, %v3393
  %3835 = vst.msk [vmem:[%s3 + $0xe0] sm:$0xff] %vm3806, %v3496
  %3836 = vst.msk [vmem:[%s3 + $0xe8] sm:$0xff] %vm3806, %v3599
  %3837 = vst.msk [vmem:[%s3 + $0xf0] sm:$0xff] %vm3806, %v3702
  %3838 = vst.msk [vmem:[%s3 + $0xf8] sm:$0xff] %vm3806, %v3805
  // Predicated region
  $region14: #{gp_forward.2} parent=0 // pred_check
    _
  $region15: #{gp_forward.2} parent=0 // pred_check_branch
    %3840 = sbr.rel (0) target = $region17
  $region16: #{gp_forward.2} parent=0 // pred_region
    _
  $region17: #{gp_forward.2} parent=0 // pred_fallthru
    _
  // Predicated region
  $region18: #{gp_forward.2} parent=0 // pred_check
    _
  $region19: #{gp_forward.2} parent=0 // pred_check_branch
    %3842 = sbr.rel (0) target = $region21
  $region20: #{gp_forward.2} parent=0 // pred_region
    _
  $region21: #{gp_forward.2} parent=0 // pred_fallthru
    _

// kernel: gp_forward.3
$region0: #{gp_forward.3}
  #allocation0 [shape = 'u32[]', space=smem, size = 0x4, offset = 0x4, fixed_abs, tag = 'smem constant byte address 0x4 - core index']
  #allocation1 [shape = 'u32[144,128]{1,0:T(1,128)}', space=vmem, size = 0x12000, scoped, tag = 'internal scratch']
  %s0 = inlined_call_operand.hbm [shape: f32[512,256], index: 0, kind: input, shape index: {}]
  %s1 = inlined_call_operand.vmem [shape: f32[256,64], index: 1, kind: input, shape index: {}]
  %s2 = inlined_call_operand.hbm [shape: f32[512,64], index: 2, kind: output, shape index: {}]
  %s3 = sld [smem:[#allocation0]]
  $region22: #{gp_forward.3} parent=0
    _
  %s5 = ssub.s32 1, %s3
  %s6 = scalar_select 0, %s5, %s3
  $region1: #{gp_forward.3} parent=0
    #allocation2 [shape = 'u8[524288]{0}', space=vmem, size = 0x80000, scoped, tag = 'input window, operand 0, single buffered']
    #allocation3 [shape = 's32[1]{0}', space=sflag, size = 0x4, scoped, tag = 'scoped memory for gp_forward.3']
    #allocation4 [shape = 's32[1]{0}', space=sflag, size = 0x4, scoped, tag = 'scoped memory for gp_forward.3']
    #allocation5 [shape = 'u8[262144]{0}', space=vmem, size = 0x40000, scoped, tag = 'output window, operand 0, single buffered']
    %7 = vsyncpa [#allocation3], 0
    %8 = vsyncpa [#allocation4], 0
    // Predicated region
    $region2: #{gp_forward.3} parent=1 // pred_check
      _
    $region3: #{gp_forward.3} parent=1 // pred_check_branch
      %10 = sbr.rel (0) target = $region5
    $region4: #{gp_forward.3} parent=1 // pred_region
      %s12 = ssub.s32 16384, 16384
      %13 = vsyncadd [#allocation3], %s12
      %s14 = sshll.u32 [#allocation2], 4
      %s15 = int_to_ptr.vmem [resolvable:$true] %s14
      %20 = dma.hbm_to_vmem [thread:$0]  %s0, 16384, %s15, [#allocation3], 256, 256, 16
    $region5: #{gp_forward.3} parent=1 // pred_fallthru
      _
    // Predicated region
    $region6: #{gp_forward.3} parent=1 // pred_check
      _
    $region7: #{gp_forward.3} parent=1 // pred_check_branch
      %22 = sbr.rel (0) target = $region9
    $region8: #{gp_forward.3} parent=1 // pred_region
      _
    $region9: #{gp_forward.3} parent=1 // pred_fallthru
      _
    // Predicated region
    $region10: #{gp_forward.3} parent=1 // pred_check
      _
    $region11: #{gp_forward.3} parent=1 // pred_check_branch
      %24 = sbr.rel (0) target = $region13
    $region12: #{gp_forward.3} parent=1 // pred_region
      %25 = dma.done [#allocation3], 16384
    $region13: #{gp_forward.3} parent=1 // pred_fallthru
      _
    %v26 = vld [vmem:[#allocation2] sm:$0xff]
    %v27 = vld [vmem:[#allocation2 + $0x8] sm:$0xff]
    %v28 = vld [vmem:[#allocation2 + $0x10] sm:$0xff]
    %v29 = vld [vmem:[#allocation2 + $0x18] sm:$0xff]
    %v30 = vld [vmem:[#allocation2 + $0x20] sm:$0xff]
    %v31 = vld [vmem:[#allocation2 + $0x28] sm:$0xff]
    %v32 = vld [vmem:[#allocation2 + $0x30] sm:$0xff]
    %v33 = vld [vmem:[#allocation2 + $0x38] sm:$0xff]
    %v34 = vld [vmem:[#allocation2 + $0x40] sm:$0xff]
    %v35 = vld [vmem:[#allocation2 + $0x48] sm:$0xff]
    %v36 = vld [vmem:[#allocation2 + $0x50] sm:$0xff]
    %v37 = vld [vmem:[#allocation2 + $0x58] sm:$0xff]
    %v38 = vld [vmem:[#allocation2 + $0x60] sm:$0xff]
    %v39 = vld [vmem:[#allocation2 + $0x68] sm:$0xff]
    %v40 = vld [vmem:[#allocation2 + $0x70] sm:$0xff]
    %v41 = vld [vmem:[#allocation2 + $0x78] sm:$0xff]
    %v42 = vld [vmem:[#allocation2 + $0x80] sm:$0xff]
    %v43 = vld [vmem:[#allocation2 + $0x88] sm:$0xff]
    %v44 = vld [vmem:[#allocation2 + $0x90] sm:$0xff]
    %v45 = vld [vmem:[#allocation2 + $0x98] sm:$0xff]
    %v46 = vld [vmem:[#allocation2 + $0xa0] sm:$0xff]
    %v47 = vld [vmem:[#allocation2 + $0xa8] sm:$0xff]
    %v48 = vld [vmem:[#allocation2 + $0xb0] sm:$0xff]
    %v49 = vld [vmem:[#allocation2 + $0xb8] sm:$0xff]
    %v50 = vld [vmem:[#allocation2 + $0xc0] sm:$0xff]
    %v51 = vld [vmem:[#allocation2 + $0xc8] sm:$0xff]
    %v52 = vld [vmem:[#allocation2 + $0xd0] sm:$0xff]
    %v53 = vld [vmem:[#allocation2 + $0xd8] sm:$0xff]
    %v54 = vld [vmem:[#allocation2 + $0xe0] sm:$0xff]
    %v55 = vld [vmem:[#allocation2 + $0xe8] sm:$0xff]
    %v56 = vld [vmem:[#allocation2 + $0xf0] sm:$0xff]
    %v57 = vld [vmem:[#allocation2 + $0xf8] sm:$0xff]
    %v58 = vld [vmem:[#allocation2 + $0x100] sm:$0xff]
    %v59 = vld [vmem:[#allocation2 + $0x108] sm:$0xff]
    %v60 = vld [vmem:[#allocation2 + $0x110] sm:$0xff]
    %v61 = vld [vmem:[#allocation2 + $0x118] sm:$0xff]
    %v62 = vld [vmem:[#allocation2 + $0x120] sm:$0xff]
    %v63 = vld [vmem:[#allocation2 + $0x128] sm:$0xff]
    %v64 = vld [vmem:[#allocation2 + $0x130] sm:$0xff]
    %v65 = vld [vmem:[#allocation2 + $0x138] sm:$0xff]
    %v66 = vld [vmem:[#allocation2 + $0x140] sm:$0xff]
    %v67 = vld [vmem:[#allocation2 + $0x148] sm:$0xff]
    %v68 = vld [vmem:[#allocation2 + $0x150] sm:$0xff]
    %v69 = vld [vmem:[#allocation2 + $0x158] sm:$0xff]
    %v70 = vld [vmem:[#allocation2 + $0x160] sm:$0xff]
    %v71 = vld [vmem:[#allocation2 + $0x168] sm:$0xff]
    %v72 = vld [vmem:[#allocation2 + $0x170] sm:$0xff]
    %v73 = vld [vmem:[#allocation2 + $0x178] sm:$0xff]
    %v74 = vld [vmem:[#allocation2 + $0x180] sm:$0xff]
    %v75 = vld [vmem:[#allocation2 + $0x188] sm:$0xff]
    %v76 = vld [vmem:[#allocation2 + $0x190] sm:$0xff]
    %v77 = vld [vmem:[#allocation2 + $0x198] sm:$0xff]
    %v78 = vld [vmem:[#allocation2 + $0x1a0] sm:$0xff]
    %v79 = vld [vmem:[#allocation2 + $0x1a8] sm:$0xff]
    %v80 = vld [vmem:[#allocation2 + $0x1b0] sm:$0xff]
    %v81 = vld [vmem:[#allocation2 + $0x1b8] sm:$0xff]
    %v82 = vld [vmem:[#allocation2 + $0x1c0] sm:$0xff]
    %v83 = vld [vmem:[#allocation2 + $0x1c8] sm:$0xff]
    %v84 = vld [vmem:[#allocation2 + $0x1d0] sm:$0xff]
    %v85 = vld [vmem:[#allocation2 + $0x1d8] sm:$0xff]
    %v86 = vld [vmem:[#allocation2 + $0x1e0] sm:$0xff]
    %v87 = vld [vmem:[#allocation2 + $0x1e8] sm:$0xff]
    %v88 = vld [vmem:[#allocation2 + $0x1f0] sm:$0xff]
    %v89 = vld [vmem:[#allocation2 + $0x1f8] sm:$0xff]
    %v90 = vld [vmem:[#allocation2 + $0x200] sm:$0xff]
    %v91 = vld [vmem:[#allocation2 + $0x208] sm:$0xff]
    %v92 = vld [vmem:[#allocation2 + $0x210] sm:$0xff]
    %v93 = vld [vmem:[#allocation2 + $0x218] sm:$0xff]
    %v94 = vld [vmem:[#allocation2 + $0x220] sm:$0xff]
    %v95 = vld [vmem:[#allocation2 + $0x228] sm:$0xff]
    %v96 = vld [vmem:[#allocation2 + $0x230] sm:$0xff]
    %v97 = vld [vmem:[#allocation2 + $0x238] sm:$0xff]
    %v98 = vld [vmem:[#allocation2 + $0x240] sm:$0xff]
    %v99 = vld [vmem:[#allocation2 + $0x248] sm:$0xff]
    %v100 = vld [vmem:[#allocation2 + $0x250] sm:$0xff]
    %v101 = vld [vmem:[#allocation2 + $0x258] sm:$0xff]
    %v102 = vld [vmem:[#allocation2 + $0x260] sm:$0xff]
    %v103 = vld [vmem:[#allocation2 + $0x268] sm:$0xff]
    %v104 = vld [vmem:[#allocation2 + $0x270] sm:$0xff]
    %v105 = vld [vmem:[#allocation2 + $0x278] sm:$0xff]
    %v106 = vld [vmem:[#allocation2 + $0x280] sm:$0xff]
    %v107 = vld [vmem:[#allocation2 + $0x288] sm:$0xff]
    %v108 = vld [vmem:[#allocation2 + $0x290] sm:$0xff]
    %v109 = vld [vmem:[#allocation2 + $0x298] sm:$0xff]
    %v110 = vld [vmem:[#allocation2 + $0x2a0] sm:$0xff]
    %v111 = vld [vmem:[#allocation2 + $0x2a8] sm:$0xff]
    %v112 = vld [vmem:[#allocation2 + $0x2b0] sm:$0xff]
    %v113 = vld [vmem:[#allocation2 + $0x2b8] sm:$0xff]
    %v114 = vld [vmem:[#allocation2 + $0x2c0] sm:$0xff]
    %v115 = vld [vmem:[#allocation2 + $0x2c8] sm:$0xff]
    %v116 = vld [vmem:[#allocation2 + $0x2d0] sm:$0xff]
    %v117 = vld [vmem:[#allocation2 + $0x2d8] sm:$0xff]
    %v118 = vld [vmem:[#allocation2 + $0x2e0] sm:$0xff]
    %v119 = vld [vmem:[#allocation2 + $0x2e8] sm:$0xff]
    %v120 = vld [vmem:[#allocation2 + $0x2f0] sm:$0xff]
    %v121 = vld [vmem:[#allocation2 + $0x2f8] sm:$0xff]
    %v122 = vld [vmem:[#allocation2 + $0x300] sm:$0xff]
    %v123 = vld [vmem:[#allocation2 + $0x308] sm:$0xff]
    %v124 = vld [vmem:[#allocation2 + $0x310] sm:$0xff]
    %v125 = vld [vmem:[#allocation2 + $0x318] sm:$0xff]
    %v126 = vld [vmem:[#allocation2 + $0x320] sm:$0xff]
    %v127 = vld [vmem:[#allocation2 + $0x328] sm:$0xff]
    %v128 = vld [vmem:[#allocation2 + $0x330] sm:$0xff]
    %v129 = vld [vmem:[#allocation2 + $0x338] sm:$0xff]
    %v130 = vld [vmem:[#allocation2 + $0x340] sm:$0xff]
    %v131 = vld [vmem:[#allocation2 + $0x348] sm:$0xff]
    %v132 = vld [vmem:[#allocation2 + $0x350] sm:$0xff]
    %v133 = vld [vmem:[#allocation2 + $0x358] sm:$0xff]
    %v134 = vld [vmem:[#allocation2 + $0x360] sm:$0xff]
    %v135 = vld [vmem:[#allocation2 + $0x368] sm:$0xff]
    %v136 = vld [vmem:[#allocation2 + $0x370] sm:$0xff]
    %v137 = vld [vmem:[#allocation2 + $0x378] sm:$0xff]
    %v138 = vld [vmem:[#allocation2 + $0x380] sm:$0xff]
    %v139 = vld [vmem:[#allocation2 + $0x388] sm:$0xff]
    %v140 = vld [vmem:[#allocation2 + $0x390] sm:$0xff]
    %v141 = vld [vmem:[#allocation2 + $0x398] sm:$0xff]
    %v142 = vld [vmem:[#allocation2 + $0x3a0] sm:$0xff]
    %v143 = vld [vmem:[#allocation2 + $0x3a8] sm:$0xff]
    %v144 = vld [vmem:[#allocation2 + $0x3b0] sm:$0xff]
    %v145 = vld [vmem:[#allocation2 + $0x3b8] sm:$0xff]
    %v146 = vld [vmem:[#allocation2 + $0x3c0] sm:$0xff]
    %v147 = vld [vmem:[#allocation2 + $0x3c8] sm:$0xff]
    %v148 = vld [vmem:[#allocation2 + $0x3d0] sm:$0xff]
    %v149 = vld [vmem:[#allocation2 + $0x3d8] sm:$0xff]
    %v150 = vld [vmem:[#allocation2 + $0x3e0] sm:$0xff]
    %v151 = vld [vmem:[#allocation2 + $0x3e8] sm:$0xff]
    %v152 = vld [vmem:[#allocation2 + $0x3f0] sm:$0xff]
    %v153 = vld [vmem:[#allocation2 + $0x3f8] sm:$0xff]
    %v154 = vmax.f32 %v26, %v27
    %155 = vmax.xlane.f32.xlu0 %v154
    %v156 = vpop.xlane.xlu0 %155
    %v157 = vmax.f32 %v28, %v29
    %158 = vmax.xlane.f32.xlu0 %v157
    %v159 = vpop.xlane.xlu0 %158
    %v160 = vmax.f32 %v30, %v31
    %161 = vmax.xlane.f32.xlu0 %v160
    %v162 = vpop.xlane.xlu0 %161
    %v163 = vmax.f32 %v32, %v33
    %164 = vmax.xlane.f32.xlu0 %v163
    %v165 = vpop.xlane.xlu0 %164
    %v166 = vmax.f32 %v34, %v35
    %167 = vmax.xlane.f32.xlu0 %v166
    %v168 = vpop.xlane.xlu0 %167
    %v169 = vmax.f32 %v36, %v37
    %170 = vmax.xlane.f32.xlu0 %v169
    %v171 = vpop.xlane.xlu0 %170
    %v172 = vmax.f32 %v38, %v39
    %173 = vmax.xlane.f32.xlu0 %v172
    %v174 = vpop.xlane.xlu0 %173
    %v175 = vmax.f32 %v40, %v41
    %176 = vmax.xlane.f32.xlu0 %v175
    %v177 = vpop.xlane.xlu0 %176
    %v178 = vmax.f32 %v42, %v43
    %179 = vmax.xlane.f32.xlu0 %v178
    %v180 = vpop.xlane.xlu0 %179
    %v181 = vmax.f32 %v44, %v45
    %182 = vmax.xlane.f32.xlu0 %v181
    %v183 = vpop.xlane.xlu0 %182
    %v184 = vmax.f32 %v46, %v47
    %185 = vmax.xlane.f32.xlu0 %v184
    %v186 = vpop.xlane.xlu0 %185
    %v187 = vmax.f32 %v48, %v49
    %188 = vmax.xlane.f32.xlu0 %v187
    %v189 = vpop.xlane.xlu0 %188
    %v190 = vmax.f32 %v50, %v51
    %191 = vmax.xlane.f32.xlu0 %v190
    %v192 = vpop.xlane.xlu0 %191
    %v193 = vmax.f32 %v52, %v53
    %194 = vmax.xlane.f32.xlu0 %v193
    %v195 = vpop.xlane.xlu0 %194
    %v196 = vmax.f32 %v54, %v55
    %197 = vmax.xlane.f32.xlu0 %v196
    %v198 = vpop.xlane.xlu0 %197
    %v199 = vmax.f32 %v56, %v57
    %200 = vmax.xlane.f32.xlu0 %v199
    %v201 = vpop.xlane.xlu0 %200
    %v202 = vmax.f32 %v58, %v59
    %203 = vmax.xlane.f32.xlu0 %v202
    %v204 = vpop.xlane.xlu0 %203
    %v205 = vmax.f32 %v60, %v61
    %206 = vmax.xlane.f32.xlu0 %v205
    %v207 = vpop.xlane.xlu0 %206
    %v208 = vmax.f32 %v62, %v63
    %209 = vmax.xlane.f32.xlu0 %v208
    %v210 = vpop.xlane.xlu0 %209
    %v211 = vmax.f32 %v64, %v65
    %212 = vmax.xlane.f32.xlu0 %v211
    %v213 = vpop.xlane.xlu0 %212
    %v214 = vmax.f32 %v66, %v67
    %215 = vmax.xlane.f32.xlu0 %v214
    %v216 = vpop.xlane.xlu0 %215
    %v217 = vmax.f32 %v68, %v69
    %218 = vmax.xlane.f32.xlu0 %v217
    %v219 = vpop.xlane.xlu0 %218
    %v220 = vmax.f32 %v70, %v71
    %221 = vmax.xlane.f32.xlu0 %v220
    %v222 = vpop.xlane.xlu0 %221
    %v223 = vmax.f32 %v72, %v73
    %224 = vmax.xlane.f32.xlu0 %v223
    %v225 = vpop.xlane.xlu0 %224
    %v226 = vmax.f32 %v74, %v75
    %227 = vmax.xlane.f32.xlu0 %v226
    %v228 = vpop.xlane.xlu0 %227
    %v229 = vmax.f32 %v76, %v77
    %230 = vmax.xlane.f32.xlu0 %v229
    %v231 = vpop.xlane.xlu0 %230
    %v232 = vmax.f32 %v78, %v79
    %233 = vmax.xlane.f32.xlu0 %v232
    %v234 = vpop.xlane.xlu0 %233
    %v235 = vmax.f32 %v80, %v81
    %236 = vmax.xlane.f32.xlu0 %v235
    %v237 = vpop.xlane.xlu0 %236
    %v238 = vmax.f32 %v82, %v83
    %239 = vmax.xlane.f32.xlu0 %v238
    %v240 = vpop.xlane.xlu0 %239
    %v241 = vmax.f32 %v84, %v85
    %242 = vmax.xlane.f32.xlu0 %v241
    %v243 = vpop.xlane.xlu0 %242
    %v244 = vmax.f32 %v86, %v87
    %245 = vmax.xlane.f32.xlu0 %v244
    %v246 = vpop.xlane.xlu0 %245
    %v247 = vmax.f32 %v88, %v89
    %248 = vmax.xlane.f32.xlu0 %v247
    %v249 = vpop.xlane.xlu0 %248
    %v250 = vmax.f32 %v90, %v91
    %251 = vmax.xlane.f32.xlu0 %v250
    %v252 = vpop.xlane.xlu0 %251
    %v253 = vmax.f32 %v92, %v93
    %254 = vmax.xlane.f32.xlu0 %v253
    %v255 = vpop.xlane.xlu0 %254
    %v256 = vmax.f32 %v94, %v95
    %257 = vmax.xlane.f32.xlu0 %v256
    %v258 = vpop.xlane.xlu0 %257
    %v259 = vmax.f32 %v96, %v97
    %260 = vmax.xlane.f32.xlu0 %v259
    %v261 = vpop.xlane.xlu0 %260
    %v262 = vmax.f32 %v98, %v99
    %263 = vmax.xlane.f32.xlu0 %v262
    %v264 = vpop.xlane.xlu0 %263
    %v265 = vmax.f32 %v100, %v101
    %266 = vmax.xlane.f32.xlu0 %v265
    %v267 = vpop.xlane.xlu0 %266
    %v268 = vmax.f32 %v102, %v103
    %269 = vmax.xlane.f32.xlu0 %v268
    %v270 = vpop.xlane.xlu0 %269
    %v271 = vmax.f32 %v104, %v105
    %272 = vmax.xlane.f32.xlu0 %v271
    %v273 = vpop.xlane.xlu0 %272
    %v274 = vmax.f32 %v106, %v107
    %275 = vmax.xlane.f32.xlu0 %v274
    %v276 = vpop.xlane.xlu0 %275
    %v277 = vmax.f32 %v108, %v109
    %278 = vmax.xlane.f32.xlu0 %v277
    %v279 = vpop.xlane.xlu0 %278
    %v280 = vmax.f32 %v110, %v111
    %281 = vmax.xlane.f32.xlu0 %v280
    %v282 = vpop.xlane.xlu0 %281
    %v283 = vmax.f32 %v112, %v113
    %284 = vmax.xlane.f32.xlu0 %v283
    %v285 = vpop.xlane.xlu0 %284
    %v286 = vmax.f32 %v114, %v115
    %287 = vmax.xlane.f32.xlu0 %v286
    %v288 = vpop.xlane.xlu0 %287
    %v289 = vmax.f32 %v116, %v117
    %290 = vmax.xlane.f32.xlu0 %v289
    %v291 = vpop.xlane.xlu0 %290
    %v292 = vmax.f32 %v118, %v119
    %293 = vmax.xlane.f32.xlu0 %v292
    %v294 = vpop.xlane.xlu0 %293
    %v295 = vmax.f32 %v120, %v121
    %296 = vmax.xlane.f32.xlu0 %v295
    %v297 = vpop.xlane.xlu0 %296
    %v298 = vmax.f32 %v122, %v123
    %299 = vmax.xlane.f32.xlu0 %v298
    %v300 = vpop.xlane.xlu0 %299
    %v301 = vmax.f32 %v124, %v125
    %302 = vmax.xlane.f32.xlu0 %v301
    %v303 = vpop.xlane.xlu0 %302
    %v304 = vmax.f32 %v126, %v127
    %305 = vmax.xlane.f32.xlu0 %v304
    %v306 = vpop.xlane.xlu0 %305
    %v307 = vmax.f32 %v128, %v129
    %308 = vmax.xlane.f32.xlu0 %v307
    %v309 = vpop.xlane.xlu0 %308
    %v310 = vmax.f32 %v130, %v131
    %311 = vmax.xlane.f32.xlu0 %v310
    %v312 = vpop.xlane.xlu0 %311
    %v313 = vmax.f32 %v132, %v133
    %314 = vmax.xlane.f32.xlu0 %v313
    %v315 = vpop.xlane.xlu0 %314
    %v316 = vmax.f32 %v134, %v135
    %317 = vmax.xlane.f32.xlu0 %v316
    %v318 = vpop.xlane.xlu0 %317
    %v319 = vmax.f32 %v136, %v137
    %320 = vmax.xlane.f32.xlu0 %v319
    %v321 = vpop.xlane.xlu0 %320
    %v322 = vmax.f32 %v138, %v139
    %323 = vmax.xlane.f32.xlu0 %v322
    %v324 = vpop.xlane.xlu0 %323
    %v325 = vmax.f32 %v140, %v141
    %326 = vmax.xlane.f32.xlu0 %v325
    %v327 = vpop.xlane.xlu0 %326
    %v328 = vmax.f32 %v142, %v143
    %329 = vmax.xlane.f32.xlu0 %v328
    %v330 = vpop.xlane.xlu0 %329
    %v331 = vmax.f32 %v144, %v145
    %332 = vmax.xlane.f32.xlu0 %v331
    %v333 = vpop.xlane.xlu0 %332
    %v334 = vmax.f32 %v146, %v147
    %335 = vmax.xlane.f32.xlu0 %v334
    %v336 = vpop.xlane.xlu0 %335
    %v337 = vmax.f32 %v148, %v149
    %338 = vmax.xlane.f32.xlu0 %v337
    %v339 = vpop.xlane.xlu0 %338
    %v340 = vmax.f32 %v150, %v151
    %341 = vmax.xlane.f32.xlu0 %v340
    %v342 = vpop.xlane.xlu0 %341
    %v343 = vmax.f32 %v152, %v153
    %344 = vmax.xlane.f32.xlu0 %v343
    %v345 = vpop.xlane.xlu0 %344
    %v346 = vsub.f32 %v26, %v156
    %v347 = vsub.f32 %v27, %v156
    %v348 = vsub.f32 %v28, %v159
    %v349 = vsub.f32 %v29, %v159
    %v350 = vsub.f32 %v30, %v162
    %v351 = vsub.f32 %v31, %v162
    %v352 = vsub.f32 %v32, %v165
    %v353 = vsub.f32 %v33, %v165
    %v354 = vsub.f32 %v34, %v168
    %v355 = vsub.f32 %v35, %v168
    %v356 = vsub.f32 %v36, %v171
    %v357 = vsub.f32 %v37, %v171
    %v358 = vsub.f32 %v38, %v174
    %v359 = vsub.f32 %v39, %v174
    %v360 = vsub.f32 %v40, %v177
    %v361 = vsub.f32 %v41, %v177
    %v362 = vsub.f32 %v42, %v180
    %v363 = vsub.f32 %v43, %v180
    %v364 = vsub.f32 %v44, %v183
    %v365 = vsub.f32 %v45, %v183
    %v366 = vsub.f32 %v46, %v186
    %v367 = vsub.f32 %v47, %v186
    %v368 = vsub.f32 %v48, %v189
    %v369 = vsub.f32 %v49, %v189
    %v370 = vsub.f32 %v50, %v192
    %v371 = vsub.f32 %v51, %v192
    %v372 = vsub.f32 %v52, %v195
    %v373 = vsub.f32 %v53, %v195
    %v374 = vsub.f32 %v54, %v198
    %v375 = vsub.f32 %v55, %v198
    %v376 = vsub.f32 %v56, %v201
    %v377 = vsub.f32 %v57, %v201
    %v378 = vsub.f32 %v58, %v204
    %v379 = vsub.f32 %v59, %v204
    %v380 = vsub.f32 %v60, %v207
    %v381 = vsub.f32 %v61, %v207
    %v382 = vsub.f32 %v62, %v210
    %v383 = vsub.f32 %v63, %v210
    %v384 = vsub.f32 %v64, %v213
    %v385 = vsub.f32 %v65, %v213
    %v386 = vsub.f32 %v66, %v216
    %v387 = vsub.f32 %v67, %v216
    %v388 = vsub.f32 %v68, %v219
    %v389 = vsub.f32 %v69, %v219
    %v390 = vsub.f32 %v70, %v222
    %v391 = vsub.f32 %v71, %v222
    %v392 = vsub.f32 %v72, %v225
    %v393 = vsub.f32 %v73, %v225
    %v394 = vsub.f32 %v74, %v228
    %v395 = vsub.f32 %v75, %v228
    %v396 = vsub.f32 %v76, %v231
    %v397 = vsub.f32 %v77, %v231
    %v398 = vsub.f32 %v78, %v234
    %v399 = vsub.f32 %v79, %v234
    %v400 = vsub.f32 %v80, %v237
    %v401 = vsub.f32 %v81, %v237
    %v402 = vsub.f32 %v82, %v240
    %v403 = vsub.f32 %v83, %v240
    %v404 = vsub.f32 %v84, %v243
    %v405 = vsub.f32 %v85, %v243
    %v406 = vsub.f32 %v86, %v246
    %v407 = vsub.f32 %v87, %v246
    %v408 = vsub.f32 %v88, %v249
    %v409 = vsub.f32 %v89, %v249
    %v410 = vsub.f32 %v90, %v252
    %v411 = vsub.f32 %v91, %v252
    %v412 = vsub.f32 %v92, %v255
    %v413 = vsub.f32 %v93, %v255
    %v414 = vsub.f32 %v94, %v258
    %v415 = vsub.f32 %v95, %v258
    %v416 = vsub.f32 %v96, %v261
    %v417 = vsub.f32 %v97, %v261
    %v418 = vsub.f32 %v98, %v264
    %v419 = vsub.f32 %v99, %v264
    %v420 = vsub.f32 %v100, %v267
    %v421 = vsub.f32 %v101, %v267
    %v422 = vsub.f32 %v102, %v270
    %v423 = vsub.f32 %v103, %v270
    %v424 = vsub.f32 %v104, %v273
    %v425 = vsub.f32 %v105, %v273
    %v426 = vsub.f32 %v106, %v276
    %v427 = vsub.f32 %v107, %v276
    %v428 = vsub.f32 %v108, %v279
    %v429 = vsub.f32 %v109, %v279
    %v430 = vsub.f32 %v110, %v282
    %v431 = vsub.f32 %v111, %v282
    %v432 = vsub.f32 %v112, %v285
    %v433 = vsub.f32 %v113, %v285
    %v434 = vsub.f32 %v114, %v288
    %v435 = vsub.f32 %v115, %v288
    %v436 = vsub.f32 %v116, %v291
    %v437 = vsub.f32 %v117, %v291
    %v438 = vsub.f32 %v118, %v294
    %v439 = vsub.f32 %v119, %v294
    %v440 = vsub.f32 %v120, %v297
    %v441 = vsub.f32 %v121, %v297
    %v442 = vsub.f32 %v122, %v300
    %v443 = vsub.f32 %v123, %v300
    %v444 = vsub.f32 %v124, %v303
    %v445 = vsub.f32 %v125, %v303
    %v446 = vsub.f32 %v126, %v306
    %v447 = vsub.f32 %v127, %v306
    %v448 = vsub.f32 %v128, %v309
    %v449 = vsub.f32 %v129, %v309
    %v450 = vsub.f32 %v130, %v312
    %v451 = vsub.f32 %v131, %v312
    %v452 = vsub.f32 %v132, %v315
    %v453 = vsub.f32 %v133, %v315
    %v454 = vsub.f32 %v134, %v318
    %v455 = vsub.f32 %v135, %v318
    %v456 = vsub.f32 %v136, %v321
    %v457 = vsub.f32 %v137, %v321
    %v458 = vsub.f32 %v138, %v324
    %v459 = vsub.f32 %v139, %v324
    %v460 = vsub.f32 %v140, %v327
    %v461 = vsub.f32 %v141, %v327
    %v462 = vsub.f32 %v142, %v330
    %v463 = vsub.f32 %v143, %v330
    %v464 = vsub.f32 %v144, %v333
    %v465 = vsub.f32 %v145, %v333
    %v466 = vsub.f32 %v146, %v336
    %v467 = vsub.f32 %v147, %v336
    %v468 = vsub.f32 %v148, %v339
    %v469 = vsub.f32 %v149, %v339
    %v470 = vsub.f32 %v150, %v342
    %v471 = vsub.f32 %v151, %v342
    %v472 = vsub.f32 %v152, %v345
    %v473 = vsub.f32 %v153, %v345
    %v474 = vmul.f32 %v346, 1.442695
    %v475 = vpow.pop %v474
    %v476 = vmul.f32 %v347, 1.442695
    %v477 = vpow.pop %v476
    %v478 = vmul.f32 %v348, 1.442695
    %v479 = vpow.pop %v478
    %v480 = vmul.f32 %v349, 1.442695
    %v481 = vpow.pop %v480
    %v482 = vmul.f32 %v350, 1.442695
    %v483 = vpow.pop %v482
    %v484 = vmul.f32 %v351, 1.442695
    %v485 = vpow.pop %v484
    %v486 = vmul.f32 %v352, 1.442695
    %v487 = vpow.pop %v486
    %v488 = vmul.f32 %v353, 1.442695
    %v489 = vpow.pop %v488
    %v490 = vmul.f32 %v354, 1.442695
    %v491 = vpow.pop %v490
    %v492 = vmul.f32 %v355, 1.442695
    %v493 = vpow.pop %v492
    %v494 = vmul.f32 %v356, 1.442695
    %v495 = vpow.pop %v494
    %v496 = vmul.f32 %v357, 1.442695
    %v497 = vpow.pop %v496
    %v498 = vmul.f32 %v358, 1.442695
    %v499 = vpow.pop %v498
    %v500 = vmul.f32 %v359, 1.442695
    %v501 = vpow.pop %v500
    %v502 = vmul.f32 %v360, 1.442695
    %v503 = vpow.pop %v502
    %v504 = vmul.f32 %v361, 1.442695
    %v505 = vpow.pop %v504
    %v506 = vmul.f32 %v362, 1.442695
    %v507 = vpow.pop %v506
    %v508 = vmul.f32 %v363, 1.442695
    %v509 = vpow.pop %v508
    %v510 = vmul.f32 %v364, 1.442695
    %v511 = vpow.pop %v510
    %v512 = vmul.f32 %v365, 1.442695
    %v513 = vpow.pop %v512
    %v514 = vmul.f32 %v366, 1.442695
    %v515 = vpow.pop %v514
    %v516 = vmul.f32 %v367, 1.442695
    %v517 = vpow.pop %v516
    %v518 = vmul.f32 %v368, 1.442695
    %v519 = vpow.pop %v518
    %v520 = vmul.f32 %v369, 1.442695
    %v521 = vpow.pop %v520
    %v522 = vmul.f32 %v370, 1.442695
    %v523 = vpow.pop %v522
    %v524 = vmul.f32 %v371, 1.442695
    %v525 = vpow.pop %v524
    %v526 = vmul.f32 %v372, 1.442695
    %v527 = vpow.pop %v526
    %v528 = vmul.f32 %v373, 1.442695
    %v529 = vpow.pop %v528
    %v530 = vmul.f32 %v374, 1.442695
    %v531 = vpow.pop %v530
    %v532 = vmul.f32 %v375, 1.442695
    %v533 = vpow.pop %v532
    %v534 = vmul.f32 %v376, 1.442695
    %v535 = vpow.pop %v534
    %v536 = vmul.f32 %v377, 1.442695
    %v537 = vpow.pop %v536
    %v538 = vmul.f32 %v378, 1.442695
    %v539 = vpow.pop %v538
    %v540 = vmul.f32 %v379, 1.442695
    %v541 = vpow.pop %v540
    %v542 = vmul.f32 %v380, 1.442695
    %v543 = vpow.pop %v542
    %v544 = vmul.f32 %v381, 1.442695
    %v545 = vpow.pop %v544
    %v546 = vmul.f32 %v382, 1.442695
    %v547 = vpow.pop %v546
    %v548 = vmul.f32 %v383, 1.442695
    %v549 = vpow.pop %v548
    %v550 = vmul.f32 %v384, 1.442695
    %v551 = vpow.pop %v550
    %v552 = vmul.f32 %v385, 1.442695
    %v553 = vpow.pop %v552
    %v554 = vmul.f32 %v386, 1.442695
    %v555 = vpow.pop %v554
    %v556 = vmul.f32 %v387, 1.442695
    %v557 = vpow.pop %v556
    %v558 = vmul.f32 %v388, 1.442695
    %v559 = vpow.pop %v558
    %v560 = vmul.f32 %v389, 1.442695
    %v561 = vpow.pop %v560
    %v562 = vmul.f32 %v390, 1.442695
    %v563 = vpow.pop %v562
    %v564 = vmul.f32 %v391, 1.442695
    %v565 = vpow.pop %v564
    %v566 = vmul.f32 %v392, 1.442695
    %v567 = vpow.pop %v566
    %v568 = vmul.f32 %v393, 1.442695
    %v569 = vpow.pop %v568
    %v570 = vmul.f32 %v394, 1.442695
    %v571 = vpow.pop %v570
    %v572 = vmul.f32 %v395, 1.442695
    %v573 = vpow.pop %v572
    %v574 = vmul.f32 %v396, 1.442695
    %v575 = vpow.pop %v574
    %v576 = vmul.f32 %v397, 1.442695
    %v577 = vpow.pop %v576
    %v578 = vmul.f32 %v398, 1.442695
    %v579 = vpow.pop %v578
    %v580 = vmul.f32 %v399, 1.442695
    %v581 = vpow.pop %v580
    %v582 = vmul.f32 %v400, 1.442695
    %v583 = vpow.pop %v582
    %v584 = vmul.f32 %v401, 1.442695
    %v585 = vpow.pop %v584
    %v586 = vmul.f32 %v402, 1.442695
    %v587 = vpow.pop %v586
    %v588 = vmul.f32 %v403, 1.442695
    %v589 = vpow.pop %v588
    %v590 = vmul.f32 %v404, 1.442695
    %v591 = vpow.pop %v590
    %v592 = vmul.f32 %v405, 1.442695
    %v593 = vpow.pop %v592
    %v594 = vmul.f32 %v406, 1.442695
    %v595 = vpow.pop %v594
    %v596 = vmul.f32 %v407, 1.442695
    %v597 = vpow.pop %v596
    %v598 = vmul.f32 %v408, 1.442695
    %v599 = vpow.pop %v598
    %v600 = vmul.f32 %v409, 1.442695
    %v601 = vpow.pop %v600
    %v602 = vmul.f32 %v410, 1.442695
    %v603 = vpow.pop %v602
    %v604 = vmul.f32 %v411, 1.442695
    %v605 = vpow.pop %v604
    %v606 = vmul.f32 %v412, 1.442695
    %v607 = vpow.pop %v606
    %v608 = vmul.f32 %v413, 1.442695
    %v609 = vpow.pop %v608
    %v610 = vmul.f32 %v414, 1.442695
    %v611 = vpow.pop %v610
    %v612 = vmul.f32 %v415, 1.442695
    %v613 = vpow.pop %v612
    %v614 = vmul.f32 %v416, 1.442695
    %v615 = vpow.pop %v614
    %v616 = vmul.f32 %v417, 1.442695
    %v617 = vpow.pop %v616
    %v618 = vmul.f32 %v418, 1.442695
    %v619 = vpow.pop %v618
    %v620 = vmul.f32 %v419, 1.442695
    %v621 = vpow.pop %v620
    %v622 = vmul.f32 %v420, 1.442695
    %v623 = vpow.pop %v622
    %v624 = vmul.f32 %v421, 1.442695
    %v625 = vpow.pop %v624
    %v626 = vmul.f32 %v422, 1.442695
    %v627 = vpow.pop %v626
    %v628 = vmul.f32 %v423, 1.442695
    %v629 = vpow.pop %v628
    %v630 = vmul.f32 %v424, 1.442695
    %v631 = vpow.pop %v630
    %v632 = vmul.f32 %v425, 1.442695
    %v633 = vpow.pop %v632
    %v634 = vmul.f32 %v426, 1.442695
    %v635 = vpow.pop %v634
    %v636 = vmul.f32 %v427, 1.442695
    %v637 = vpow.pop %v636
    %v638 = vmul.f32 %v428, 1.442695
    %v639 = vpow.pop %v638
    %v640 = vmul.f32 %v429, 1.442695
    %v641 = vpow.pop %v640
    %v642 = vmul.f32 %v430, 1.442695
    %v643 = vpow.pop %v642
    %v644 = vmul.f32 %v431, 1.442695
    %v645 = vpow.pop %v644
    %v646 = vmul.f32 %v432, 1.442695
    %v647 = vpow.pop %v646
    %v648 = vmul.f32 %v433, 1.442695
    %v649 = vpow.pop %v648
    %v650 = vmul.f32 %v434, 1.442695
    %v651 = vpow.pop %v650
    %v652 = vmul.f32 %v435, 1.442695
    %v653 = vpow.pop %v652
    %v654 = vmul.f32 %v436, 1.442695
    %v655 = vpow.pop %v654
    %v656 = vmul.f32 %v437, 1.442695
    %v657 = vpow.pop %v656
    %v658 = vmul.f32 %v438, 1.442695
    %v659 = vpow.pop %v658
    %v660 = vmul.f32 %v439, 1.442695
    %v661 = vpow.pop %v660
    %v662 = vmul.f32 %v440, 1.442695
    %v663 = vpow.pop %v662
    %v664 = vmul.f32 %v441, 1.442695
    %v665 = vpow.pop %v664
    %v666 = vmul.f32 %v442, 1.442695
    %v667 = vpow.pop %v666
    %v668 = vmul.f32 %v443, 1.442695
    %v669 = vpow.pop %v668
    %v670 = vmul.f32 %v444, 1.442695
    %v671 = vpow.pop %v670
    %v672 = vmul.f32 %v445, 1.442695
    %v673 = vpow.pop %v672
    %v674 = vmul.f32 %v446, 1.442695
    %v675 = vpow.pop %v674
    %v676 = vmul.f32 %v447, 1.442695
    %v677 = vpow.pop %v676
    %v678 = vmul.f32 %v448, 1.442695
    %v679 = vpow.pop %v678
    %v680 = vmul.f32 %v449, 1.442695
    %v681 = vpow.pop %v680
    %v682 = vmul.f32 %v450, 1.442695
    %v683 = vpow.pop %v682
    %v684 = vmul.f32 %v451, 1.442695
    %v685 = vpow.pop %v684
    %v686 = vmul.f32 %v452, 1.442695
    %v687 = vpow.pop %v686
    %v688 = vmul.f32 %v453, 1.442695
    %v689 = vpow.pop %v688
    %v690 = vmul.f32 %v454, 1.442695
    %v691 = vpow.pop %v690
    %v692 = vmul.f32 %v455, 1.442695
    %v693 = vpow.pop %v692
    %v694 = vmul.f32 %v456, 1.442695
    %v695 = vpow.pop %v694
    %v696 = vmul.f32 %v457, 1.442695
    %v697 = vpow.pop %v696
    %v698 = vmul.f32 %v458, 1.442695
    %v699 = vpow.pop %v698
    %v700 = vmul.f32 %v459, 1.442695
    %v701 = vpow.pop %v700
    %v702 = vmul.f32 %v460, 1.442695
    %v703 = vpow.pop %v702
    %v704 = vmul.f32 %v461, 1.442695
    %v705 = vpow.pop %v704
    %v706 = vmul.f32 %v462, 1.442695
    %v707 = vpow.pop %v706
    %v708 = vmul.f32 %v463, 1.442695
    %v709 = vpow.pop %v708
    %v710 = vmul.f32 %v464, 1.442695
    %v711 = vpow.pop %v710
    %v712 = vmul.f32 %v465, 1.442695
    %v713 = vpow.pop %v712
    %v714 = vmul.f32 %v466, 1.442695
    %v715 = vpow.pop %v714
    %v716 = vmul.f32 %v467, 1.442695
    %v717 = vpow.pop %v716
    %v718 = vmul.f32 %v468, 1.442695
    %v719 = vpow.pop %v718
    %v720 = vmul.f32 %v469, 1.442695
    %v721 = vpow.pop %v720
    %v722 = vmul.f32 %v470, 1.442695
    %v723 = vpow.pop %v722
    %v724 = vmul.f32 %v471, 1.442695
    %v725 = vpow.pop %v724
    %v726 = vmul.f32 %v472, 1.442695
    %v727 = vpow.pop %v726
    %v728 = vmul.f32 %v473, 1.442695
    %v729 = vpow.pop %v728
    %v730 = vadd.f32 %v475, %v477
    %731 = vadd.xlane.f32.xlu0 %v730
    %v732 = vpop.xlane.xlu0 %731
    %v733 = vadd.f32 %v479, %v481
    %734 = vadd.xlane.f32.xlu0 %v733
    %v735 = vpop.xlane.xlu0 %734
    %v736 = vadd.f32 %v483, %v485
    %737 = vadd.xlane.f32.xlu0 %v736
    %v738 = vpop.xlane.xlu0 %737
    %v739 = vadd.f32 %v487, %v489
    %740 = vadd.xlane.f32.xlu0 %v739
    %v741 = vpop.xlane.xlu0 %740
    %v742 = vadd.f32 %v491, %v493
    %743 = vadd.xlane.f32.xlu0 %v742
    %v744 = vpop.xlane.xlu0 %743
    %v745 = vadd.f32 %v495, %v497
    %746 = vadd.xlane.f32.xlu0 %v745
    %v747 = vpop.xlane.xlu0 %746
    %v748 = vadd.f32 %v499, %v501
    %749 = vadd.xlane.f32.xlu0 %v748
    %v750 = vpop.xlane.xlu0 %749
    %v751 = vadd.f32 %v503, %v505
    %752 = vadd.xlane.f32.xlu0 %v751
    %v753 = vpop.xlane.xlu0 %752
    %v754 = vadd.f32 %v507, %v509
    %755 = vadd.xlane.f32.xlu0 %v754
    %v756 = vpop.xlane.xlu0 %755
    %v757 = vadd.f32 %v511, %v513
    %758 = vadd.xlane.f32.xlu0 %v757
    %v759 = vpop.xlane.xlu0 %758
    %v760 = vadd.f32 %v515, %v517
    %761 = vadd.xlane.f32.xlu0 %v760
    %v762 = vpop.xlane.xlu0 %761
    %v763 = vadd.f32 %v519, %v521
    %764 = vadd.xlane.f32.xlu0 %v763
    %v765 = vpop.xlane.xlu0 %764
    %v766 = vadd.f32 %v523, %v525
    %767 = vadd.xlane.f32.xlu0 %v766
    %v768 = vpop.xlane.xlu0 %767
    %v769 = vadd.f32 %v527, %v529
    %770 = vadd.xlane.f32.xlu0 %v769
    %v771 = vpop.xlane.xlu0 %770
    %v772 = vadd.f32 %v531, %v533
    %773 = vadd.xlane.f32.xlu0 %v772
    %v774 = vpop.xlane.xlu0 %773
    %v775 = vadd.f32 %v535, %v537
    %776 = vadd.xlane.f32.xlu0 %v775
    %v777 = vpop.xlane.xlu0 %776
    %v778 = vadd.f32 %v539, %v541
    %779 = vadd.xlane.f32.xlu0 %v778
    %v780 = vpop.xlane.xlu0 %779
    %v781 = vadd.f32 %v543, %v545
    %782 = vadd.xlane.f32.xlu0 %v781
    %v783 = vpop.xlane.xlu0 %782
    %v784 = vadd.f32 %v547, %v549
    %785 = vadd.xlane.f32.xlu0 %v784
    %v786 = vpop.xlane.xlu0 %785
    %v787 = vadd.f32 %v551, %v553
    %788 = vadd.xlane.f32.xlu0 %v787
    %v789 = vpop.xlane.xlu0 %788
    %v790 = vadd.f32 %v555, %v557
    %791 = vadd.xlane.f32.xlu0 %v790
    %v792 = vpop.xlane.xlu0 %791
    %v793 = vadd.f32 %v559, %v561
    %794 = vadd.xlane.f32.xlu0 %v793
    %v795 = vpop.xlane.xlu0 %794
    %v796 = vadd.f32 %v563, %v565
    %797 = vadd.xlane.f32.xlu0 %v796
    %v798 = vpop.xlane.xlu0 %797
    %v799 = vadd.f32 %v567, %v569
    %800 = vadd.xlane.f32.xlu0 %v799
    %v801 = vpop.xlane.xlu0 %800
    %v802 = vadd.f32 %v571, %v573
    %803 = vadd.xlane.f32.xlu0 %v802
    %v804 = vpop.xlane.xlu0 %803
    %v805 = vadd.f32 %v575, %v577
    %806 = vadd.xlane.f32.xlu0 %v805
    %v807 = vpop.xlane.xlu0 %806
    %v808 = vadd.f32 %v579, %v581
    %809 = vadd.xlane.f32.xlu0 %v808
    %v810 = vpop.xlane.xlu0 %809
    %v811 = vadd.f32 %v583, %v585
    %812 = vadd.xlane.f32.xlu0 %v811
    %v813 = vpop.xlane.xlu0 %812
    %v814 = vadd.f32 %v587, %v589
    %815 = vadd.xlane.f32.xlu0 %v814
    %v816 = vpop.xlane.xlu0 %815
    %v817 = vadd.f32 %v591, %v593
    %818 = vadd.xlane.f32.xlu0 %v817
    %v819 = vpop.xlane.xlu0 %818
    %v820 = vadd.f32 %v595, %v597
    %821 = vadd.xlane.f32.xlu0 %v820
    %v822 = vpop.xlane.xlu0 %821
    %v823 = vadd.f32 %v599, %v601
    %824 = vadd.xlane.f32.xlu0 %v823
    %v825 = vpop.xlane.xlu0 %824
    %v826 = vadd.f32 %v603, %v605
    %827 = vadd.xlane.f32.xlu0 %v826
    %v828 = vpop.xlane.xlu0 %827
    %v829 = vadd.f32 %v607, %v609
    %830 = vadd.xlane.f32.xlu0 %v829
    %v831 = vpop.xlane.xlu0 %830
    %v832 = vadd.f32 %v611, %v613
    %833 = vadd.xlane.f32.xlu0 %v832
    %v834 = vpop.xlane.xlu0 %833
    %v835 = vadd.f32 %v615, %v617
    %836 = vadd.xlane.f32.xlu0 %v835
    %v837 = vpop.xlane.xlu0 %836
    %v838 = vadd.f32 %v619, %v621
    %839 = vadd.xlane.f32.xlu0 %v838
    %v840 = vpop.xlane.xlu0 %839
    %v841 = vadd.f32 %v623, %v625
    %842 = vadd.xlane.f32.xlu0 %v841
    %v843 = vpop.xlane.xlu0 %842
    %v844 = vadd.f32 %v627, %v629
    %845 = vadd.xlane.f32.xlu0 %v844
    %v846 = vpop.xlane.xlu0 %845
    %v847 = vadd.f32 %v631, %v633
    %848 = vadd.xlane.f32.xlu0 %v847
    %v849 = vpop.xlane.xlu0 %848
    %v850 = vadd.f32 %v635, %v637
    %851 = vadd.xlane.f32.xlu0 %v850
    %v852 = vpop.xlane.xlu0 %851
    %v853 = vadd.f32 %v639, %v641
    %854 = vadd.xlane.f32.xlu0 %v853
    %v855 = vpop.xlane.xlu0 %854
    %v856 = vadd.f32 %v643, %v645
    %857 = vadd.xlane.f32.xlu0 %v856
    %v858 = vpop.xlane.xlu0 %857
    %v859 = vadd.f32 %v647, %v649
    %860 = vadd.xlane.f32.xlu0 %v859
    %v861 = vpop.xlane.xlu0 %860
    %v862 = vadd.f32 %v651, %v653
    %863 = vadd.xlane.f32.xlu0 %v862
    %v864 = vpop.xlane.xlu0 %863
    %v865 = vadd.f32 %v655, %v657
    %866 = vadd.xlane.f32.xlu0 %v865
    %v867 = vpop.xlane.xlu0 %866
    %v868 = vadd.f32 %v659, %v661
    %869 = vadd.xlane.f32.xlu0 %v868
    %v870 = vpop.xlane.xlu0 %869
    %v871 = vadd.f32 %v663, %v665
    %872 = vadd.xlane.f32.xlu0 %v871
    %v873 = vpop.xlane.xlu0 %872
    %v874 = vadd.f32 %v667, %v669
    %875 = vadd.xlane.f32.xlu0 %v874
    %v876 = vpop.xlane.xlu0 %875
    %v877 = vadd.f32 %v671, %v673
    %878 = vadd.xlane.f32.xlu0 %v877
    %v879 = vpop.xlane.xlu0 %878
    %v880 = vadd.f32 %v675, %v677
    %881 = vadd.xlane.f32.xlu0 %v880
    %v882 = vpop.xlane.xlu0 %881
    %v883 = vadd.f32 %v679, %v681
    %884 = vadd.xlane.f32.xlu0 %v883
    %v885 = vpop.xlane.xlu0 %884
    %v886 = vadd.f32 %v683, %v685
    %887 = vadd.xlane.f32.xlu0 %v886
    %v888 = vpop.xlane.xlu0 %887
    %v889 = vadd.f32 %v687, %v689
    %890 = vadd.xlane.f32.xlu0 %v889
    %v891 = vpop.xlane.xlu0 %890
    %v892 = vadd.f32 %v691, %v693
    %893 = vadd.xlane.f32.xlu0 %v892
    %v894 = vpop.xlane.xlu0 %893
    %v895 = vadd.f32 %v695, %v697
    %896 = vadd.xlane.f32.xlu0 %v895
    %v897 = vpop.xlane.xlu0 %896
    %v898 = vadd.f32 %v699, %v701
    %899 = vadd.xlane.f32.xlu0 %v898
    %v900 = vpop.xlane.xlu0 %899
    %v901 = vadd.f32 %v703, %v705
    %902 = vadd.xlane.f32.xlu0 %v901
    %v903 = vpop.xlane.xlu0 %902
    %v904 = vadd.f32 %v707, %v709
    %905 = vadd.xlane.f32.xlu0 %v904
    %v906 = vpop.xlane.xlu0 %905
    %v907 = vadd.f32 %v711, %v713
    %908 = vadd.xlane.f32.xlu0 %v907
    %v909 = vpop.xlane.xlu0 %908
    %v910 = vadd.f32 %v715, %v717
    %911 = vadd.xlane.f32.xlu0 %v910
    %v912 = vpop.xlane.xlu0 %911
    %v913 = vadd.f32 %v719, %v721
    %914 = vadd.xlane.f32.xlu0 %v913
    %v915 = vpop.xlane.xlu0 %914
    %v916 = vadd.f32 %v723, %v725
    %917 = vadd.xlane.f32.xlu0 %v916
    %v918 = vpop.xlane.xlu0 %917
    %v919 = vadd.f32 %v727, %v729
    %920 = vadd.xlane.f32.xlu0 %v919
    %v921 = vpop.xlane.xlu0 %920
    %v922 = vld [vmem:[%s1] sm:$0xff]
    %v923 = vld [vmem:[%s1 + $0x8] sm:$0xff]
    %v924 = vld [vmem:[%s1 + $0x10] sm:$0xff]
    %v925 = vld [vmem:[%s1 + $0x18] sm:$0xff]
    %v926 = vld [vmem:[%s1 + $0x20] sm:$0xff]
    %v927 = vld [vmem:[%s1 + $0x28] sm:$0xff]
    %v928 = vld [vmem:[%s1 + $0x30] sm:$0xff]
    %v929 = vld [vmem:[%s1 + $0x38] sm:$0xff]
    %v930 = vld [vmem:[%s1 + $0x40] sm:$0xff]
    %v931 = vld [vmem:[%s1 + $0x48] sm:$0xff]
    %v932 = vld [vmem:[%s1 + $0x50] sm:$0xff]
    %v933 = vld [vmem:[%s1 + $0x58] sm:$0xff]
    %v934 = vld [vmem:[%s1 + $0x60] sm:$0xff]
    %v935 = vld [vmem:[%s1 + $0x68] sm:$0xff]
    %v936 = vld [vmem:[%s1 + $0x70] sm:$0xff]
    %v937 = vld [vmem:[%s1 + $0x78] sm:$0xff]
    %v938 = vld [vmem:[%s1 + $0x80] sm:$0xff]
    %v939 = vld [vmem:[%s1 + $0x88] sm:$0xff]
    %v940 = vld [vmem:[%s1 + $0x90] sm:$0xff]
    %v941 = vld [vmem:[%s1 + $0x98] sm:$0xff]
    %v942 = vld [vmem:[%s1 + $0xa0] sm:$0xff]
    %v943 = vld [vmem:[%s1 + $0xa8] sm:$0xff]
    %v944 = vld [vmem:[%s1 + $0xb0] sm:$0xff]
    %v945 = vld [vmem:[%s1 + $0xb8] sm:$0xff]
    %v946 = vld [vmem:[%s1 + $0xc0] sm:$0xff]
    %v947 = vld [vmem:[%s1 + $0xc8] sm:$0xff]
    %v948 = vld [vmem:[%s1 + $0xd0] sm:$0xff]
    %v949 = vld [vmem:[%s1 + $0xd8] sm:$0xff]
    %v950 = vld [vmem:[%s1 + $0xe0] sm:$0xff]
    %v951 = vld [vmem:[%s1 + $0xe8] sm:$0xff]
    %v952 = vld [vmem:[%s1 + $0xf0] sm:$0xff]
    %v953 = vld [vmem:[%s1 + $0xf8] sm:$0xff]
    %954 = vmatprep.subr.mxu0 0.0
    %955 = vmatpush1.msra.mxu0 %v937
    %956 = vmatprep.subr.mxu0 0.0
    %957 = vmatpush1.msra.mxu0 %v936
    %958 = vmatprep.subr.mxu0 0.0
    %959 = vmatpush1.msra.mxu0 %v935
    %960 = vmatprep.subr.mxu0 0.0
    %961 = vmatpush1.msra.mxu0 %v934
    %962 = vmatprep.subr.mxu0 0.0
    %963 = vmatpush1.msra.mxu0 %v933
    %964 = vmatprep.subr.mxu0 0.0
    %965 = vmatpush1.msra.mxu0 %v932
    %966 = vmatprep.subr.mxu0 0.0
    %967 = vmatpush1.msra.mxu0 %v931
    %968 = vmatprep.subr.mxu0 0.0
    %969 = vmatpush1.msra.mxu0 %v930
    %970 = vmatprep.subr.mxu0 0.0
    %971 = vmatpush1.msra.mxu0 %v929
    %972 = vmatprep.subr.mxu0 0.0
    %973 = vmatpush1.msra.mxu0 %v928
    %974 = vmatprep.subr.mxu0 0.0
    %975 = vmatpush1.msra.mxu0 %v927
    %976 = vmatprep.subr.mxu0 0.0
    %977 = vmatpush1.msra.mxu0 %v926
    %978 = vmatprep.subr.mxu0 0.0
    %979 = vmatpush1.msra.mxu0 %v925
    %980 = vmatprep.subr.mxu0 0.0
    %981 = vmatpush1.msra.mxu0 %v924
    %982 = vmatprep.subr.mxu0 0.0
    %983 = vmatpush1.msra.mxu0 %v923
    %984 = vmatprep.subr.mxu0 0.0
    %985 = vmatpush1.msra.mxu0 %v922
    %986 = vmatprep.subr.mxu0 0.0
    %987 = vmatpush2.msra.mxu0 %v953
    %988 = vmatprep.subr.mxu0 0.0
    %989 = vmatpush2.msra.mxu0 %v952
    %990 = vmatprep.subr.mxu0 0.0
    %991 = vmatpush2.msra.mxu0 %v951
    %992 = vmatprep.subr.mxu0 0.0
    %993 = vmatpush2.msra.mxu0 %v950
    %994 = vmatprep.subr.mxu0 0.0
    %995 = vmatpush2.msra.mxu0 %v949
    %996 = vmatprep.subr.mxu0 0.0
    %997 = vmatpush2.msra.mxu0 %v948
    %998 = vmatprep.subr.mxu0 0.0
    %999 = vmatpush2.msra.mxu0 %v947
    %1000 = vmatprep.subr.mxu0 0.0
    %1001 = vmatpush2.msra.mxu0 %v946
    %1002 = vmatprep.subr.mxu0 0.0
    %1003 = vmatpush2.msra.mxu0 %v945
    %1004 = vmatprep.subr.mxu0 0.0
    %1005 = vmatpush2.msra.mxu0 %v944
    %1006 = vmatprep.subr.mxu0 0.0
    %1007 = vmatpush2.msra.mxu0 %v943
    %1008 = vmatprep.subr.mxu0 0.0
    %1009 = vmatpush2.msra.mxu0 %v942
    %1010 = vmatprep.subr.mxu0 0.0
    %1011 = vmatpush2.msra.mxu0 %v941
    %1012 = vmatprep.subr.mxu0 0.0
    %1013 = vmatpush2.msra.mxu0 %v940
    %1014 = vmatprep.subr.mxu0 0.0
    %1015 = vmatpush2.msra.mxu0 %v939
    %1016 = vmatprep.subr.mxu0 0.0
    %1017 = vmatpush2.msra.mxu0 %v938
    %1018 = vmatprep.mubr.f32.mxu0 %v477
    %1019 = vmatmul.mubr.f32.gmra.mxu0 %v475
    %v1020 = vpop.f32.mrf.mxu0
    %v1021 = vadd.f32 0.0, %v1020
    %v1022 = vpop.f32.mrf.mxu0
    %1023 = vmatprep.mubr.f32.mxu0 %v481
    %1024 = vmatmul.mubr.f32.gmra.mxu0 %v479
    %v1025 = vpop.f32.mrf.mxu0
    %v1026 = vadd.f32 0.0, %v1025
    %v1027 = vpop.f32.mrf.mxu0
    %1028 = vmatprep.mubr.f32.mxu0 %v485
    %1029 = vmatmul.mubr.f32.gmra.mxu0 %v483
    %v1030 = vpop.f32.mrf.mxu0
    %v1031 = vadd.f32 0.0, %v1030
    %v1032 = vpop.f32.mrf.mxu0
    %1033 = vmatprep.mubr.f32.mxu0 %v489
    %1034 = vmatmul.mubr.f32.gmra.mxu0 %v487
    %v1035 = vpop.f32.mrf.mxu0
    %v1036 = vadd.f32 0.0, %v1035
    %v1037 = vpop.f32.mrf.mxu0
    %1038 = vmatprep.mubr.f32.mxu0 %v493
    %1039 = vmatmul.mubr.f32.gmra.mxu0 %v491
    %v1040 = vpop.f32.mrf.mxu0
    %v1041 = vadd.f32 0.0, %v1040
    %v1042 = vpop.f32.mrf.mxu0
    %1043 = vmatprep.mubr.f32.mxu0 %v497
    %1044 = vmatmul.mubr.f32.gmra.mxu0 %v495
    %v1045 = vpop.f32.mrf.mxu0
    %v1046 = vadd.f32 0.0, %v1045
    %v1047 = vpop.f32.mrf.mxu0
    %1048 = vmatprep.mubr.f32.mxu0 %v501
    %1049 = vmatmul.mubr.f32.gmra.mxu0 %v499
    %v1050 = vpop.f32.mrf.mxu0
    %v1051 = vadd.f32 0.0, %v1050
    %v1052 = vpop.f32.mrf.mxu0
    %1053 = vmatprep.mubr.f32.mxu0 %v505
    %1054 = vmatmul.mubr.f32.gmra.mxu0 %v503
    %v1055 = vpop.f32.mrf.mxu0
    %v1056 = vadd.f32 0.0, %v1055
    %v1057 = vpop.f32.mrf.mxu0
    %1058 = vmatprep.mubr.f32.mxu0 %v509
    %1059 = vmatmul.mubr.f32.gmra.mxu0 %v507
    %v1060 = vpop.f32.mrf.mxu0
    %v1061 = vadd.f32 0.0, %v1060
    %v1062 = vpop.f32.mrf.mxu0
    %1063 = vmatprep.mubr.f32.mxu0 %v513
    %1064 = vmatmul.mubr.f32.gmra.mxu0 %v511
    %v1065 = vpop.f32.mrf.mxu0
    %v1066 = vadd.f32 0.0, %v1065
    %v1067 = vpop.f32.mrf.mxu0
    %1068 = vmatprep.mubr.f32.mxu0 %v517
    %1069 = vmatmul.mubr.f32.gmra.mxu0 %v515
    %v1070 = vpop.f32.mrf.mxu0
    %v1071 = vadd.f32 0.0, %v1070
    %v1072 = vpop.f32.mrf.mxu0
    %1073 = vmatprep.mubr.f32.mxu0 %v521
    %1074 = vmatmul.mubr.f32.gmra.mxu0 %v519
    %v1075 = vpop.f32.mrf.mxu0
    %v1076 = vadd.f32 0.0, %v1075
    %v1077 = vpop.f32.mrf.mxu0
    %1078 = vmatprep.mubr.f32.mxu0 %v525
    %1079 = vmatmul.mubr.f32.gmra.mxu0 %v523
    %v1080 = vpop.f32.mrf.mxu0
    %v1081 = vadd.f32 0.0, %v1080
    %v1082 = vpop.f32.mrf.mxu0
    %1083 = vmatprep.mubr.f32.mxu0 %v529
    %1084 = vmatmul.mubr.f32.gmra.mxu0 %v527
    %v1085 = vpop.f32.mrf.mxu0
    %v1086 = vadd.f32 0.0, %v1085
    %v1087 = vpop.f32.mrf.mxu0
    %1088 = vmatprep.mubr.f32.mxu0 %v533
    %1089 = vmatmul.mubr.f32.gmra.mxu0 %v531
    %v1090 = vpop.f32.mrf.mxu0
    %v1091 = vadd.f32 0.0, %v1090
    %v1092 = vpop.f32.mrf.mxu0
    %1093 = vmatprep.mubr.f32.mxu0 %v537
    %1094 = vmatmul.mubr.f32.gmra.mxu0 %v535
    %v1095 = vpop.f32.mrf.mxu0
    %v1096 = vadd.f32 0.0, %v1095
    %v1097 = vpop.f32.mrf.mxu0
    %1098 = vmatprep.mubr.f32.mxu0 %v541
    %1099 = vmatmul.mubr.f32.gmra.mxu0 %v539
    %v1100 = vpop.f32.mrf.mxu0
    %v1101 = vadd.f32 0.0, %v1100
    %v1102 = vpop.f32.mrf.mxu0
    %1103 = vmatprep.mubr.f32.mxu0 %v545
    %1104 = vmatmul.mubr.f32.gmra.mxu0 %v543
    %v1105 = vpop.f32.mrf.mxu0
    %v1106 = vadd.f32 0.0, %v1105
    %v1107 = vpop.f32.mrf.mxu0
    %1108 = vmatprep.mubr.f32.mxu0 %v549
    %1109 = vmatmul.mubr.f32.gmra.mxu0 %v547
    %v1110 = vpop.f32.mrf.mxu0
    %v1111 = vadd.f32 0.0, %v1110
    %v1112 = vpop.f32.mrf.mxu0
    %1113 = vmatprep.mubr.f32.mxu0 %v553
    %1114 = vmatmul.mubr.f32.gmra.mxu0 %v551
    %v1115 = vpop.f32.mrf.mxu0
    %v1116 = vadd.f32 0.0, %v1115
    %v1117 = vpop.f32.mrf.mxu0
    %1118 = vmatprep.mubr.f32.mxu0 %v557
    %1119 = vmatmul.mubr.f32.gmra.mxu0 %v555
    %v1120 = vpop.f32.mrf.mxu0
    %v1121 = vadd.f32 0.0, %v1120
    %v1122 = vpop.f32.mrf.mxu0
    %1123 = vmatprep.mubr.f32.mxu0 %v561
    %1124 = vmatmul.mubr.f32.gmra.mxu0 %v559
    %v1125 = vpop.f32.mrf.mxu0
    %v1126 = vadd.f32 0.0, %v1125
    %v1127 = vpop.f32.mrf.mxu0
    %1128 = vmatprep.mubr.f32.mxu0 %v565
    %1129 = vmatmul.mubr.f32.gmra.mxu0 %v563
    %v1130 = vpop.f32.mrf.mxu0
    %v1131 = vadd.f32 0.0, %v1130
    %v1132 = vpop.f32.mrf.mxu0
    %1133 = vmatprep.mubr.f32.mxu0 %v569
    %1134 = vmatmul.mubr.f32.gmra.mxu0 %v567
    %v1135 = vpop.f32.mrf.mxu0
    %v1136 = vadd.f32 0.0, %v1135
    %v1137 = vpop.f32.mrf.mxu0
    %1138 = vmatprep.mubr.f32.mxu0 %v573
    %1139 = vmatmul.mubr.f32.gmra.mxu0 %v571
    %v1140 = vpop.f32.mrf.mxu0
    %v1141 = vadd.f32 0.0, %v1140
    %v1142 = vpop.f32.mrf.mxu0
    %1143 = vmatprep.mubr.f32.mxu0 %v577
    %1144 = vmatmul.mubr.f32.gmra.mxu0 %v575
    %v1145 = vpop.f32.mrf.mxu0
    %v1146 = vadd.f32 0.0, %v1145
    %v1147 = vpop.f32.mrf.mxu0
    %1148 = vmatprep.mubr.f32.mxu0 %v581
    %1149 = vmatmul.mubr.f32.gmra.mxu0 %v579
    %v1150 = vpop.f32.mrf.mxu0
    %v1151 = vadd.f32 0.0, %v1150
    %v1152 = vpop.f32.mrf.mxu0
    %1153 = vmatprep.mubr.f32.mxu0 %v585
    %1154 = vmatmul.mubr.f32.gmra.mxu0 %v583
    %v1155 = vpop.f32.mrf.mxu0
    %v1156 = vadd.f32 0.0, %v1155
    %v1157 = vpop.f32.mrf.mxu0
    %1158 = vmatprep.mubr.f32.mxu0 %v589
    %1159 = vmatmul.mubr.f32.gmra.mxu0 %v587
    %v1160 = vpop.f32.mrf.mxu0
    %v1161 = vadd.f32 0.0, %v1160
    %v1162 = vpop.f32.mrf.mxu0
    %1163 = vmatprep.mubr.f32.mxu0 %v593
    %1164 = vmatmul.mubr.f32.gmra.mxu0 %v591
    %v1165 = vpop.f32.mrf.mxu0
    %v1166 = vadd.f32 0.0, %v1165
    %v1167 = vpop.f32.mrf.mxu0
    %1168 = vmatprep.mubr.f32.mxu0 %v597
    %1169 = vmatmul.mubr.f32.gmra.mxu0 %v595
    %v1170 = vpop.f32.mrf.mxu0
    %v1171 = vadd.f32 0.0, %v1170
    %v1172 = vpop.f32.mrf.mxu0
    %1173 = vmatprep.mubr.f32.mxu0 %v601
    %1174 = vmatmul.mubr.f32.gmra.mxu0 %v599
    %v1175 = vpop.f32.mrf.mxu0
    %v1176 = vadd.f32 0.0, %v1175
    %v1177 = vpop.f32.mrf.mxu0
    %1178 = vmatprep.mubr.f32.mxu0 %v605
    %1179 = vmatmul.mubr.f32.gmra.mxu0 %v603
    %v1180 = vpop.f32.mrf.mxu0
    %v1181 = vadd.f32 0.0, %v1180
    %v1182 = vpop.f32.mrf.mxu0
    %1183 = vmatprep.mubr.f32.mxu0 %v609
    %1184 = vmatmul.mubr.f32.gmra.mxu0 %v607
    %v1185 = vpop.f32.mrf.mxu0
    %v1186 = vadd.f32 0.0, %v1185
    %v1187 = vpop.f32.mrf.mxu0
    %1188 = vmatprep.mubr.f32.mxu0 %v613
    %1189 = vmatmul.mubr.f32.gmra.mxu0 %v611
    %v1190 = vpop.f32.mrf.mxu0
    %v1191 = vadd.f32 0.0, %v1190
    %v1192 = vpop.f32.mrf.mxu0
    %1193 = vmatprep.mubr.f32.mxu0 %v617
    %1194 = vmatmul.mubr.f32.gmra.mxu0 %v615
    %v1195 = vpop.f32.mrf.mxu0
    %v1196 = vadd.f32 0.0, %v1195
    %v1197 = vpop.f32.mrf.mxu0
    %1198 = vmatprep.mubr.f32.mxu0 %v621
    %1199 = vmatmul.mubr.f32.gmra.mxu0 %v619
    %v1200 = vpop.f32.mrf.mxu0
    %v1201 = vadd.f32 0.0, %v1200
    %v1202 = vpop.f32.mrf.mxu0
    %1203 = vmatprep.mubr.f32.mxu0 %v625
    %1204 = vmatmul.mubr.f32.gmra.mxu0 %v623
    %v1205 = vpop.f32.mrf.mxu0
    %v1206 = vadd.f32 0.0, %v1205
    %v1207 = vpop.f32.mrf.mxu0
    %1208 = vmatprep.mubr.f32.mxu0 %v629
    %1209 = vmatmul.mubr.f32.gmra.mxu0 %v627
    %v1210 = vpop.f32.mrf.mxu0
    %v1211 = vadd.f32 0.0, %v1210
    %v1212 = vpop.f32.mrf.mxu0
    %1213 = vmatprep.mubr.f32.mxu0 %v633
    %1214 = vmatmul.mubr.f32.gmra.mxu0 %v631
    %v1215 = vpop.f32.mrf.mxu0
    %v1216 = vadd.f32 0.0, %v1215
    %v1217 = vpop.f32.mrf.mxu0
    %1218 = vmatprep.mubr.f32.mxu0 %v637
    %1219 = vmatmul.mubr.f32.gmra.mxu0 %v635
    %v1220 = vpop.f32.mrf.mxu0
    %v1221 = vadd.f32 0.0, %v1220
    %v1222 = vpop.f32.mrf.mxu0
    %1223 = vmatprep.mubr.f32.mxu0 %v641
    %1224 = vmatmul.mubr.f32.gmra.mxu0 %v639
    %v1225 = vpop.f32.mrf.mxu0
    %v1226 = vadd.f32 0.0, %v1225
    %v1227 = vpop.f32.mrf.mxu0
    %1228 = vmatprep.mubr.f32.mxu0 %v645
    %1229 = vmatmul.mubr.f32.gmra.mxu0 %v643
    %v1230 = vpop.f32.mrf.mxu0
    %v1231 = vadd.f32 0.0, %v1230
    %v1232 = vpop.f32.mrf.mxu0
    %1233 = vmatprep.mubr.f32.mxu0 %v649
    %1234 = vmatmul.mubr.f32.gmra.mxu0 %v647
    %v1235 = vpop.f32.mrf.mxu0
    %v1236 = vadd.f32 0.0, %v1235
    %v1237 = vpop.f32.mrf.mxu0
    %1238 = vmatprep.mubr.f32.mxu0 %v653
    %1239 = vmatmul.mubr.f32.gmra.mxu0 %v651
    %v1240 = vpop.f32.mrf.mxu0
    %v1241 = vadd.f32 0.0, %v1240
    %v1242 = vpop.f32.mrf.mxu0
    %1243 = vmatprep.mubr.f32.mxu0 %v657
    %1244 = vmatmul.mubr.f32.gmra.mxu0 %v655
    %v1245 = vpop.f32.mrf.mxu0
    %v1246 = vadd.f32 0.0, %v1245
    %v1247 = vpop.f32.mrf.mxu0
    %1248 = vmatprep.mubr.f32.mxu0 %v661
    %1249 = vmatmul.mubr.f32.gmra.mxu0 %v659
    %v1250 = vpop.f32.mrf.mxu0
    %v1251 = vadd.f32 0.0, %v1250
    %v1252 = vpop.f32.mrf.mxu0
    %1253 = vmatprep.mubr.f32.mxu0 %v665
    %1254 = vmatmul.mubr.f32.gmra.mxu0 %v663
    %v1255 = vpop.f32.mrf.mxu0
    %v1256 = vadd.f32 0.0, %v1255
    %v1257 = vpop.f32.mrf.mxu0
    %1258 = vmatprep.mubr.f32.mxu0 %v669
    %1259 = vmatmul.mubr.f32.gmra.mxu0 %v667
    %v1260 = vpop.f32.mrf.mxu0
    %v1261 = vadd.f32 0.0, %v1260
    %v1262 = vpop.f32.mrf.mxu0
    %1263 = vmatprep.mubr.f32.mxu0 %v673
    %1264 = vmatmul.mubr.f32.gmra.mxu0 %v671
    %v1265 = vpop.f32.mrf.mxu0
    %v1266 = vadd.f32 0.0, %v1265
    %v1267 = vpop.f32.mrf.mxu0
    %1268 = vmatprep.mubr.f32.mxu0 %v677
    %1269 = vmatmul.mubr.f32.gmra.mxu0 %v675
    %v1270 = vpop.f32.mrf.mxu0
    %v1271 = vadd.f32 0.0, %v1270
    %v1272 = vpop.f32.mrf.mxu0
    %1273 = vmatprep.mubr.f32.mxu0 %v681
    %1274 = vmatmul.mubr.f32.gmra.mxu0 %v679
    %v1275 = vpop.f32.mrf.mxu0
    %v1276 = vadd.f32 0.0, %v1275
    %v1277 = vpop.f32.mrf.mxu0
    %1278 = vmatprep.mubr.f32.mxu0 %v685
    %1279 = vmatmul.mubr.f32.gmra.mxu0 %v683
    %v1280 = vpop.f32.mrf.mxu0
    %v1281 = vadd.f32 0.0, %v1280
    %v1282 = vpop.f32.mrf.mxu0
    %1283 = vmatprep.mubr.f32.mxu0 %v689
    %1284 = vmatmul.mubr.f32.gmra.mxu0 %v687
    %v1285 = vpop.f32.mrf.mxu0
    %v1286 = vadd.f32 0.0, %v1285
    %v1287 = vpop.f32.mrf.mxu0
    %1288 = vmatprep.mubr.f32.mxu0 %v693
    %1289 = vmatmul.mubr.f32.gmra.mxu0 %v691
    %v1290 = vpop.f32.mrf.mxu0
    %v1291 = vadd.f32 0.0, %v1290
    %v1292 = vpop.f32.mrf.mxu0
    %1293 = vmatprep.mubr.f32.mxu0 %v697
    %1294 = vmatmul.mubr.f32.gmra.mxu0 %v695
    %v1295 = vpop.f32.mrf.mxu0
    %v1296 = vadd.f32 0.0, %v1295
    %v1297 = vpop.f32.mrf.mxu0
    %1298 = vmatprep.mubr.f32.mxu0 %v701
    %1299 = vmatmul.mubr.f32.gmra.mxu0 %v699
    %v1300 = vpop.f32.mrf.mxu0
    %v1301 = vadd.f32 0.0, %v1300
    %v1302 = vpop.f32.mrf.mxu0
    %1303 = vmatprep.mubr.f32.mxu0 %v705
    %1304 = vmatmul.mubr.f32.gmra.mxu0 %v703
    %v1305 = vpop.f32.mrf.mxu0
    %v1306 = vadd.f32 0.0, %v1305
    %v1307 = vpop.f32.mrf.mxu0
    %1308 = vmatprep.mubr.f32.mxu0 %v709
    %1309 = vmatmul.mubr.f32.gmra.mxu0 %v707
    %v1310 = vpop.f32.mrf.mxu0
    %v1311 = vadd.f32 0.0, %v1310
    %v1312 = vpop.f32.mrf.mxu0
    %1313 = vmatprep.mubr.f32.mxu0 %v713
    %1314 = vmatmul.mubr.f32.gmra.mxu0 %v711
    %v1315 = vpop.f32.mrf.mxu0
    %v1316 = vadd.f32 0.0, %v1315
    %v1317 = vpop.f32.mrf.mxu0
    %1318 = vmatprep.mubr.f32.mxu0 %v717
    %1319 = vmatmul.mubr.f32.gmra.mxu0 %v715
    %v1320 = vpop.f32.mrf.mxu0
    %v1321 = vadd.f32 0.0, %v1320
    %v1322 = vpop.f32.mrf.mxu0
    %1323 = vmatprep.mubr.f32.mxu0 %v721
    %1324 = vmatmul.mubr.f32.gmra.mxu0 %v719
    %v1325 = vpop.f32.mrf.mxu0
    %v1326 = vadd.f32 0.0, %v1325
    %v1327 = vpop.f32.mrf.mxu0
    %1328 = vmatprep.mubr.f32.mxu0 %v725
    %1329 = vmatmul.mubr.f32.gmra.mxu0 %v723
    %v1330 = vpop.f32.mrf.mxu0
    %v1331 = vadd.f32 0.0, %v1330
    %v1332 = vpop.f32.mrf.mxu0
    %1333 = vmatprep.mubr.f32.mxu0 %v729
    %1334 = vmatmul.mubr.f32.gmra.mxu0 %v727
    %v1335 = vpop.f32.mrf.mxu0
    %v1336 = vadd.f32 0.0, %v1335
    %v1337 = vpop.f32.mrf.mxu0
    %1338 = vdwg.mxu0
    %v1339 = vrcp.pop %v732
    %v1340 = vrcp.pop %v735
    %v1341 = vrcp.pop %v738
    %v1342 = vrcp.pop %v741
    %v1343 = vrcp.pop %v744
    %v1344 = vrcp.pop %v747
    %v1345 = vrcp.pop %v750
    %v1346 = vrcp.pop %v753
    %v1347 = vrcp.pop %v756
    %v1348 = vrcp.pop %v759
    %v1349 = vrcp.pop %v762
    %v1350 = vrcp.pop %v765
    %v1351 = vrcp.pop %v768
    %v1352 = vrcp.pop %v771
    %v1353 = vrcp.pop %v774
    %v1354 = vrcp.pop %v777
    %v1355 = vrcp.pop %v780
    %v1356 = vrcp.pop %v783
    %v1357 = vrcp.pop %v786
    %v1358 = vrcp.pop %v789
    %v1359 = vrcp.pop %v792
    %v1360 = vrcp.pop %v795
    %v1361 = vrcp.pop %v798
    %v1362 = vrcp.pop %v801
    %v1363 = vrcp.pop %v804
    %v1364 = vrcp.pop %v807
    %v1365 = vrcp.pop %v810
    %v1366 = vrcp.pop %v813
    %v1367 = vrcp.pop %v816
    %v1368 = vrcp.pop %v819
    %v1369 = vrcp.pop %v822
    %v1370 = vrcp.pop %v825
    %v1371 = vrcp.pop %v828
    %v1372 = vrcp.pop %v831
    %v1373 = vrcp.pop %v834
    %v1374 = vrcp.pop %v837
    %v1375 = vrcp.pop %v840
    %v1376 = vrcp.pop %v843
    %v1377 = vrcp.pop %v846
    %v1378 = vrcp.pop %v849
    %v1379 = vrcp.pop %v852
    %v1380 = vrcp.pop %v855
    %v1381 = vrcp.pop %v858
    %v1382 = vrcp.pop %v861
    %v1383 = vrcp.pop %v864
    %v1384 = vrcp.pop %v867
    %v1385 = vrcp.pop %v870
    %v1386 = vrcp.pop %v873
    %v1387 = vrcp.pop %v876
    %v1388 = vrcp.pop %v879
    %v1389 = vrcp.pop %v882
    %v1390 = vrcp.pop %v885
    %v1391 = vrcp.pop %v888
    %v1392 = vrcp.pop %v891
    %v1393 = vrcp.pop %v894
    %v1394 = vrcp.pop %v897
    %v1395 = vrcp.pop %v900
    %v1396 = vrcp.pop %v903
    %v1397 = vrcp.pop %v906
    %v1398 = vrcp.pop %v909
    %v1399 = vrcp.pop %v912
    %v1400 = vrcp.pop %v915
    %v1401 = vrcp.pop %v918
    %v1402 = vrcp.pop %v921
    %v1403 = vmul.f32 %v1021, %v1339
    %v1404 = vmul.f32 %v1026, %v1340
    %v1405 = vmul.f32 %v1031, %v1341
    %v1406 = vmul.f32 %v1036, %v1342
    %v1407 = vmul.f32 %v1041, %v1343
    %v1408 = vmul.f32 %v1046, %v1344
    %v1409 = vmul.f32 %v1051, %v1345
    %v1410 = vmul.f32 %v1056, %v1346
    %v1411 = vmul.f32 %v1061, %v1347
    %v1412 = vmul.f32 %v1066, %v1348
    %v1413 = vmul.f32 %v1071, %v1349
    %v1414 = vmul.f32 %v1076, %v1350
    %v1415 = vmul.f32 %v1081, %v1351
    %v1416 = vmul.f32 %v1086, %v1352
    %v1417 = vmul.f32 %v1091, %v1353
    %v1418 = vmul.f32 %v1096, %v1354
    %v1419 = vmul.f32 %v1101, %v1355
    %v1420 = vmul.f32 %v1106, %v1356
    %v1421 = vmul.f32 %v1111, %v1357
    %v1422 = vmul.f32 %v1116, %v1358
    %v1423 = vmul.f32 %v1121, %v1359
    %v1424 = vmul.f32 %v1126, %v1360
    %v1425 = vmul.f32 %v1131, %v1361
    %v1426 = vmul.f32 %v1136, %v1362
    %v1427 = vmul.f32 %v1141, %v1363
    %v1428 = vmul.f32 %v1146, %v1364
    %v1429 = vmul.f32 %v1151, %v1365
    %v1430 = vmul.f32 %v1156, %v1366
    %v1431 = vmul.f32 %v1161, %v1367
    %v1432 = vmul.f32 %v1166, %v1368
    %v1433 = vmul.f32 %v1171, %v1369
    %v1434 = vmul.f32 %v1176, %v1370
    %v1435 = vmul.f32 %v1181, %v1371
    %v1436 = vmul.f32 %v1186, %v1372
    %v1437 = vmul.f32 %v1191, %v1373
    %v1438 = vmul.f32 %v1196, %v1374
    %v1439 = vmul.f32 %v1201, %v1375
    %v1440 = vmul.f32 %v1206, %v1376
    %v1441 = vmul.f32 %v1211, %v1377
    %v1442 = vmul.f32 %v1216, %v1378
    %v1443 = vmul.f32 %v1221, %v1379
    %v1444 = vmul.f32 %v1226, %v1380
    %v1445 = vmul.f32 %v1231, %v1381
    %v1446 = vmul.f32 %v1236, %v1382
    %v1447 = vmul.f32 %v1241, %v1383
    %v1448 = vmul.f32 %v1246, %v1384
    %v1449 = vmul.f32 %v1251, %v1385
    %v1450 = vmul.f32 %v1256, %v1386
    %v1451 = vmul.f32 %v1261, %v1387
    %v1452 = vmul.f32 %v1266, %v1388
    %v1453 = vmul.f32 %v1271, %v1389
    %v1454 = vmul.f32 %v1276, %v1390
    %v1455 = vmul.f32 %v1281, %v1391
    %v1456 = vmul.f32 %v1286, %v1392
    %v1457 = vmul.f32 %v1291, %v1393
    %v1458 = vmul.f32 %v1296, %v1394
    %v1459 = vmul.f32 %v1301, %v1395
    %v1460 = vmul.f32 %v1306, %v1396
    %v1461 = vmul.f32 %v1311, %v1397
    %v1462 = vmul.f32 %v1316, %v1398
    %v1463 = vmul.f32 %v1321, %v1399
    %v1464 = vmul.f32 %v1326, %v1400
    %v1465 = vmul.f32 %v1331, %v1401
    %v1466 = vmul.f32 %v1336, %v1402
    %vm1467 = vcmask 523264
    %1468 = vst.msk [vmem:[#allocation5] sm:$0xff] %vm1467, %v1403
    %1469 = vst.msk [vmem:[#allocation5 + $0x8] sm:$0xff] %vm1467, %v1404
    %1470 = vst.msk [vmem:[#allocation5 + $0x10] sm:$0xff] %vm1467, %v1405
    %1471 = vst.msk [vmem:[#allocation5 + $0x18] sm:$0xff] %vm1467, %v1406
    %1472 = vst.msk [vmem:[#allocation5 + $0x20] sm:$0xff] %vm1467, %v1407
    %1473 = vst.msk [vmem:[#allocation5 + $0x28] sm:$0xff] %vm1467, %v1408
    %1474 = vst.msk [vmem:[#allocation5 + $0x30] sm:$0xff] %vm1467, %v1409
    %1475 = vst.msk [vmem:[#allocation5 + $0x38] sm:$0xff] %vm1467, %v1410
    %1476 = vst.msk [vmem:[#allocation5 + $0x40] sm:$0xff] %vm1467, %v1411
    %1477 = vst.msk [vmem:[#allocation5 + $0x48] sm:$0xff] %vm1467, %v1412
    %1478 = vst.msk [vmem:[#allocation5 + $0x50] sm:$0xff] %vm1467, %v1413
    %1479 = vst.msk [vmem:[#allocation5 + $0x58] sm:$0xff] %vm1467, %v1414
    %1480 = vst.msk [vmem:[#allocation5 + $0x60] sm:$0xff] %vm1467, %v1415
    %1481 = vst.msk [vmem:[#allocation5 + $0x68] sm:$0xff] %vm1467, %v1416
    %1482 = vst.msk [vmem:[#allocation5 + $0x70] sm:$0xff] %vm1467, %v1417
    %1483 = vst.msk [vmem:[#allocation5 + $0x78] sm:$0xff] %vm1467, %v1418
    %1484 = vst.msk [vmem:[#allocation5 + $0x80] sm:$0xff] %vm1467, %v1419
    %1485 = vst.msk [vmem:[#allocation5 + $0x88] sm:$0xff] %vm1467, %v1420
    %1486 = vst.msk [vmem:[#allocation5 + $0x90] sm:$0xff] %vm1467, %v1421
    %1487 = vst.msk [vmem:[#allocation5 + $0x98] sm:$0xff] %vm1467, %v1422
    %1488 = vst.msk [vmem:[#allocation5 + $0xa0] sm:$0xff] %vm1467, %v1423
    %1489 = vst.msk [vmem:[#allocation5 + $0xa8] sm:$0xff] %vm1467, %v1424
    %1490 = vst.msk [vmem:[#allocation5 + $0xb0] sm:$0xff] %vm1467, %v1425
    %1491 = vst.msk [vmem:[#allocation5 + $0xb8] sm:$0xff] %vm1467, %v1426
    %1492 = vst.msk [vmem:[#allocation5 + $0xc0] sm:$0xff] %vm1467, %v1427
    %1493 = vst.msk [vmem:[#allocation5 + $0xc8] sm:$0xff] %vm1467, %v1428
    %1494 = vst.msk [vmem:[#allocation5 + $0xd0] sm:$0xff] %vm1467, %v1429
    %1495 = vst.msk [vmem:[#allocation5 + $0xd8] sm:$0xff] %vm1467, %v1430
    %1496 = vst.msk [vmem:[#allocation5 + $0xe0] sm:$0xff] %vm1467, %v1431
    %1497 = vst.msk [vmem:[#allocation5 + $0xe8] sm:$0xff] %vm1467, %v1432
    %1498 = vst.msk [vmem:[#allocation5 + $0xf0] sm:$0xff] %vm1467, %v1433
    %1499 = vst.msk [vmem:[#allocation5 + $0xf8] sm:$0xff] %vm1467, %v1434
    %1500 = vst.msk [vmem:[#allocation5 + $0x100] sm:$0xff] %vm1467, %v1435
    %1501 = vst.msk [vmem:[#allocation5 + $0x108] sm:$0xff] %vm1467, %v1436
    %1502 = vst.msk [vmem:[#allocation5 + $0x110] sm:$0xff] %vm1467, %v1437
    %1503 = vst.msk [vmem:[#allocation5 + $0x118] sm:$0xff] %vm1467, %v1438
    %1504 = vst.msk [vmem:[#allocation5 + $0x120] sm:$0xff] %vm1467, %v1439
    %1505 = vst.msk [vmem:[#allocation5 + $0x128] sm:$0xff] %vm1467, %v1440
    %1506 = vst.msk [vmem:[#allocation5 + $0x130] sm:$0xff] %vm1467, %v1441
    %1507 = vst.msk [vmem:[#allocation5 + $0x138] sm:$0xff] %vm1467, %v1442
    %1508 = vst.msk [vmem:[#allocation5 + $0x140] sm:$0xff] %vm1467, %v1443
    %1509 = vst.msk [vmem:[#allocation5 + $0x148] sm:$0xff] %vm1467, %v1444
    %1510 = vst.msk [vmem:[#allocation5 + $0x150] sm:$0xff] %vm1467, %v1445
    %1511 = vst.msk [vmem:[#allocation5 + $0x158] sm:$0xff] %vm1467, %v1446
    %1512 = vst.msk [vmem:[#allocation5 + $0x160] sm:$0xff] %vm1467, %v1447
    %1513 = vst.msk [vmem:[#allocation5 + $0x168] sm:$0xff] %vm1467, %v1448
    %1514 = vst.msk [vmem:[#allocation5 + $0x170] sm:$0xff] %vm1467, %v1449
    %1515 = vst.msk [vmem:[#allocation5 + $0x178] sm:$0xff] %vm1467, %v1450
    %1516 = vst.msk [vmem:[#allocation5 + $0x180] sm:$0xff] %vm1467, %v1451
    %1517 = vst.msk [vmem:[#allocation5 + $0x188] sm:$0xff] %vm1467, %v1452
    %1518 = vst.msk [vmem:[#allocation5 + $0x190] sm:$0xff] %vm1467, %v1453
    %1519 = vst.msk [vmem:[#allocation5 + $0x198] sm:$0xff] %vm1467, %v1454
    %1520 = vst.msk [vmem:[#allocation5 + $0x1a0] sm:$0xff] %vm1467, %v1455
    %1521 = vst.msk [vmem:[#allocation5 + $0x1a8] sm:$0xff] %vm1467, %v1456
    %1522 = vst.msk [vmem:[#allocation5 + $0x1b0] sm:$0xff] %vm1467, %v1457
    %1523 = vst.msk [vmem:[#allocation5 + $0x1b8] sm:$0xff] %vm1467, %v1458
    %1524 = vst.msk [vmem:[#allocation5 + $0x1c0] sm:$0xff] %vm1467, %v1459
    %1525 = vst.msk [vmem:[#allocation5 + $0x1c8] sm:$0xff] %vm1467, %v1460
    %1526 = vst.msk [vmem:[#allocation5 + $0x1d0] sm:$0xff] %vm1467, %v1461
    %1527 = vst.msk [vmem:[#allocation5 + $0x1d8] sm:$0xff] %vm1467, %v1462
    %1528 = vst.msk [vmem:[#allocation5 + $0x1e0] sm:$0xff] %vm1467, %v1463
    %1529 = vst.msk [vmem:[#allocation5 + $0x1e8] sm:$0xff] %vm1467, %v1464
    %1530 = vst.msk [vmem:[#allocation5 + $0x1f0] sm:$0xff] %vm1467, %v1465
    %1531 = vst.msk [vmem:[#allocation5 + $0x1f8] sm:$0xff] %vm1467, %v1466
    // Predicated region
    $region14: #{gp_forward.3} parent=1 // pred_check
      _
    $region15: #{gp_forward.3} parent=1 // pred_check_branch
      %1533 = sbr.rel (0) target = $region17
    $region16: #{gp_forward.3} parent=1 // pred_region
      %s1535 = ssub.s32 8192, 8192
      %1536 = vsyncadd [#allocation4], %s1535
      %s1537 = sshll.u32 [#allocation5], 4
      %s1538 = int_to_ptr.vmem [resolvable:$true] %s1537
      %1543 = dma.vmem_to_hbm [thread:$0]  %s1538, 8192, %s2, [#allocation4], 128, 128, 8
    $region17: #{gp_forward.3} parent=1 // pred_fallthru
      _
    // Predicated region
    $region18: #{gp_forward.3} parent=1 // pred_check
      _
    $region19: #{gp_forward.3} parent=1 // pred_check_branch
      %1545 = sbr.rel (0) target = $region21
    $region20: #{gp_forward.3} parent=1 // pred_region
      %1546 = dma.done [#allocation4], 8192
    $region21: #{gp_forward.3} parent=1 // pred_fallthru
      _
    %1547 = vsyncpa [#allocation3], 1
    %1548 = vsyncpa [#allocation4], 1

</llo_original>
